<compile_context>
chip_gen: v5e
topology: v5e:2x2
jax: 0.10.0
libtpu: 0.0.40
codegen_flags: <defaults>
</compile_context>

<pallas_src>
import functools
import math

import jax
import jax.numpy as jnp
from jax.experimental import pallas as pl
from jax.experimental.pallas import tpu as pltpu


PARAM_DTYPE = jnp.bfloat16          # MXU operand dtype
ACT_DTYPE = jnp.bfloat16            # inter-kernel activation dtype


def _round_up(x, m):
    return (x + m - 1) // m * m


def _tpu_generation():
    try:
        kind = jax.devices()[0].device_kind.lower()
    except Exception:
        return 6
    if "7" in kind:
        return 7
    if "6" in kind:
        return 6
    if "5" in kind:
        return 5
    return 6


_GEN = _tpu_generation()
# v7x: 64 MiB VMEM / 2 TensorCores -> smaller row tiles, conservative scoped limit.
# v5e/v6e: 128 MiB VMEM -> 512-row tiles (~85% of HBM roofline) and a raised limit.
_BLOCK_ROWS = 256 if _GEN >= 7 else 512
_VMEM_LIMIT = (32 if _GEN >= 7 else 96) * 1024 * 1024
_LANE_ALIGN = 256 if _GEN >= 6 else 128     # 2x256^2 MXU on v6e/v7x, 4x128^2 on v5e


# ----------------------------- fused LN + Linear -----------------------------

def _fused_linear_kernel(*refs, fuse_ln, has_bias, activation, has_residual,
                         post_ln, eps, n_valid, n_pad):
    o_ref = refs[-1]
    it = iter(refs[:-1])
    x_ref = next(it)
    if fuse_ln:
        ln_g_ref = next(it)
        ln_b_ref = next(it)
    w_ref = next(it)
    b_ref = next(it) if has_bias else None
    r_ref = next(it) if has_residual else None
    if post_ln:
        ln2_g_ref = next(it)
        ln2_b_ref = next(it)

    if fuse_ln:
        x = x_ref[...].astype(jnp.float32)
        mean = jnp.mean(x, axis=-1, keepdims=True)
        var = jnp.mean(jnp.square(x - mean), axis=-1, keepdims=True)
        x = (x - mean) * jax.lax.rsqrt(var + eps)
        x = x * ln_g_ref[...] + ln_b_ref[...]
        lhs = x.astype(w_ref.dtype)
    else:
        lhs = x_ref[...].astype(w_ref.dtype)

    # MXU matmul: bf16 operands, f32 accumulation.
    y = jnp.dot(lhs, w_ref[...], preferred_element_type=jnp.float32)

    if has_bias:
        y = y + b_ref[...]
    if activation == "gelu":
        # exact (erf) GELU -- matches torch.nn.GELU() default
        y = 0.5 * y * (1.0 + jax.lax.erf(y * (1.0 / math.sqrt(2.0))))
    if has_residual:
        r = r_ref[...].astype(jnp.float32)          # un-padded (tm, n_valid) block
        if n_pad != n_valid:
            r = jnp.concatenate(
                [r, jnp.zeros((r.shape[0], n_pad - n_valid), jnp.float32)], axis=-1)
        y = y + r
    if post_ln:
        inv_n = 1.0 / float(n_valid)
        if n_pad != n_valid:
            mask = jax.lax.broadcasted_iota(jnp.int32, (1, n_pad), 1) < n_valid
            y = jnp.where(mask, y, 0.0)
        mean = jnp.sum(y, axis=-1, keepdims=True) * inv_n
        yc = y - mean
        if n_pad != n_valid:
            yc = jnp.where(mask, yc, 0.0)
        var = jnp.sum(yc * yc, axis=-1, keepdims=True) * inv_n
        y = yc * jax.lax.rsqrt(var + eps) * ln2_g_ref[...] + ln2_b_ref[...]

    o_ref[...] = y.astype(o_ref.dtype)


def _pick_tm(M):
    """Row tile: multiple of 16 (bf16 sublane packing), >=2 grid steps when M allows."""
    if M <= 16:
        return _round_up(max(M, 1), 16)
    tm = min(_BLOCK_ROWS, _round_up(M, 16))
    if _round_up(M, tm) // tm < 2:       # keep both v7x TensorCores busy
        tm = _round_up(-(-M // 2), 16)
    return tm


def fused_linear(x, lin, n_out, *, ln=None, post_ln=None, activation=None,
                 residual=None, out_dtype=ACT_DTYPE, eps=1e-5):
    """y = [postLN]( [LN](x) @ W + b -> [gelu] [+ residual] ) in one pallas_call.

    lin: {"w": (K, Np) bf16 pre-padded, "b": (1, Np) f32 or None}  (prepped at init)
    ln:  {"g","b"} of shape (1, K) f32;  post_ln: {"g","b"} of shape (1, Np) f32.
    residual: (M, n_out), added un-padded inside the kernel (no padded HBM copy).
    Returns (M, n_out); pad rows/cols are sliced off (no-op at lane-aligned sizes).
    """
    M, K = x.shape
    w = lin["w"]
    bias = lin["b"]
    Np = w.shape[1]
    tm = _pick_tm(M)
    Mp = _round_up(M, tm)
    if Mp != M:
        x = jnp.pad(x, ((0, Mp - M), (0, 0)))
        if residual is not None:
            residual = jnp.pad(residual, ((0, Mp - M), (0, 0)))

    args = [x]
    in_specs = [pl.BlockSpec((tm, K), lambda i: (i, 0))]
    if ln is not None:
        args += [ln["g"], ln["b"]]
        in_specs += [pl.BlockSpec((1, K), lambda i: (0, 0))] * 2
    args.append(w)
    in_specs.append(pl.BlockSpec((K, Np), lambda i: (0, 0)))
    if bias is not None:
        args.append(bias)
        in_specs.append(pl.BlockSpec((1, Np), lambda i: (0, 0)))
    if residual is not None:
        args.append(residual)
        in_specs.append(pl.BlockSpec((tm, n_out), lambda i: (i, 0)))
    if post_ln is not None:
        args += [post_ln["g"], post_ln["b"]]
        in_specs += [pl.BlockSpec((1, Np), lambda i: (0, 0))] * 2

    flops = 2 * Mp * K * Np
    transcendentals = Mp * Np if activation == "gelu" else 0
    bytes_accessed = (x.size * x.dtype.itemsize + w.size * 2
                      + Mp * Np * jnp.dtype(out_dtype).itemsize
                      + (residual.size * residual.dtype.itemsize
                         if residual is not None else 0))

    out = pl.pallas_call(
        functools.partial(
            _fused_linear_kernel,
            fuse_ln=ln is not None,
            has_bias=bias is not None,
            activation=activation,
            has_residual=residual is not None,
            post_ln=post_ln is not None,
            eps=eps,
            n_valid=n_out,
            n_pad=Np),
        out_shape=jax.ShapeDtypeStruct((Mp, Np), out_dtype),
        grid=(Mp // tm,),
        in_specs=in_specs,
        out_specs=pl.BlockSpec((tm, Np), lambda i: (i, 0)),
        compiler_params=pltpu.CompilerParams(
            dimension_semantics=("parallel",),
            vmem_limit_bytes=_VMEM_LIMIT),
        cost_estimate=pl.CostEstimate(
            flops=flops, transcendentals=transcendentals,
            bytes_accessed=bytes_accessed),
    )(*args)
    if Mp == M and Np == n_out:
        return out
    return out[:M, :n_out]


# --------------------------------- attention ---------------------------------

def _attention_kernel(qkv_ref, o_ref, *, heads, dim_head, scale):
    """Block: (Bblk, N, 3*H*Dh) packed [q | k | v], head-major inside each third."""
    inner = heads * dim_head
    qkv = qkv_ref[...].astype(jnp.float32)
    outs = []
    for h in range(heads):                               # static unroll over heads
        lo = h * dim_head
        q = qkv[:, :, lo:lo + dim_head] * scale          # fold softmax scale into q
        k = qkv[:, :, inner + lo:inner + lo + dim_head]
        v = qkv[:, :, 2 * inner + lo:2 * inner + lo + dim_head]
        s = jnp.einsum("bnd,bmd->bnm", q, k, preferred_element_type=jnp.float32)
        s = s - jnp.max(s, axis=-1, keepdims=True)
        p = jnp.exp(s)
        l = jnp.sum(p, axis=-1, keepdims=True)
        o = jnp.einsum("bnm,bmd->bnd", p, v, preferred_element_type=jnp.float32)
        outs.append(o * pl.reciprocal(l, approx=True))   # EUP, not a VALU divide
    out = outs[0] if heads == 1 else jnp.concatenate(outs, axis=-1)
    o_ref[...] = out.astype(o_ref.dtype)


def _pick_block_b(B, N, inner, heads):
    """Sequences per grid step: fill VMEM budget, keep >= 2 grid steps when B > 1."""
    per_seq = (4 * N * inner + heads * N * N) * 4        # rough f32 working set
    budget = 8 * 1024 * 1024
    cap = max(1, B // 2) if B > 1 else 1
    best = 1
    for d in range(1, cap + 1):
        if B % d == 0 and d * per_seq <= budget:
            best = d
    return best


def attention(qkv, *, heads, dim_head):
    """qkv: (B, N, 3*H*Dh) bf16 slab -> (B, N, H*Dh) bf16 attention output."""
    B, N, _ = qkv.shape
    inner = heads * dim_head
    bb = _pick_block_b(B, N, inner, heads)
    return pl.pallas_call(
        functools.partial(_attention_kernel, heads=heads, dim_head=dim_head,
                          scale=dim_head ** -0.5),
        out_shape=jax.ShapeDtypeStruct((B, N, inner), ACT_DTYPE),
        grid=(B // bb,),
        in_specs=[pl.BlockSpec((bb, N, 3 * inner), lambda i: (i, 0, 0))],
        out_specs=pl.BlockSpec((bb, N, inner), lambda i: (i, 0, 0)),
        compiler_params=pltpu.CompilerParams(
            dimension_semantics=("parallel",),
            vmem_limit_bytes=_VMEM_LIMIT),
        cost_estimate=pl.CostEstimate(
            flops=4 * B * heads * N * N * dim_head,
            transcendentals=B * heads * N * N,
            bytes_accessed=qkv.size * qkv.dtype.itemsize + B * N * inner * 2),
    )(qkv)


# --------------------------- parameter creation -----------------------------
# All padding / reshaping / f32 casts of weights, biases and LN params happen
# here, once, at init time (hoisted out of the jitted forward pass).

def _init_linear_raw(key, in_dim, out_dim, bias=True):
    kw, kb = jax.random.split(key)
    w = jax.random.normal(kw, (in_dim, out_dim), jnp.float32) / math.sqrt(in_dim)
    b = jax.random.normal(kb, (out_dim,), jnp.float32) * 0.01 if bias else None
    return w, b


def _prep_linear(w, b):
    K, N = w.shape
    Np = _round_up(N, _LANE_ALIGN)
    return {
        "w": jnp.pad(w, ((0, 0), (0, Np - N))).astype(PARAM_DTYPE),
        "b": (jnp.pad(b, (0, Np - N)).reshape(1, Np).astype(jnp.float32)
              if b is not None else None),
    }


def _prep_layernorm(dim):
    return {"g": jnp.ones((1, dim), jnp.float32),
            "b": jnp.zeros((1, dim), jnp.float32)}


def _prep_post_ln(dim, n_padded):
    return {"g": jnp.pad(jnp.ones((dim,), jnp.float32),
                         (0, n_padded - dim)).reshape(1, n_padded),
            "b": jnp.zeros((1, n_padded), jnp.float32)}


def _init_transformer(key, dim, depth, heads, dim_head, mlp_dim):
    inner = heads * dim_head
    layers = []
    for _ in range(depth):
        key, k1, k2, k3, k4 = jax.random.split(key, 5)
        layers.append({
            "attn": {"ln": _prep_layernorm(dim),
                     "qkv": _prep_linear(*_init_linear_raw(k1, dim, inner * 3, bias=False)),
                     "out": _prep_linear(*_init_linear_raw(k2, inner, dim, bias=True))},
            "ff": {"ln": _prep_layernorm(dim),
                   "fc1": _prep_linear(*_init_linear_raw(k3, dim, mlp_dim, bias=True)),
                   "fc2": _prep_linear(*_init_linear_raw(k4, mlp_dim, dim, bias=True))},
        })
    return layers


def init_vit_params(key, cfg):
    ih = iw = cfg["image_size"]
    ph = pw = cfg["image_patch_size"]
    num_image_patches = (ih // ph) * (iw // pw)
    num_frame_patches = cfg["frames"] // cfg["frame_patch_size"]
    patch_dim = cfg["channels"] * ph * pw * cfg["frame_patch_size"]
    dim = cfg["dim"]

    keys = jax.random.split(key, 8)
    patch_lin = _prep_linear(*_init_linear_raw(keys[0], patch_dim, dim, bias=True))
    params = {
        "patch_ln1": _prep_layernorm(patch_dim),
        "patch_lin": patch_lin,
        "patch_ln2": _prep_post_ln(dim, patch_lin["w"].shape[1]),
        "pos_embedding": jax.random.normal(
            keys[1], (1, num_frame_patches, num_image_patches, dim),
            jnp.float32).astype(ACT_DTYPE),
        "spatial_cls_token": jax.random.normal(
            keys[2], (1, 1, dim), jnp.float32).astype(ACT_DTYPE),
        "temporal_cls_token": jax.random.normal(
            keys[3], (1, 1, dim), jnp.float32).astype(ACT_DTYPE),
        "spatial_transformer": _init_transformer(
            keys[4], dim, cfg["spatial_depth"], cfg["heads"], cfg["dim_head"],
            cfg["mlp_dim"]),
        "temporal_transformer": _init_transformer(
            keys[5], dim, cfg["temporal_depth"], cfg["heads"], cfg["dim_head"],
            cfg["mlp_dim"]),
        "head_ln": _prep_layernorm(dim),
        "head_lin": _prep_linear(*_init_linear_raw(keys[6], dim, cfg["num_classes"],
                                                   bias=True)),
    }
    return params


# ------------------------------ model forward -------------------------------

def _attention_block(x, p, heads, dim_head):
    """x -> x + to_out(Attention(LN(x)))  (PreNorm + residual, 3 pallas_calls)."""
    B, N, D = x.shape
    inner = heads * dim_head
    x2 = x.reshape(B * N, D)
    # PreNorm LayerNorm fused into the (bias-free) QKV projection; bf16 slab out.
    qkv = fused_linear(x2, p["qkv"], 3 * inner, ln=p["ln"], out_dtype=ACT_DTYPE)
    # Attention reads q/k/v straight from the packed slab; lane-dense (B,N,H*Dh) out.
    o = attention(qkv.reshape(B, N, 3 * inner), heads=heads, dim_head=dim_head)
    # Output projection with the residual add fused in (no transposes anywhere).
    out = fused_linear(o.reshape(B * N, inner), p["out"], D, residual=x2)
    return out.reshape(B, N, D)


def _ff_block(x, p, mlp_dim):
    """x -> x + FF(LN(x))  (PreNorm + residual, 2 pallas_calls)."""
    B, N, D = x.shape
    x2 = x.reshape(B * N, D)
    h = fused_linear(x2, p["fc1"], mlp_dim, ln=p["ln"], activation="gelu")
    out = fused_linear(h, p["fc2"], D, residual=x2)
    return out.reshape(B, N, D)


def _transformer(x, layers, heads, dim_head, mlp_dim):
    for layer in layers:
        x = _attention_block(x, layer["attn"], heads, dim_head)
        x = _ff_block(x, layer["ff"], mlp_dim)
    return x


def vit_forward(params, video, cfg):
    """video: (b, c, frames, H, W) -> logits (b, num_classes)."""
    b, c, F, H, W = video.shape
    ph = pw = cfg["image_patch_size"]
    pf = cfg["frame_patch_size"]
    f, h, w = F // pf, H // ph, W // pw
    dim = cfg["dim"]
    heads, dim_head = cfg["heads"], cfg["dim_head"]
    mlp_dim = cfg["mlp_dim"]

    # Rearrange 'b c (f pf) (h p1) (w p2) -> b f (h w) (p1 p2 pf c)'
    x = video.reshape(b, c, f, pf, h, ph, w, pw)
    x = x.transpose(0, 2, 4, 6, 5, 7, 3, 1)              # b f h w p1 p2 pf c
    patch_dim = ph * pw * pf * c
    n = h * w
    x = x.reshape(b * f * n, patch_dim)

    # to_patch_embedding: LayerNorm -> Linear -> LayerNorm, one fused kernel.
    x = fused_linear(x, params["patch_lin"], dim,
                     ln=params["patch_ln1"], post_ln=params["patch_ln2"])
    x = x.reshape(b, f, n, dim)

    # positional embedding
    x = x + params["pos_embedding"][:, :f, :n]

    # spatial cls token (pool == 'cls'); dropout(0.0) is identity at inference
    spatial_cls = jnp.broadcast_to(params["spatial_cls_token"][None], (b, f, 1, dim))
    x = jnp.concatenate([spatial_cls, x], axis=2)        # (b, f, n+1, dim)

    # spatial transformer over (b f) sequences
    x = x.reshape(b * f, n + 1, dim)
    x = _transformer(x, params["spatial_transformer"], heads, dim_head, mlp_dim)
    x = x.reshape(b, f, n + 1, dim)

    # take spatial cls token
    x = x[:, :, 0]                                       # (b, f, dim)

    # temporal cls token
    temporal_cls = jnp.broadcast_to(params["temporal_cls_token"], (b, 1, dim))
    x = jnp.concatenate([temporal_cls, x], axis=1)       # (b, f+1, dim)

    # temporal transformer
    x = _transformer(x, params["temporal_transformer"], heads, dim_head, mlp_dim)

    # take temporal cls token
    x = x[:, 0]                                          # (b, dim)

    # mlp_head: LayerNorm -> Linear, one fused kernel, f32 logits.
    logits = fused_linear(x, params["head_lin"], cfg["num_classes"],
                          ln=params["head_ln"], out_dtype=jnp.float32)
    return logits


# ----------------------------------- main -----------------------------------

if __name__ == "__main__":
    cfg = dict(
        image_size=16,
        image_patch_size=8,
        frames=4,
        frame_patch_size=2,
        num_classes=10,
        dim=32,
        spatial_depth=1,
        temporal_depth=1,
        heads=2,
        dim_head=16,
        mlp_dim=64,
        channels=3,
    )
    batch = 2

    key = jax.random.PRNGKey(0)
    key_params, key_video = jax.random.split(key)
    params = init_vit_params(key_params, cfg)
    video = jax.random.normal(
        key_video, (batch, cfg["channels"], cfg["frames"],
                    cfg["image_size"], cfg["image_size"]), jnp.float32)

    fwd = jax.jit(functools.partial(vit_forward, cfg=cfg))
    logits = fwd(params, video)
    jax.block_until_ready(logits)

    assert logits.shape == (batch, cfg["num_classes"])
    assert jnp.all(jnp.isfinite(logits))
    print("KERNEL_OK")
</pallas_src>

<mosaic_0001>
module attributes {stable_mosaic.version = 11 : i64} {
  func.func @_fused_linear_kernel(%arg0: i32, %arg1: memref<16x384xf32, #tpu.memory_space<vmem>>, %arg2: memref<1x384xf32, #tpu.memory_space<vmem>>, %arg3: memref<1x384xf32, #tpu.memory_space<vmem>>, %arg4: memref<384x256xbf16, #tpu.memory_space<vmem>>, %arg5: memref<1x256xf32, #tpu.memory_space<vmem>>, %arg6: memref<1x256xf32, #tpu.memory_space<vmem>>, %arg7: memref<1x256xf32, #tpu.memory_space<vmem>>, %arg8: memref<16x256xbf16, #tpu.memory_space<vmem>>) attributes {dimension_semantics = [#tpu.dimension_semantics<parallel>], iteration_bounds = array<i64: 1>, scalar_prefetch = 0 : i64, scratch_operands = 0 : i64, tpu.core_type = #tpu.core_type<tc>, window_params = [{transform_indices = @transform_0, window_bounds = array<i64: 16, 384>}, {pipeline_mode = #tpu.pipeline_mode<synchronous>, transform_indices = @transform_1, window_bounds = array<i64: 1, 384>}, {pipeline_mode = #tpu.pipeline_mode<synchronous>, transform_indices = @transform_2, window_bounds = array<i64: 1, 384>}, {pipeline_mode = #tpu.pipeline_mode<synchronous>, transform_indices = @transform_3, window_bounds = array<i64: 384, 256>}, {pipeline_mode = #tpu.pipeline_mode<synchronous>, transform_indices = @transform_4, window_bounds = array<i64: 1, 256>}, {pipeline_mode = #tpu.pipeline_mode<synchronous>, transform_indices = @transform_5, window_bounds = array<i64: 1, 256>}, {pipeline_mode = #tpu.pipeline_mode<synchronous>, transform_indices = @transform_6, window_bounds = array<i64: 1, 256>}, {transform_indices = @transform_7, window_bounds = array<i64: 16, 256>}]} {
    %c0 = arith.constant 0 : index
    %c0_0 = arith.constant 0 : index
    %0 = vector.load %arg1[%c0, %c0_0] : memref<16x384xf32, #tpu.memory_space<vmem>>, vector<16x384xf32>
    %cst = arith.constant dense<0.000000e+00> : vector<16xf32>
    %1 = vector.multi_reduction <add>, %0, %cst [1] : vector<16x384xf32> to vector<16xf32>
    %2 = vector.shape_cast %1 : vector<16xf32> to vector<16x1xf32>
    %cst_1 = arith.constant 3.840000e+02 : f32
    %3 = vector.broadcast %cst_1 : f32 to vector<16x1xf32>
    %4 = arith.divf %2, %3 : vector<16x1xf32>
    %5 = vector.broadcast %4 : vector<16x1xf32> to vector<16x384xf32>
    %6 = arith.subf %0, %5 : vector<16x384xf32>
    %7 = arith.mulf %6, %6 : vector<16x384xf32>
    %cst_2 = arith.constant dense<0.000000e+00> : vector<16xf32>
    %8 = vector.multi_reduction <add>, %7, %cst_2 [1] : vector<16x384xf32> to vector<16xf32>
    %9 = vector.shape_cast %8 : vector<16xf32> to vector<16x1xf32>
    %cst_3 = arith.constant 3.840000e+02 : f32
    %10 = vector.broadcast %cst_3 : f32 to vector<16x1xf32>
    %11 = arith.divf %9, %10 : vector<16x1xf32>
    %12 = vector.broadcast %4 : vector<16x1xf32> to vector<16x384xf32>
    %13 = arith.subf %0, %12 : vector<16x384xf32>
    %cst_4 = arith.constant 9.99999974E-6 : f32
    %14 = vector.broadcast %cst_4 : f32 to vector<16x1xf32>
    %15 = arith.addf %11, %14 : vector<16x1xf32>
    %16 = math.rsqrt %15 : vector<16x1xf32>
    %17 = vector.broadcast %16 : vector<16x1xf32> to vector<16x384xf32>
    %18 = arith.mulf %13, %17 : vector<16x384xf32>
    %c0_5 = arith.constant 0 : index
    %c0_6 = arith.constant 0 : index
    %19 = vector.load %arg2[%c0_5, %c0_6] : memref<1x384xf32, #tpu.memory_space<vmem>>, vector<1x384xf32>
    %20 = vector.broadcast %19 : vector<1x384xf32> to vector<16x384xf32>
    %21 = arith.mulf %18, %20 : vector<16x384xf32>
    %c0_7 = arith.constant 0 : index
    %c0_8 = arith.constant 0 : index
    %22 = vector.load %arg3[%c0_7, %c0_8] : memref<1x384xf32, #tpu.memory_space<vmem>>, vector<1x384xf32>
    %23 = vector.broadcast %22 : vector<1x384xf32> to vector<16x384xf32>
    %24 = arith.addf %21, %23 : vector<16x384xf32>
    %25 = arith.truncf %24 : vector<16x384xf32> to vector<16x384xbf16>
    %c0_9 = arith.constant 0 : index
    %c0_10 = arith.constant 0 : index
    %26 = vector.load %arg4[%c0_9, %c0_10] : memref<384x256xbf16, #tpu.memory_space<vmem>>, vector<384x256xbf16>
    %cst_11 = arith.constant dense<0.000000e+00> : vector<16x256xf32>
    %27 = tpu.matmul %25, %26, %cst_11 {dimension_numbers = #tpu.dot_dimension_numbers<[1], [0], [0], [1], [0, 0, 1, 1], [], []>} : vector<16x384xbf16>, vector<384x256xbf16>, vector<16x256xf32> -> vector<16x256xf32>
    %c0_12 = arith.constant 0 : index
    %c0_13 = arith.constant 0 : index
    %28 = vector.load %arg5[%c0_12, %c0_13] : memref<1x256xf32, #tpu.memory_space<vmem>>, vector<1x256xf32>
    %29 = vector.broadcast %28 : vector<1x256xf32> to vector<16x256xf32>
    %30 = arith.addf %27, %29 : vector<16x256xf32>
    %31 = tpu.iota {dimensions = array<i32: 1>} : vector<1x256xi32>
    %c32_i32 = arith.constant 32 : i32
    %32 = vector.broadcast %c32_i32 : i32 to vector<1x256xi32>
    %33 = arith.cmpi slt, %31, %32 : vector<1x256xi32>
    %cst_14 = arith.constant 0.000000e+00 : f32
    %34 = vector.shape_cast %33 : vector<1x256xi1> to vector<1x256xi1>
    %35 = vector.broadcast %34 : vector<1x256xi1> to vector<16x256xi1>
    %36 = vector.broadcast %cst_14 : f32 to vector<16x256xf32>
    %37 = arith.select %35, %30, %36 : vector<16x256xi1>, vector<16x256xf32>
    %cst_15 = arith.constant dense<0.000000e+00> : vector<16xf32>
    %38 = vector.multi_reduction <add>, %37, %cst_15 [1] : vector<16x256xf32> to vector<16xf32>
    %39 = vector.shape_cast %38 : vector<16xf32> to vector<16x1xf32>
    %cst_16 = arith.constant 3.125000e-02 : f32
    %40 = vector.broadcast %cst_16 : f32 to vector<16x1xf32>
    %41 = arith.mulf %39, %40 : vector<16x1xf32>
    %42 = vector.broadcast %41 : vector<16x1xf32> to vector<16x256xf32>
    %43 = arith.subf %37, %42 : vector<16x256xf32>
    %cst_17 = arith.constant 0.000000e+00 : f32
    %44 = vector.shape_cast %33 : vector<1x256xi1> to vector<1x256xi1>
    %45 = vector.broadcast %44 : vector<1x256xi1> to vector<16x256xi1>
    %46 = vector.broadcast %cst_17 : f32 to vector<16x256xf32>
    %47 = arith.select %45, %43, %46 : vector<16x256xi1>, vector<16x256xf32>
    %48 = arith.mulf %47, %47 : vector<16x256xf32>
    %cst_18 = arith.constant dense<0.000000e+00> : vector<16xf32>
    %49 = vector.multi_reduction <add>, %48, %cst_18 [1] : vector<16x256xf32> to vector<16xf32>
    %50 = vector.shape_cast %49 : vector<16xf32> to vector<16x1xf32>
    %cst_19 = arith.constant 3.125000e-02 : f32
    %51 = vector.broadcast %cst_19 : f32 to vector<16x1xf32>
    %52 = arith.mulf %50, %51 : vector<16x1xf32>
    %cst_20 = arith.constant 9.99999974E-6 : f32
    %53 = vector.broadcast %cst_20 : f32 to vector<16x1xf32>
    %54 = arith.addf %52, %53 : vector<16x1xf32>
    %55 = math.rsqrt %54 : vector<16x1xf32>
    %56 = vector.broadcast %55 : vector<16x1xf32> to vector<16x256xf32>
    %57 = arith.mulf %47, %56 : vector<16x256xf32>
    %c0_21 = arith.constant 0 : index
    %c0_22 = arith.constant 0 : index
    %58 = vector.load %arg6[%c0_21, %c0_22] : memref<1x256xf32, #tpu.memory_space<vmem>>, vector<1x256xf32>
    %59 = vector.broadcast %58 : vector<1x256xf32> to vector<16x256xf32>
    %60 = arith.mulf %57, %59 : vector<16x256xf32>
    %c0_23 = arith.constant 0 : index
    %c0_24 = arith.constant 0 : index
    %61 = vector.load %arg7[%c0_23, %c0_24] : memref<1x256xf32, #tpu.memory_space<vmem>>, vector<1x256xf32>
    %62 = vector.broadcast %61 : vector<1x256xf32> to vector<16x256xf32>
    %63 = arith.addf %60, %62 : vector<16x256xf32>
    %64 = arith.truncf %63 : vector<16x256xf32> to vector<16x256xbf16>
    %c0_25 = arith.constant 0 : index
    %c0_26 = arith.constant 0 : index
    %65 = vector.load %arg8[%c0_25, %c0_26] : memref<16x256xbf16, #tpu.memory_space<vmem>>, vector<16x256xbf16>
    tpu.vector_store %arg8[%c0_25, %c0_26], %64 {strides = array<i32>} : memref<16x256xbf16, #tpu.memory_space<vmem>>, vector<16x256xbf16>,
    return
  }
  func.func @transform_0(%arg0: i32) -> (i32, i32) {
    %c0_i32 = arith.constant 0 : i32
    %c0_i32_0 = arith.constant 0 : i32
    return %arg0, %c0_i32 : i32, i32
  }
  func.func @transform_1(%arg0: i32) -> (i32, i32) {
    %c0_i32 = arith.constant 0 : i32
    %c0_i32_0 = arith.constant 0 : i32
    %c0_i32_1 = arith.constant 0 : i32
    return %c0_i32, %c0_i32_0 : i32, i32
  }
  func.func @transform_2(%arg0: i32) -> (i32, i32) {
    %c0_i32 = arith.constant 0 : i32
    %c0_i32_0 = arith.constant 0 : i32
    %c0_i32_1 = arith.constant 0 : i32
    return %c0_i32, %c0_i32_0 : i32, i32
  }
  func.func @transform_3(%arg0: i32) -> (i32, i32) {
    %c0_i32 = arith.constant 0 : i32
    %c0_i32_0 = arith.constant 0 : i32
    %c0_i32_1 = arith.constant 0 : i32
    return %c0_i32, %c0_i32_0 : i32, i32
  }
  func.func @transform_4(%arg0: i32) -> (i32, i32) {
    %c0_i32 = arith.constant 0 : i32
    %c0_i32_0 = arith.constant 0 : i32
    %c0_i32_1 = arith.constant 0 : i32
    return %c0_i32, %c0_i32_0 : i32, i32
  }
  func.func @transform_5(%arg0: i32) -> (i32, i32) {
    %c0_i32 = arith.constant 0 : i32
    %c0_i32_0 = arith.constant 0 : i32
    %c0_i32_1 = arith.constant 0 : i32
    return %c0_i32, %c0_i32_0 : i32, i32
  }
  func.func @transform_6(%arg0: i32) -> (i32, i32) {
    %c0_i32 = arith.constant 0 : i32
    %c0_i32_0 = arith.constant 0 : i32
    %c0_i32_1 = arith.constant 0 : i32
    return %c0_i32, %c0_i32_0 : i32, i32
  }
  func.func @transform_7(%arg0: i32) -> (i32, i32) {
    %c0_i32 = arith.constant 0 : i32
    %c0_i32_0 = arith.constant 0 : i32
    return %arg0, %c0_i32 : i32, i32
  }
}

module attributes {stable_mosaic.version = 11 : i64} {
  func.func @_fused_linear_kernel(%arg0: i32, %arg1: memref<16x32xbf16, #tpu.memory_space<vmem>>, %arg2: memref<1x32xf32, #tpu.memory_space<vmem>>, %arg3: memref<1x32xf32, #tpu.memory_space<vmem>>, %arg4: memref<32x256xbf16, #tpu.memory_space<vmem>>, %arg5: memref<16x256xbf16, #tpu.memory_space<vmem>>) attributes {dimension_semantics = [#tpu.dimension_semantics<parallel>], iteration_bounds = array<i64: 2>, scalar_prefetch = 0 : i64, scratch_operands = 0 : i64, tpu.core_type = #tpu.core_type<tc>, window_params = [{transform_indices = @transform_0, window_bounds = array<i64: 16, 32>}, {pipeline_mode = #tpu.pipeline_mode<synchronous>, transform_indices = @transform_1, window_bounds = array<i64: 1, 32>}, {pipeline_mode = #tpu.pipeline_mode<synchronous>, transform_indices = @transform_2, window_bounds = array<i64: 1, 32>}, {pipeline_mode = #tpu.pipeline_mode<synchronous>, transform_indices = @transform_3, window_bounds = array<i64: 32, 256>}, {transform_indices = @transform_4, window_bounds = array<i64: 16, 256>}]} {
    %c0 = arith.constant 0 : index
    %c0_0 = arith.constant 0 : index
    %0 = vector.load %arg1[%c0, %c0_0] : memref<16x32xbf16, #tpu.memory_space<vmem>>, vector<16x32xbf16>
    %1 = arith.extf %0 : vector<16x32xbf16> to vector<16x32xf32>
    %cst = arith.constant dense<0.000000e+00> : vector<16xf32>
    %2 = vector.multi_reduction <add>, %1, %cst [1] : vector<16x32xf32> to vector<16xf32>
    %3 = vector.shape_cast %2 : vector<16xf32> to vector<16x1xf32>
    %cst_1 = arith.constant 3.200000e+01 : f32
    %4 = vector.broadcast %cst_1 : f32 to vector<16x1xf32>
    %5 = arith.divf %3, %4 : vector<16x1xf32>
    %6 = vector.broadcast %5 : vector<16x1xf32> to vector<16x32xf32>
    %7 = arith.subf %1, %6 : vector<16x32xf32>
    %8 = arith.mulf %7, %7 : vector<16x32xf32>
    %cst_2 = arith.constant dense<0.000000e+00> : vector<16xf32>
    %9 = vector.multi_reduction <add>, %8, %cst_2 [1] : vector<16x32xf32> to vector<16xf32>
    %10 = vector.shape_cast %9 : vector<16xf32> to vector<16x1xf32>
    %cst_3 = arith.constant 3.200000e+01 : f32
    %11 = vector.broadcast %cst_3 : f32 to vector<16x1xf32>
    %12 = arith.divf %10, %11 : vector<16x1xf32>
    %13 = vector.broadcast %5 : vector<16x1xf32> to vector<16x32xf32>
    %14 = arith.subf %1, %13 : vector<16x32xf32>
    %cst_4 = arith.constant 9.99999974E-6 : f32
    %15 = vector.broadcast %cst_4 : f32 to vector<16x1xf32>
    %16 = arith.addf %12, %15 : vector<16x1xf32>
    %17 = math.rsqrt %16 : vector<16x1xf32>
    %18 = vector.broadcast %17 : vector<16x1xf32> to vector<16x32xf32>
    %19 = arith.mulf %14, %18 : vector<16x32xf32>
    %c0_5 = arith.constant 0 : index
    %c0_6 = arith.constant 0 : index
    %20 = vector.load %arg2[%c0_5, %c0_6] : memref<1x32xf32, #tpu.memory_space<vmem>>, vector<1x32xf32>
    %21 = vector.broadcast %20 : vector<1x32xf32> to vector<16x32xf32>
    %22 = arith.mulf %19, %21 : vector<16x32xf32>
    %c0_7 = arith.constant 0 : index
    %c0_8 = arith.constant 0 : index
    %23 = vector.load %arg3[%c0_7, %c0_8] : memref<1x32xf32, #tpu.memory_space<vmem>>, vector<1x32xf32>
    %24 = vector.broadcast %23 : vector<1x32xf32> to vector<16x32xf32>
    %25 = arith.addf %22, %24 : vector<16x32xf32>
    %26 = arith.truncf %25 : vector<16x32xf32> to vector<16x32xbf16>
    %c0_9 = arith.constant 0 : index
    %c0_10 = arith.constant 0 : index
    %27 = vector.load %arg4[%c0_9, %c0_10] : memref<32x256xbf16, #tpu.memory_space<vmem>>, vector<32x256xbf16>
    %cst_11 = arith.constant dense<0.000000e+00> : vector<16x256xf32>
    %28 = tpu.matmul %26, %27, %cst_11 {dimension_numbers = #tpu.dot_dimension_numbers<[1], [0], [0], [1], [0, 0, 1, 1], [], []>} : vector<16x32xbf16>, vector<32x256xbf16>, vector<16x256xf32> -> vector<16x256xf32>
    %29 = arith.truncf %28 : vector<16x256xf32> to vector<16x256xbf16>
    %c0_12 = arith.constant 0 : index
    %c0_13 = arith.constant 0 : index
    %30 = vector.load %arg5[%c0_12, %c0_13] : memref<16x256xbf16, #tpu.memory_space<vmem>>, vector<16x256xbf16>
    tpu.vector_store %arg5[%c0_12, %c0_13], %29 {strides = array<i32>} : memref<16x256xbf16, #tpu.memory_space<vmem>>, vector<16x256xbf16>,
    return
  }
  func.func @transform_0(%arg0: i32) -> (i32, i32) {
    %c0_i32 = arith.constant 0 : i32
    %c0_i32_0 = arith.constant 0 : i32
    return %arg0, %c0_i32 : i32, i32
  }
  func.func @transform_1(%arg0: i32) -> (i32, i32) {
    %c0_i32 = arith.constant 0 : i32
    %c0_i32_0 = arith.constant 0 : i32
    %c0_i32_1 = arith.constant 0 : i32
    return %c0_i32, %c0_i32_0 : i32, i32
  }
  func.func @transform_2(%arg0: i32) -> (i32, i32) {
    %c0_i32 = arith.constant 0 : i32
    %c0_i32_0 = arith.constant 0 : i32
    %c0_i32_1 = arith.constant 0 : i32
    return %c0_i32, %c0_i32_0 : i32, i32
  }
  func.func @transform_3(%arg0: i32) -> (i32, i32) {
    %c0_i32 = arith.constant 0 : i32
    %c0_i32_0 = arith.constant 0 : i32
    %c0_i32_1 = arith.constant 0 : i32
    return %c0_i32, %c0_i32_0 : i32, i32
  }
  func.func @transform_4(%arg0: i32) -> (i32, i32) {
    %c0_i32 = arith.constant 0 : i32
    %c0_i32_0 = arith.constant 0 : i32
    return %arg0, %c0_i32 : i32, i32
  }
}

module attributes {stable_mosaic.version = 11 : i64} {
  func.func @_attention_kernel(%arg0: i32, %arg1: memref<2x5x96xbf16, #tpu.memory_space<vmem>>, %arg2: memref<2x5x32xbf16, #tpu.memory_space<vmem>>) attributes {dimension_semantics = [#tpu.dimension_semantics<parallel>], iteration_bounds = array<i64: 2>, scalar_prefetch = 0 : i64, scratch_operands = 0 : i64, tpu.core_type = #tpu.core_type<tc>, window_params = [{transform_indices = @transform_0, window_bounds = array<i64: 2, 5, 96>}, {transform_indices = @transform_1, window_bounds = array<i64: 2, 5, 32>}]} {
    %c0 = arith.constant 0 : index
    %c0_0 = arith.constant 0 : index
    %c0_1 = arith.constant 0 : index
    %0 = vector.load %arg1[%c0, %c0_0, %c0_1] : memref<2x5x96xbf16, #tpu.memory_space<vmem>>, vector<2x5x96xbf16>
    %1 = arith.extf %0 : vector<2x5x96xbf16> to vector<2x5x96xf32>
    %2 = vector.extract_strided_slice %1 {offsets = [0, 0, 0], sizes = [2, 5, 16], strides = [1, 1, 1]} : vector<2x5x96xf32> to vector<2x5x16xf32>
    %cst = arith.constant 2.500000e-01 : f32
    %3 = vector.broadcast %cst : f32 to vector<2x5x16xf32>
    %4 = arith.mulf %2, %3 : vector<2x5x16xf32>
    %5 = vector.extract_strided_slice %1 {offsets = [0, 0, 32], sizes = [2, 5, 16], strides = [1, 1, 1]} : vector<2x5x96xf32> to vector<2x5x16xf32>
    %6 = vector.extract_strided_slice %1 {offsets = [0, 0, 64], sizes = [2, 5, 16], strides = [1, 1, 1]} : vector<2x5x96xf32> to vector<2x5x16xf32>
    "tpu.trace_start"() <{level = 10 : i32, message = "bnd,bmd->bnm"}> : () -> ()
    %cst_2 = arith.constant dense<0.000000e+00> : vector<2x5x5xf32>
    %7 = tpu.matmul %4, %5, %cst_2 {dimension_numbers = #tpu.dot_dimension_numbers<[2], [2], [1], [1], [0, 0, 0, 1, 1, 1], [0], [0]>} : vector<2x5x16xf32>, vector<2x5x16xf32>, vector<2x5x5xf32> -> vector<2x5x5xf32>
    "tpu.trace_stop"() : () -> ()
    %cst_3 = arith.constant dense<0xFF800000> : vector<2x5xf32>
    %8 = vector.multi_reduction <maximumf>, %7, %cst_3 [2] : vector<2x5x5xf32> to vector<2x5xf32>
    %9 = vector.shape_cast %8 : vector<2x5xf32> to vector<2x5x1xf32>
    %10 = vector.broadcast %9 : vector<2x5x1xf32> to vector<2x5x5xf32>
    %11 = arith.subf %7, %10 : vector<2x5x5xf32>
    %12 = math.exp %11 : vector<2x5x5xf32>
    %cst_4 = arith.constant dense<0.000000e+00> : vector<2x5xf32>
    %13 = vector.multi_reduction <add>, %12, %cst_4 [2] : vector<2x5x5xf32> to vector<2x5xf32>
    %14 = vector.shape_cast %13 : vector<2x5xf32> to vector<2x5x1xf32>
    "tpu.trace_start"() <{level = 10 : i32, message = "bnm,bmd->bnd"}> : () -> ()
    %cst_5 = arith.constant dense<0.000000e+00> : vector<2x5x16xf32>
    %15 = tpu.matmul %12, %6, %cst_5 {dimension_numbers = #tpu.dot_dimension_numbers<[2], [1], [1], [2], [0, 0, 0, 1, 1, 2], [0], [0]>} : vector<2x5x5xf32>, vector<2x5x16xf32>, vector<2x5x16xf32> -> vector<2x5x16xf32>
    "tpu.trace_stop"() : () -> ()
    %16 = tpu.reciprocal %14 {approx = true} : vector<2x5x1xf32> -> vector<2x5x1xf32>
    %17 = vector.broadcast %16 : vector<2x5x1xf32> to vector<2x5x16xf32>
    %18 = arith.mulf %15, %17 : vector<2x5x16xf32>
    %19 = vector.extract_strided_slice %1 {offsets = [0, 0, 16], sizes = [2, 5, 16], strides = [1, 1, 1]} : vector<2x5x96xf32> to vector<2x5x16xf32>
    %cst_6 = arith.constant 2.500000e-01 : f32
    %20 = vector.broadcast %cst_6 : f32 to vector<2x5x16xf32>
    %21 = arith.mulf %19, %20 : vector<2x5x16xf32>
    %22 = vector.extract_strided_slice %1 {offsets = [0, 0, 48], sizes = [2, 5, 16], strides = [1, 1, 1]} : vector<2x5x96xf32> to vector<2x5x16xf32>
    %23 = vector.extract_strided_slice %1 {offsets = [0, 0, 80], sizes = [2, 5, 16], strides = [1, 1, 1]} : vector<2x5x96xf32> to vector<2x5x16xf32>
    "tpu.trace_start"() <{level = 10 : i32, message = "bnd,bmd->bnm"}> : () -> ()
    %cst_7 = arith.constant dense<0.000000e+00> : vector<2x5x5xf32>
    %24 = tpu.matmul %21, %22, %cst_7 {dimension_numbers = #tpu.dot_dimension_numbers<[2], [2], [1], [1], [0, 0, 0, 1, 1, 1], [0], [0]>} : vector<2x5x16xf32>, vector<2x5x16xf32>, vector<2x5x5xf32> -> vector<2x5x5xf32>
    "tpu.trace_stop"() : () -> ()
    %cst_8 = arith.constant dense<0xFF800000> : vector<2x5xf32>
    %25 = vector.multi_reduction <maximumf>, %24, %cst_8 [2] : vector<2x5x5xf32> to vector<2x5xf32>
    %26 = vector.shape_cast %25 : vector<2x5xf32> to vector<2x5x1xf32>
    %27 = vector.broadcast %26 : vector<2x5x1xf32> to vector<2x5x5xf32>
    %28 = arith.subf %24, %27 : vector<2x5x5xf32>
    %29 = math.exp %28 : vector<2x5x5xf32>
    %cst_9 = arith.constant dense<0.000000e+00> : vector<2x5xf32>
    %30 = vector.multi_reduction <add>, %29, %cst_9 [2] : vector<2x5x5xf32> to vector<2x5xf32>
    %31 = vector.shape_cast %30 : vector<2x5xf32> to vector<2x5x1xf32>
    "tpu.trace_start"() <{level = 10 : i32, message = "bnm,bmd->bnd"}> : () -> ()
    %cst_10 = arith.constant dense<0.000000e+00> : vector<2x5x16xf32>
    %32 = tpu.matmul %29, %23, %cst_10 {dimension_numbers = #tpu.dot_dimension_numbers<[2], [1], [1], [2], [0, 0, 0, 1, 1, 2], [0], [0]>} : vector<2x5x5xf32>, vector<2x5x16xf32>, vector<2x5x16xf32> -> vector<2x5x16xf32>
    "tpu.trace_stop"() : () -> ()
    %33 = tpu.reciprocal %31 {approx = true} : vector<2x5x1xf32> -> vector<2x5x1xf32>
    %34 = vector.broadcast %33 : vector<2x5x1xf32> to vector<2x5x16xf32>
    %35 = arith.mulf %32, %34 : vector<2x5x16xf32>
    %36 = tpu.concatenate %18, %35 in 2 : vector<2x5x16xf32>, vector<2x5x16xf32> -> vector<2x5x32xf32>
    %37 = arith.truncf %36 : vector<2x5x32xf32> to vector<2x5x32xbf16>
    %c0_11 = arith.constant 0 : index
    %c0_12 = arith.constant 0 : index
    %c0_13 = arith.constant 0 : index
    %38 = vector.load %arg2[%c0_11, %c0_12, %c0_13] : memref<2x5x32xbf16, #tpu.memory_space<vmem>>, vector<2x5x32xbf16>
    tpu.vector_store %arg2[%c0_11, %c0_12, %c0_13], %37 {strides = array<i32>} : memref<2x5x32xbf16, #tpu.memory_space<vmem>>, vector<2x5x32xbf16>,
    return
  }
  func.func @transform_0(%arg0: i32) -> (i32, i32, i32) {
    %c0_i32 = arith.constant 0 : i32
    %c0_i32_0 = arith.constant 0 : i32
    %c0_i32_1 = arith.constant 0 : i32
    return %arg0, %c0_i32, %c0_i32_0 : i32, i32, i32
  }
  func.func @transform_1(%arg0: i32) -> (i32, i32, i32) {
    %c0_i32 = arith.constant 0 : i32
    %c0_i32_0 = arith.constant 0 : i32
    %c0_i32_1 = arith.constant 0 : i32
    return %arg0, %c0_i32, %c0_i32_0 : i32, i32, i32
  }
}

module attributes {stable_mosaic.version = 11 : i64} {
  func.func @_fused_linear_kernel(%arg0: i32, %arg1: memref<16x32xbf16, #tpu.memory_space<vmem>>, %arg2: memref<32x256xbf16, #tpu.memory_space<vmem>>, %arg3: memref<1x256xf32, #tpu.memory_space<vmem>>, %arg4: memref<16x32xbf16, #tpu.memory_space<vmem>>, %arg5: memref<16x256xbf16, #tpu.memory_space<vmem>>) attributes {dimension_semantics = [#tpu.dimension_semantics<parallel>], iteration_bounds = array<i64: 2>, scalar_prefetch = 0 : i64, scratch_operands = 0 : i64, tpu.core_type = #tpu.core_type<tc>, window_params = [{transform_indices = @transform_0, window_bounds = array<i64: 16, 32>}, {pipeline_mode = #tpu.pipeline_mode<synchronous>, transform_indices = @transform_1, window_bounds = array<i64: 32, 256>}, {pipeline_mode = #tpu.pipeline_mode<synchronous>, transform_indices = @transform_2, window_bounds = array<i64: 1, 256>}, {transform_indices = @transform_3, window_bounds = array<i64: 16, 32>}, {transform_indices = @transform_4, window_bounds = array<i64: 16, 256>}]} {
    %c0 = arith.constant 0 : index
    %c0_0 = arith.constant 0 : index
    %0 = vector.load %arg1[%c0, %c0_0] : memref<16x32xbf16, #tpu.memory_space<vmem>>, vector<16x32xbf16>
    %c0_1 = arith.constant 0 : index
    %c0_2 = arith.constant 0 : index
    %1 = vector.load %arg2[%c0_1, %c0_2] : memref<32x256xbf16, #tpu.memory_space<vmem>>, vector<32x256xbf16>
    %cst = arith.constant dense<0.000000e+00> : vector<16x256xf32>
    %2 = tpu.matmul %0, %1, %cst {dimension_numbers = #tpu.dot_dimension_numbers<[1], [0], [0], [1], [0, 0, 1, 1], [], []>} : vector<16x32xbf16>, vector<32x256xbf16>, vector<16x256xf32> -> vector<16x256xf32>
    %c0_3 = arith.constant 0 : index
    %c0_4 = arith.constant 0 : index
    %3 = vector.load %arg3[%c0_3, %c0_4] : memref<1x256xf32, #tpu.memory_space<vmem>>, vector<1x256xf32>
    %4 = vector.broadcast %3 : vector<1x256xf32> to vector<16x256xf32>
    %5 = arith.addf %2, %4 : vector<16x256xf32>
    %c0_5 = arith.constant 0 : index
    %c0_6 = arith.constant 0 : index
    %6 = vector.load %arg4[%c0_5, %c0_6] : memref<16x32xbf16, #tpu.memory_space<vmem>>, vector<16x32xbf16>
    %7 = arith.extf %6 : vector<16x32xbf16> to vector<16x32xf32>
    %cst_7 = arith.constant 0.000000e+00 : f32
    %8 = vector.broadcast %cst_7 : f32 to vector<16x224xf32>
    %9 = tpu.concatenate %7, %8 in 1 : vector<16x32xf32>, vector<16x224xf32> -> vector<16x256xf32>
    %10 = arith.addf %5, %9 : vector<16x256xf32>
    %11 = arith.truncf %10 : vector<16x256xf32> to vector<16x256xbf16>
    %c0_8 = arith.constant 0 : index
    %c0_9 = arith.constant 0 : index
    %12 = vector.load %arg5[%c0_8, %c0_9] : memref<16x256xbf16, #tpu.memory_space<vmem>>, vector<16x256xbf16>
    tpu.vector_store %arg5[%c0_8, %c0_9], %11 {strides = array<i32>} : memref<16x256xbf16, #tpu.memory_space<vmem>>, vector<16x256xbf16>,
    return
  }
  func.func @transform_0(%arg0: i32) -> (i32, i32) {
    %c0_i32 = arith.constant 0 : i32
    %c0_i32_0 = arith.constant 0 : i32
    return %arg0, %c0_i32 : i32, i32
  }
  func.func @transform_1(%arg0: i32) -> (i32, i32) {
    %c0_i32 = arith.constant 0 : i32
    %c0_i32_0 = arith.constant 0 : i32
    %c0_i32_1 = arith.constant 0 : i32
    return %c0_i32, %c0_i32_0 : i32, i32
  }
  func.func @transform_2(%arg0: i32) -> (i32, i32) {
    %c0_i32 = arith.constant 0 : i32
    %c0_i32_0 = arith.constant 0 : i32
    %c0_i32_1 = arith.constant 0 : i32
    return %c0_i32, %c0_i32_0 : i32, i32
  }
  func.func @transform_3(%arg0: i32) -> (i32, i32) {
    %c0_i32 = arith.constant 0 : i32
    %c0_i32_0 = arith.constant 0 : i32
    return %arg0, %c0_i32 : i32, i32
  }
  func.func @transform_4(%arg0: i32) -> (i32, i32) {
    %c0_i32 = arith.constant 0 : i32
    %c0_i32_0 = arith.constant 0 : i32
    return %arg0, %c0_i32 : i32, i32
  }
}

module attributes {stable_mosaic.version = 11 : i64} {
  func.func @_fused_linear_kernel(%arg0: i32, %arg1: memref<16x32xbf16, #tpu.memory_space<vmem>>, %arg2: memref<1x32xf32, #tpu.memory_space<vmem>>, %arg3: memref<1x32xf32, #tpu.memory_space<vmem>>, %arg4: memref<32x256xbf16, #tpu.memory_space<vmem>>, %arg5: memref<1x256xf32, #tpu.memory_space<vmem>>, %arg6: memref<16x256xbf16, #tpu.memory_space<vmem>>) attributes {dimension_semantics = [#tpu.dimension_semantics<parallel>], iteration_bounds = array<i64: 2>, scalar_prefetch = 0 : i64, scratch_operands = 0 : i64, tpu.core_type = #tpu.core_type<tc>, window_params = [{transform_indices = @transform_0, window_bounds = array<i64: 16, 32>}, {pipeline_mode = #tpu.pipeline_mode<synchronous>, transform_indices = @transform_1, window_bounds = array<i64: 1, 32>}, {pipeline_mode = #tpu.pipeline_mode<synchronous>, transform_indices = @transform_2, window_bounds = array<i64: 1, 32>}, {pipeline_mode = #tpu.pipeline_mode<synchronous>, transform_indices = @transform_3, window_bounds = array<i64: 32, 256>}, {pipeline_mode = #tpu.pipeline_mode<synchronous>, transform_indices = @transform_4, window_bounds = array<i64: 1, 256>}, {transform_indices = @transform_5, window_bounds = array<i64: 16, 256>}]} {
    %c0 = arith.constant 0 : index
    %c0_0 = arith.constant 0 : index
    %0 = vector.load %arg1[%c0, %c0_0] : memref<16x32xbf16, #tpu.memory_space<vmem>>, vector<16x32xbf16>
    %1 = arith.extf %0 : vector<16x32xbf16> to vector<16x32xf32>
    %cst = arith.constant dense<0.000000e+00> : vector<16xf32>
    %2 = vector.multi_reduction <add>, %1, %cst [1] : vector<16x32xf32> to vector<16xf32>
    %3 = vector.shape_cast %2 : vector<16xf32> to vector<16x1xf32>
    %cst_1 = arith.constant 3.200000e+01 : f32
    %4 = vector.broadcast %cst_1 : f32 to vector<16x1xf32>
    %5 = arith.divf %3, %4 : vector<16x1xf32>
    %6 = vector.broadcast %5 : vector<16x1xf32> to vector<16x32xf32>
    %7 = arith.subf %1, %6 : vector<16x32xf32>
    %8 = arith.mulf %7, %7 : vector<16x32xf32>
    %cst_2 = arith.constant dense<0.000000e+00> : vector<16xf32>
    %9 = vector.multi_reduction <add>, %8, %cst_2 [1] : vector<16x32xf32> to vector<16xf32>
    %10 = vector.shape_cast %9 : vector<16xf32> to vector<16x1xf32>
    %cst_3 = arith.constant 3.200000e+01 : f32
    %11 = vector.broadcast %cst_3 : f32 to vector<16x1xf32>
    %12 = arith.divf %10, %11 : vector<16x1xf32>
    %13 = vector.broadcast %5 : vector<16x1xf32> to vector<16x32xf32>
    %14 = arith.subf %1, %13 : vector<16x32xf32>
    %cst_4 = arith.constant 9.99999974E-6 : f32
    %15 = vector.broadcast %cst_4 : f32 to vector<16x1xf32>
    %16 = arith.addf %12, %15 : vector<16x1xf32>
    %17 = math.rsqrt %16 : vector<16x1xf32>
    %18 = vector.broadcast %17 : vector<16x1xf32> to vector<16x32xf32>
    %19 = arith.mulf %14, %18 : vector<16x32xf32>
    %c0_5 = arith.constant 0 : index
    %c0_6 = arith.constant 0 : index
    %20 = vector.load %arg2[%c0_5, %c0_6] : memref<1x32xf32, #tpu.memory_space<vmem>>, vector<1x32xf32>
    %21 = vector.broadcast %20 : vector<1x32xf32> to vector<16x32xf32>
    %22 = arith.mulf %19, %21 : vector<16x32xf32>
    %c0_7 = arith.constant 0 : index
    %c0_8 = arith.constant 0 : index
    %23 = vector.load %arg3[%c0_7, %c0_8] : memref<1x32xf32, #tpu.memory_space<vmem>>, vector<1x32xf32>
    %24 = vector.broadcast %23 : vector<1x32xf32> to vector<16x32xf32>
    %25 = arith.addf %22, %24 : vector<16x32xf32>
    %26 = arith.truncf %25 : vector<16x32xf32> to vector<16x32xbf16>
    %c0_9 = arith.constant 0 : index
    %c0_10 = arith.constant 0 : index
    %27 = vector.load %arg4[%c0_9, %c0_10] : memref<32x256xbf16, #tpu.memory_space<vmem>>, vector<32x256xbf16>
    %cst_11 = arith.constant dense<0.000000e+00> : vector<16x256xf32>
    %28 = tpu.matmul %26, %27, %cst_11 {dimension_numbers = #tpu.dot_dimension_numbers<[1], [0], [0], [1], [0, 0, 1, 1], [], []>} : vector<16x32xbf16>, vector<32x256xbf16>, vector<16x256xf32> -> vector<16x256xf32>
    %c0_12 = arith.constant 0 : index
    %c0_13 = arith.constant 0 : index
    %29 = vector.load %arg5[%c0_12, %c0_13] : memref<1x256xf32, #tpu.memory_space<vmem>>, vector<1x256xf32>
    %30 = vector.broadcast %29 : vector<1x256xf32> to vector<16x256xf32>
    %31 = arith.addf %28, %30 : vector<16x256xf32>
    %cst_14 = arith.constant 5.000000e-01 : f32
    %32 = vector.broadcast %cst_14 : f32 to vector<16x256xf32>
    %33 = arith.mulf %32, %31 : vector<16x256xf32>
    %cst_15 = arith.constant 0.707106769 : f32
    %34 = vector.broadcast %cst_15 : f32 to vector<16x256xf32>
    %35 = arith.mulf %31, %34 : vector<16x256xf32>
    %36 = math.erf %35 : vector<16x256xf32>
    %cst_16 = arith.constant 1.000000e+00 : f32
    %37 = vector.broadcast %cst_16 : f32 to vector<16x256xf32>
    %38 = arith.addf %37, %36 : vector<16x256xf32>
    %39 = arith.mulf %33, %38 : vector<16x256xf32>
    %40 = arith.truncf %39 : vector<16x256xf32> to vector<16x256xbf16>
    %c0_17 = arith.constant 0 : index
    %c0_18 = arith.constant 0 : index
    %41 = vector.load %arg6[%c0_17, %c0_18] : memref<16x256xbf16, #tpu.memory_space<vmem>>, vector<16x256xbf16>
    tpu.vector_store %arg6[%c0_17, %c0_18], %40 {strides = array<i32>} : memref<16x256xbf16, #tpu.memory_space<vmem>>, vector<16x256xbf16>,
    return
  }
  func.func @transform_0(%arg0: i32) -> (i32, i32) {
    %c0_i32 = arith.constant 0 : i32
    %c0_i32_0 = arith.constant 0 : i32
    return %arg0, %c0_i32 : i32, i32
  }
  func.func @transform_1(%arg0: i32) -> (i32, i32) {
    %c0_i32 = arith.constant 0 : i32
    %c0_i32_0 = arith.constant 0 : i32
    %c0_i32_1 = arith.constant 0 : i32
    return %c0_i32, %c0_i32_0 : i32, i32
  }
  func.func @transform_2(%arg0: i32) -> (i32, i32) {
    %c0_i32 = arith.constant 0 : i32
    %c0_i32_0 = arith.constant 0 : i32
    %c0_i32_1 = arith.constant 0 : i32
    return %c0_i32, %c0_i32_0 : i32, i32
  }
  func.func @transform_3(%arg0: i32) -> (i32, i32) {
    %c0_i32 = arith.constant 0 : i32
    %c0_i32_0 = arith.constant 0 : i32
    %c0_i32_1 = arith.constant 0 : i32
    return %c0_i32, %c0_i32_0 : i32, i32
  }
  func.func @transform_4(%arg0: i32) -> (i32, i32) {
    %c0_i32 = arith.constant 0 : i32
    %c0_i32_0 = arith.constant 0 : i32
    %c0_i32_1 = arith.constant 0 : i32
    return %c0_i32, %c0_i32_0 : i32, i32
  }
  func.func @transform_5(%arg0: i32) -> (i32, i32) {
    %c0_i32 = arith.constant 0 : i32
    %c0_i32_0 = arith.constant 0 : i32
    return %arg0, %c0_i32 : i32, i32
  }
}

module attributes {stable_mosaic.version = 11 : i64} {
  func.func @_fused_linear_kernel(%arg0: i32, %arg1: memref<16x64xbf16, #tpu.memory_space<vmem>>, %arg2: memref<64x256xbf16, #tpu.memory_space<vmem>>, %arg3: memref<1x256xf32, #tpu.memory_space<vmem>>, %arg4: memref<16x32xbf16, #tpu.memory_space<vmem>>, %arg5: memref<16x256xbf16, #tpu.memory_space<vmem>>) attributes {dimension_semantics = [#tpu.dimension_semantics<parallel>], iteration_bounds = array<i64: 2>, scalar_prefetch = 0 : i64, scratch_operands = 0 : i64, tpu.core_type = #tpu.core_type<tc>, window_params = [{transform_indices = @transform_0, window_bounds = array<i64: 16, 64>}, {pipeline_mode = #tpu.pipeline_mode<synchronous>, transform_indices = @transform_1, window_bounds = array<i64: 64, 256>}, {pipeline_mode = #tpu.pipeline_mode<synchronous>, transform_indices = @transform_2, window_bounds = array<i64: 1, 256>}, {transform_indices = @transform_3, window_bounds = array<i64: 16, 32>}, {transform_indices = @transform_4, window_bounds = array<i64: 16, 256>}]} {
    %c0 = arith.constant 0 : index
    %c0_0 = arith.constant 0 : index
    %0 = vector.load %arg1[%c0, %c0_0] : memref<16x64xbf16, #tpu.memory_space<vmem>>, vector<16x64xbf16>
    %c0_1 = arith.constant 0 : index
    %c0_2 = arith.constant 0 : index
    %1 = vector.load %arg2[%c0_1, %c0_2] : memref<64x256xbf16, #tpu.memory_space<vmem>>, vector<64x256xbf16>
    %cst = arith.constant dense<0.000000e+00> : vector<16x256xf32>
    %2 = tpu.matmul %0, %1, %cst {dimension_numbers = #tpu.dot_dimension_numbers<[1], [0], [0], [1], [0, 0, 1, 1], [], []>} : vector<16x64xbf16>, vector<64x256xbf16>, vector<16x256xf32> -> vector<16x256xf32>
    %c0_3 = arith.constant 0 : index
    %c0_4 = arith.constant 0 : index
    %3 = vector.load %arg3[%c0_3, %c0_4] : memref<1x256xf32, #tpu.memory_space<vmem>>, vector<1x256xf32>
    %4 = vector.broadcast %3 : vector<1x256xf32> to vector<16x256xf32>
    %5 = arith.addf %2, %4 : vector<16x256xf32>
    %c0_5 = arith.constant 0 : index
    %c0_6 = arith.constant 0 : index
    %6 = vector.load %arg4[%c0_5, %c0_6] : memref<16x32xbf16, #tpu.memory_space<vmem>>, vector<16x32xbf16>
    %7 = arith.extf %6 : vector<16x32xbf16> to vector<16x32xf32>
    %cst_7 = arith.constant 0.000000e+00 : f32
    %8 = vector.broadcast %cst_7 : f32 to vector<16x224xf32>
    %9 = tpu.concatenate %7, %8 in 1 : vector<16x32xf32>, vector<16x224xf32> -> vector<16x256xf32>
    %10 = arith.addf %5, %9 : vector<16x256xf32>
    %11 = arith.truncf %10 : vector<16x256xf32> to vector<16x256xbf16>
    %c0_8 = arith.constant 0 : index
    %c0_9 = arith.constant 0 : index
    %12 = vector.load %arg5[%c0_8, %c0_9] : memref<16x256xbf16, #tpu.memory_space<vmem>>, vector<16x256xbf16>
    tpu.vector_store %arg5[%c0_8, %c0_9], %11 {strides = array<i32>} : memref<16x256xbf16, #tpu.memory_space<vmem>>, vector<16x256xbf16>,
    return
  }
  func.func @transform_0(%arg0: i32) -> (i32, i32) {
    %c0_i32 = arith.constant 0 : i32
    %c0_i32_0 = arith.constant 0 : i32
    return %arg0, %c0_i32 : i32, i32
  }
  func.func @transform_1(%arg0: i32) -> (i32, i32) {
    %c0_i32 = arith.constant 0 : i32
    %c0_i32_0 = arith.constant 0 : i32
    %c0_i32_1 = arith.constant 0 : i32
    return %c0_i32, %c0_i32_0 : i32, i32
  }
  func.func @transform_2(%arg0: i32) -> (i32, i32) {
    %c0_i32 = arith.constant 0 : i32
    %c0_i32_0 = arith.constant 0 : i32
    %c0_i32_1 = arith.constant 0 : i32
    return %c0_i32, %c0_i32_0 : i32, i32
  }
  func.func @transform_3(%arg0: i32) -> (i32, i32) {
    %c0_i32 = arith.constant 0 : i32
    %c0_i32_0 = arith.constant 0 : i32
    return %arg0, %c0_i32 : i32, i32
  }
  func.func @transform_4(%arg0: i32) -> (i32, i32) {
    %c0_i32 = arith.constant 0 : i32
    %c0_i32_0 = arith.constant 0 : i32
    return %arg0, %c0_i32 : i32, i32
  }
}

module attributes {stable_mosaic.version = 11 : i64} {
  func.func @_fused_linear_kernel(%arg0: i32, %arg1: memref<16x32xbf16, #tpu.memory_space<vmem>>, %arg2: memref<1x32xf32, #tpu.memory_space<vmem>>, %arg3: memref<1x32xf32, #tpu.memory_space<vmem>>, %arg4: memref<32x256xbf16, #tpu.memory_space<vmem>>, %arg5: memref<16x256xbf16, #tpu.memory_space<vmem>>) attributes {dimension_semantics = [#tpu.dimension_semantics<parallel>], iteration_bounds = array<i64: 1>, scalar_prefetch = 0 : i64, scratch_operands = 0 : i64, tpu.core_type = #tpu.core_type<tc>, window_params = [{transform_indices = @transform_0, window_bounds = array<i64: 16, 32>}, {pipeline_mode = #tpu.pipeline_mode<synchronous>, transform_indices = @transform_1, window_bounds = array<i64: 1, 32>}, {pipeline_mode = #tpu.pipeline_mode<synchronous>, transform_indices = @transform_2, window_bounds = array<i64: 1, 32>}, {pipeline_mode = #tpu.pipeline_mode<synchronous>, transform_indices = @transform_3, window_bounds = array<i64: 32, 256>}, {transform_indices = @transform_4, window_bounds = array<i64: 16, 256>}]} {
    %c0 = arith.constant 0 : index
    %c0_0 = arith.constant 0 : index
    %0 = vector.load %arg1[%c0, %c0_0] : memref<16x32xbf16, #tpu.memory_space<vmem>>, vector<16x32xbf16>
    %1 = arith.extf %0 : vector<16x32xbf16> to vector<16x32xf32>
    %cst = arith.constant dense<0.000000e+00> : vector<16xf32>
    %2 = vector.multi_reduction <add>, %1, %cst [1] : vector<16x32xf32> to vector<16xf32>
    %3 = vector.shape_cast %2 : vector<16xf32> to vector<16x1xf32>
    %cst_1 = arith.constant 3.200000e+01 : f32
    %4 = vector.broadcast %cst_1 : f32 to vector<16x1xf32>
    %5 = arith.divf %3, %4 : vector<16x1xf32>
    %6 = vector.broadcast %5 : vector<16x1xf32> to vector<16x32xf32>
    %7 = arith.subf %1, %6 : vector<16x32xf32>
    %8 = arith.mulf %7, %7 : vector<16x32xf32>
    %cst_2 = arith.constant dense<0.000000e+00> : vector<16xf32>
    %9 = vector.multi_reduction <add>, %8, %cst_2 [1] : vector<16x32xf32> to vector<16xf32>
    %10 = vector.shape_cast %9 : vector<16xf32> to vector<16x1xf32>
    %cst_3 = arith.constant 3.200000e+01 : f32
    %11 = vector.broadcast %cst_3 : f32 to vector<16x1xf32>
    %12 = arith.divf %10, %11 : vector<16x1xf32>
    %13 = vector.broadcast %5 : vector<16x1xf32> to vector<16x32xf32>
    %14 = arith.subf %1, %13 : vector<16x32xf32>
    %cst_4 = arith.constant 9.99999974E-6 : f32
    %15 = vector.broadcast %cst_4 : f32 to vector<16x1xf32>
    %16 = arith.addf %12, %15 : vector<16x1xf32>
    %17 = math.rsqrt %16 : vector<16x1xf32>
    %18 = vector.broadcast %17 : vector<16x1xf32> to vector<16x32xf32>
    %19 = arith.mulf %14, %18 : vector<16x32xf32>
    %c0_5 = arith.constant 0 : index
    %c0_6 = arith.constant 0 : index
    %20 = vector.load %arg2[%c0_5, %c0_6] : memref<1x32xf32, #tpu.memory_space<vmem>>, vector<1x32xf32>
    %21 = vector.broadcast %20 : vector<1x32xf32> to vector<16x32xf32>
    %22 = arith.mulf %19, %21 : vector<16x32xf32>
    %c0_7 = arith.constant 0 : index
    %c0_8 = arith.constant 0 : index
    %23 = vector.load %arg3[%c0_7, %c0_8] : memref<1x32xf32, #tpu.memory_space<vmem>>, vector<1x32xf32>
    %24 = vector.broadcast %23 : vector<1x32xf32> to vector<16x32xf32>
    %25 = arith.addf %22, %24 : vector<16x32xf32>
    %26 = arith.truncf %25 : vector<16x32xf32> to vector<16x32xbf16>
    %c0_9 = arith.constant 0 : index
    %c0_10 = arith.constant 0 : index
    %27 = vector.load %arg4[%c0_9, %c0_10] : memref<32x256xbf16, #tpu.memory_space<vmem>>, vector<32x256xbf16>
    %cst_11 = arith.constant dense<0.000000e+00> : vector<16x256xf32>
    %28 = tpu.matmul %26, %27, %cst_11 {dimension_numbers = #tpu.dot_dimension_numbers<[1], [0], [0], [1], [0, 0, 1, 1], [], []>} : vector<16x32xbf16>, vector<32x256xbf16>, vector<16x256xf32> -> vector<16x256xf32>
    %29 = arith.truncf %28 : vector<16x256xf32> to vector<16x256xbf16>
    %c0_12 = arith.constant 0 : index
    %c0_13 = arith.constant 0 : index
    %30 = vector.load %arg5[%c0_12, %c0_13] : memref<16x256xbf16, #tpu.memory_space<vmem>>, vector<16x256xbf16>
    tpu.vector_store %arg5[%c0_12, %c0_13], %29 {strides = array<i32>} : memref<16x256xbf16, #tpu.memory_space<vmem>>, vector<16x256xbf16>,
    return
  }
  func.func @transform_0(%arg0: i32) -> (i32, i32) {
    %c0_i32 = arith.constant 0 : i32
    %c0_i32_0 = arith.constant 0 : i32
    return %arg0, %c0_i32 : i32, i32
  }
  func.func @transform_1(%arg0: i32) -> (i32, i32) {
    %c0_i32 = arith.constant 0 : i32
    %c0_i32_0 = arith.constant 0 : i32
    %c0_i32_1 = arith.constant 0 : i32
    return %c0_i32, %c0_i32_0 : i32, i32
  }
  func.func @transform_2(%arg0: i32) -> (i32, i32) {
    %c0_i32 = arith.constant 0 : i32
    %c0_i32_0 = arith.constant 0 : i32
    %c0_i32_1 = arith.constant 0 : i32
    return %c0_i32, %c0_i32_0 : i32, i32
  }
  func.func @transform_3(%arg0: i32) -> (i32, i32) {
    %c0_i32 = arith.constant 0 : i32
    %c0_i32_0 = arith.constant 0 : i32
    %c0_i32_1 = arith.constant 0 : i32
    return %c0_i32, %c0_i32_0 : i32, i32
  }
  func.func @transform_4(%arg0: i32) -> (i32, i32) {
    %c0_i32 = arith.constant 0 : i32
    %c0_i32_0 = arith.constant 0 : i32
    return %arg0, %c0_i32 : i32, i32
  }
}

module attributes {stable_mosaic.version = 11 : i64} {
  func.func @_attention_kernel(%arg0: i32, %arg1: memref<1x3x96xbf16, #tpu.memory_space<vmem>>, %arg2: memref<1x3x32xbf16, #tpu.memory_space<vmem>>) attributes {dimension_semantics = [#tpu.dimension_semantics<parallel>], iteration_bounds = array<i64: 2>, scalar_prefetch = 0 : i64, scratch_operands = 0 : i64, tpu.core_type = #tpu.core_type<tc>, window_params = [{transform_indices = @transform_0, window_bounds = array<i64: 1, 3, 96>}, {transform_indices = @transform_1, window_bounds = array<i64: 1, 3, 32>}]} {
    %c0 = arith.constant 0 : index
    %c0_0 = arith.constant 0 : index
    %c0_1 = arith.constant 0 : index
    %0 = vector.load %arg1[%c0, %c0_0, %c0_1] : memref<1x3x96xbf16, #tpu.memory_space<vmem>>, vector<1x3x96xbf16>
    %1 = arith.extf %0 : vector<1x3x96xbf16> to vector<1x3x96xf32>
    %2 = vector.extract_strided_slice %1 {offsets = [0, 0, 0], sizes = [1, 3, 16], strides = [1, 1, 1]} : vector<1x3x96xf32> to vector<1x3x16xf32>
    %cst = arith.constant 2.500000e-01 : f32
    %3 = vector.broadcast %cst : f32 to vector<1x3x16xf32>
    %4 = arith.mulf %2, %3 : vector<1x3x16xf32>
    %5 = vector.extract_strided_slice %1 {offsets = [0, 0, 32], sizes = [1, 3, 16], strides = [1, 1, 1]} : vector<1x3x96xf32> to vector<1x3x16xf32>
    %6 = vector.extract_strided_slice %1 {offsets = [0, 0, 64], sizes = [1, 3, 16], strides = [1, 1, 1]} : vector<1x3x96xf32> to vector<1x3x16xf32>
    "tpu.trace_start"() <{level = 10 : i32, message = "bnd,bmd->bnm"}> : () -> ()
    %cst_2 = arith.constant dense<0.000000e+00> : vector<1x3x3xf32>
    %7 = tpu.matmul %4, %5, %cst_2 {dimension_numbers = #tpu.dot_dimension_numbers<[2], [2], [1], [1], [0, 0, 0, 1, 1, 1], [0], [0]>} : vector<1x3x16xf32>, vector<1x3x16xf32>, vector<1x3x3xf32> -> vector<1x3x3xf32>
    "tpu.trace_stop"() : () -> ()
    %cst_3 = arith.constant dense<0xFF800000> : vector<1x3xf32>
    %8 = vector.multi_reduction <maximumf>, %7, %cst_3 [2] : vector<1x3x3xf32> to vector<1x3xf32>
    %9 = vector.shape_cast %8 : vector<1x3xf32> to vector<1x3x1xf32>
    %10 = vector.broadcast %9 : vector<1x3x1xf32> to vector<1x3x3xf32>
    %11 = arith.subf %7, %10 : vector<1x3x3xf32>
    %12 = math.exp %11 : vector<1x3x3xf32>
    %cst_4 = arith.constant dense<0.000000e+00> : vector<1x3xf32>
    %13 = vector.multi_reduction <add>, %12, %cst_4 [2] : vector<1x3x3xf32> to vector<1x3xf32>
    %14 = vector.shape_cast %13 : vector<1x3xf32> to vector<1x3x1xf32>
    "tpu.trace_start"() <{level = 10 : i32, message = "bnm,bmd->bnd"}> : () -> ()
    %cst_5 = arith.constant dense<0.000000e+00> : vector<1x3x16xf32>
    %15 = tpu.matmul %12, %6, %cst_5 {dimension_numbers = #tpu.dot_dimension_numbers<[2], [1], [1], [2], [0, 0, 0, 1, 1, 2], [0], [0]>} : vector<1x3x3xf32>, vector<1x3x16xf32>, vector<1x3x16xf32> -> vector<1x3x16xf32>
    "tpu.trace_stop"() : () -> ()
    %16 = tpu.reciprocal %14 {approx = true} : vector<1x3x1xf32> -> vector<1x3x1xf32>
    %17 = vector.broadcast %16 : vector<1x3x1xf32> to vector<1x3x16xf32>
    %18 = arith.mulf %15, %17 : vector<1x3x16xf32>
    %19 = vector.extract_strided_slice %1 {offsets = [0, 0, 16], sizes = [1, 3, 16], strides = [1, 1, 1]} : vector<1x3x96xf32> to vector<1x3x16xf32>
    %cst_6 = arith.constant 2.500000e-01 : f32
    %20 = vector.broadcast %cst_6 : f32 to vector<1x3x16xf32>
    %21 = arith.mulf %19, %20 : vector<1x3x16xf32>
    %22 = vector.extract_strided_slice %1 {offsets = [0, 0, 48], sizes = [1, 3, 16], strides = [1, 1, 1]} : vector<1x3x96xf32> to vector<1x3x16xf32>
    %23 = vector.extract_strided_slice %1 {offsets = [0, 0, 80], sizes = [1, 3, 16], strides = [1, 1, 1]} : vector<1x3x96xf32> to vector<1x3x16xf32>
    "tpu.trace_start"() <{level = 10 : i32, message = "bnd,bmd->bnm"}> : () -> ()
    %cst_7 = arith.constant dense<0.000000e+00> : vector<1x3x3xf32>
    %24 = tpu.matmul %21, %22, %cst_7 {dimension_numbers = #tpu.dot_dimension_numbers<[2], [2], [1], [1], [0, 0, 0, 1, 1, 1], [0], [0]>} : vector<1x3x16xf32>, vector<1x3x16xf32>, vector<1x3x3xf32> -> vector<1x3x3xf32>
    "tpu.trace_stop"() : () -> ()
    %cst_8 = arith.constant dense<0xFF800000> : vector<1x3xf32>
    %25 = vector.multi_reduction <maximumf>, %24, %cst_8 [2] : vector<1x3x3xf32> to vector<1x3xf32>
    %26 = vector.shape_cast %25 : vector<1x3xf32> to vector<1x3x1xf32>
    %27 = vector.broadcast %26 : vector<1x3x1xf32> to vector<1x3x3xf32>
    %28 = arith.subf %24, %27 : vector<1x3x3xf32>
    %29 = math.exp %28 : vector<1x3x3xf32>
    %cst_9 = arith.constant dense<0.000000e+00> : vector<1x3xf32>
    %30 = vector.multi_reduction <add>, %29, %cst_9 [2] : vector<1x3x3xf32> to vector<1x3xf32>
    %31 = vector.shape_cast %30 : vector<1x3xf32> to vector<1x3x1xf32>
    "tpu.trace_start"() <{level = 10 : i32, message = "bnm,bmd->bnd"}> : () -> ()
    %cst_10 = arith.constant dense<0.000000e+00> : vector<1x3x16xf32>
    %32 = tpu.matmul %29, %23, %cst_10 {dimension_numbers = #tpu.dot_dimension_numbers<[2], [1], [1], [2], [0, 0, 0, 1, 1, 2], [0], [0]>} : vector<1x3x3xf32>, vector<1x3x16xf32>, vector<1x3x16xf32> -> vector<1x3x16xf32>
    "tpu.trace_stop"() : () -> ()
    %33 = tpu.reciprocal %31 {approx = true} : vector<1x3x1xf32> -> vector<1x3x1xf32>
    %34 = vector.broadcast %33 : vector<1x3x1xf32> to vector<1x3x16xf32>
    %35 = arith.mulf %32, %34 : vector<1x3x16xf32>
    %36 = tpu.concatenate %18, %35 in 2 : vector<1x3x16xf32>, vector<1x3x16xf32> -> vector<1x3x32xf32>
    %37 = arith.truncf %36 : vector<1x3x32xf32> to vector<1x3x32xbf16>
    %c0_11 = arith.constant 0 : index
    %c0_12 = arith.constant 0 : index
    %c0_13 = arith.constant 0 : index
    %38 = vector.load %arg2[%c0_11, %c0_12, %c0_13] : memref<1x3x32xbf16, #tpu.memory_space<vmem>>, vector<1x3x32xbf16>
    tpu.vector_store %arg2[%c0_11, %c0_12, %c0_13], %37 {strides = array<i32>} : memref<1x3x32xbf16, #tpu.memory_space<vmem>>, vector<1x3x32xbf16>,
    return
  }
  func.func @transform_0(%arg0: i32) -> (i32, i32, i32) {
    %c0_i32 = arith.constant 0 : i32
    %c0_i32_0 = arith.constant 0 : i32
    %c0_i32_1 = arith.constant 0 : i32
    return %arg0, %c0_i32, %c0_i32_0 : i32, i32, i32
  }
  func.func @transform_1(%arg0: i32) -> (i32, i32, i32) {
    %c0_i32 = arith.constant 0 : i32
    %c0_i32_0 = arith.constant 0 : i32
    %c0_i32_1 = arith.constant 0 : i32
    return %arg0, %c0_i32, %c0_i32_0 : i32, i32, i32
  }
}

module attributes {stable_mosaic.version = 11 : i64} {
  func.func @_fused_linear_kernel(%arg0: i32, %arg1: memref<16x32xbf16, #tpu.memory_space<vmem>>, %arg2: memref<32x256xbf16, #tpu.memory_space<vmem>>, %arg3: memref<1x256xf32, #tpu.memory_space<vmem>>, %arg4: memref<16x32xbf16, #tpu.memory_space<vmem>>, %arg5: memref<16x256xbf16, #tpu.memory_space<vmem>>) attributes {dimension_semantics = [#tpu.dimension_semantics<parallel>], iteration_bounds = array<i64: 1>, scalar_prefetch = 0 : i64, scratch_operands = 0 : i64, tpu.core_type = #tpu.core_type<tc>, window_params = [{transform_indices = @transform_0, window_bounds = array<i64: 16, 32>}, {pipeline_mode = #tpu.pipeline_mode<synchronous>, transform_indices = @transform_1, window_bounds = array<i64: 32, 256>}, {pipeline_mode = #tpu.pipeline_mode<synchronous>, transform_indices = @transform_2, window_bounds = array<i64: 1, 256>}, {transform_indices = @transform_3, window_bounds = array<i64: 16, 32>}, {transform_indices = @transform_4, window_bounds = array<i64: 16, 256>}]} {
    %c0 = arith.constant 0 : index
    %c0_0 = arith.constant 0 : index
    %0 = vector.load %arg1[%c0, %c0_0] : memref<16x32xbf16, #tpu.memory_space<vmem>>, vector<16x32xbf16>
    %c0_1 = arith.constant 0 : index
    %c0_2 = arith.constant 0 : index
    %1 = vector.load %arg2[%c0_1, %c0_2] : memref<32x256xbf16, #tpu.memory_space<vmem>>, vector<32x256xbf16>
    %cst = arith.constant dense<0.000000e+00> : vector<16x256xf32>
    %2 = tpu.matmul %0, %1, %cst {dimension_numbers = #tpu.dot_dimension_numbers<[1], [0], [0], [1], [0, 0, 1, 1], [], []>} : vector<16x32xbf16>, vector<32x256xbf16>, vector<16x256xf32> -> vector<16x256xf32>
    %c0_3 = arith.constant 0 : index
    %c0_4 = arith.constant 0 : index
    %3 = vector.load %arg3[%c0_3, %c0_4] : memref<1x256xf32, #tpu.memory_space<vmem>>, vector<1x256xf32>
    %4 = vector.broadcast %3 : vector<1x256xf32> to vector<16x256xf32>
    %5 = arith.addf %2, %4 : vector<16x256xf32>
    %c0_5 = arith.constant 0 : index
    %c0_6 = arith.constant 0 : index
    %6 = vector.load %arg4[%c0_5, %c0_6] : memref<16x32xbf16, #tpu.memory_space<vmem>>, vector<16x32xbf16>
    %7 = arith.extf %6 : vector<16x32xbf16> to vector<16x32xf32>
    %cst_7 = arith.constant 0.000000e+00 : f32
    %8 = vector.broadcast %cst_7 : f32 to vector<16x224xf32>
    %9 = tpu.concatenate %7, %8 in 1 : vector<16x32xf32>, vector<16x224xf32> -> vector<16x256xf32>
    %10 = arith.addf %5, %9 : vector<16x256xf32>
    %11 = arith.truncf %10 : vector<16x256xf32> to vector<16x256xbf16>
    %c0_8 = arith.constant 0 : index
    %c0_9 = arith.constant 0 : index
    %12 = vector.load %arg5[%c0_8, %c0_9] : memref<16x256xbf16, #tpu.memory_space<vmem>>, vector<16x256xbf16>
    tpu.vector_store %arg5[%c0_8, %c0_9], %11 {strides = array<i32>} : memref<16x256xbf16, #tpu.memory_space<vmem>>, vector<16x256xbf16>,
    return
  }
  func.func @transform_0(%arg0: i32) -> (i32, i32) {
    %c0_i32 = arith.constant 0 : i32
    %c0_i32_0 = arith.constant 0 : i32
    return %arg0, %c0_i32 : i32, i32
  }
  func.func @transform_1(%arg0: i32) -> (i32, i32) {
    %c0_i32 = arith.constant 0 : i32
    %c0_i32_0 = arith.constant 0 : i32
    %c0_i32_1 = arith.constant 0 : i32
    return %c0_i32, %c0_i32_0 : i32, i32
  }
  func.func @transform_2(%arg0: i32) -> (i32, i32) {
    %c0_i32 = arith.constant 0 : i32
    %c0_i32_0 = arith.constant 0 : i32
    %c0_i32_1 = arith.constant 0 : i32
    return %c0_i32, %c0_i32_0 : i32, i32
  }
  func.func @transform_3(%arg0: i32) -> (i32, i32) {
    %c0_i32 = arith.constant 0 : i32
    %c0_i32_0 = arith.constant 0 : i32
    return %arg0, %c0_i32 : i32, i32
  }
  func.func @transform_4(%arg0: i32) -> (i32, i32) {
    %c0_i32 = arith.constant 0 : i32
    %c0_i32_0 = arith.constant 0 : i32
    return %arg0, %c0_i32 : i32, i32
  }
}

module attributes {stable_mosaic.version = 11 : i64} {
  func.func @_fused_linear_kernel(%arg0: i32, %arg1: memref<16x32xbf16, #tpu.memory_space<vmem>>, %arg2: memref<1x32xf32, #tpu.memory_space<vmem>>, %arg3: memref<1x32xf32, #tpu.memory_space<vmem>>, %arg4: memref<32x256xbf16, #tpu.memory_space<vmem>>, %arg5: memref<1x256xf32, #tpu.memory_space<vmem>>, %arg6: memref<16x256xbf16, #tpu.memory_space<vmem>>) attributes {dimension_semantics = [#tpu.dimension_semantics<parallel>], iteration_bounds = array<i64: 1>, scalar_prefetch = 0 : i64, scratch_operands = 0 : i64, tpu.core_type = #tpu.core_type<tc>, window_params = [{transform_indices = @transform_0, window_bounds = array<i64: 16, 32>}, {pipeline_mode = #tpu.pipeline_mode<synchronous>, transform_indices = @transform_1, window_bounds = array<i64: 1, 32>}, {pipeline_mode = #tpu.pipeline_mode<synchronous>, transform_indices = @transform_2, window_bounds = array<i64: 1, 32>}, {pipeline_mode = #tpu.pipeline_mode<synchronous>, transform_indices = @transform_3, window_bounds = array<i64: 32, 256>}, {pipeline_mode = #tpu.pipeline_mode<synchronous>, transform_indices = @transform_4, window_bounds = array<i64: 1, 256>}, {transform_indices = @transform_5, window_bounds = array<i64: 16, 256>}]} {
    %c0 = arith.constant 0 : index
    %c0_0 = arith.constant 0 : index
    %0 = vector.load %arg1[%c0, %c0_0] : memref<16x32xbf16, #tpu.memory_space<vmem>>, vector<16x32xbf16>
    %1 = arith.extf %0 : vector<16x32xbf16> to vector<16x32xf32>
    %cst = arith.constant dense<0.000000e+00> : vector<16xf32>
    %2 = vector.multi_reduction <add>, %1, %cst [1] : vector<16x32xf32> to vector<16xf32>
    %3 = vector.shape_cast %2 : vector<16xf32> to vector<16x1xf32>
    %cst_1 = arith.constant 3.200000e+01 : f32
    %4 = vector.broadcast %cst_1 : f32 to vector<16x1xf32>
    %5 = arith.divf %3, %4 : vector<16x1xf32>
    %6 = vector.broadcast %5 : vector<16x1xf32> to vector<16x32xf32>
    %7 = arith.subf %1, %6 : vector<16x32xf32>
    %8 = arith.mulf %7, %7 : vector<16x32xf32>
    %cst_2 = arith.constant dense<0.000000e+00> : vector<16xf32>
    %9 = vector.multi_reduction <add>, %8, %cst_2 [1] : vector<16x32xf32> to vector<16xf32>
    %10 = vector.shape_cast %9 : vector<16xf32> to vector<16x1xf32>
    %cst_3 = arith.constant 3.200000e+01 : f32
    %11 = vector.broadcast %cst_3 : f32 to vector<16x1xf32>
    %12 = arith.divf %10, %11 : vector<16x1xf32>
    %13 = vector.broadcast %5 : vector<16x1xf32> to vector<16x32xf32>
    %14 = arith.subf %1, %13 : vector<16x32xf32>
    %cst_4 = arith.constant 9.99999974E-6 : f32
    %15 = vector.broadcast %cst_4 : f32 to vector<16x1xf32>
    %16 = arith.addf %12, %15 : vector<16x1xf32>
    %17 = math.rsqrt %16 : vector<16x1xf32>
    %18 = vector.broadcast %17 : vector<16x1xf32> to vector<16x32xf32>
    %19 = arith.mulf %14, %18 : vector<16x32xf32>
    %c0_5 = arith.constant 0 : index
    %c0_6 = arith.constant 0 : index
    %20 = vector.load %arg2[%c0_5, %c0_6] : memref<1x32xf32, #tpu.memory_space<vmem>>, vector<1x32xf32>
    %21 = vector.broadcast %20 : vector<1x32xf32> to vector<16x32xf32>
    %22 = arith.mulf %19, %21 : vector<16x32xf32>
    %c0_7 = arith.constant 0 : index
    %c0_8 = arith.constant 0 : index
    %23 = vector.load %arg3[%c0_7, %c0_8] : memref<1x32xf32, #tpu.memory_space<vmem>>, vector<1x32xf32>
    %24 = vector.broadcast %23 : vector<1x32xf32> to vector<16x32xf32>
    %25 = arith.addf %22, %24 : vector<16x32xf32>
    %26 = arith.truncf %25 : vector<16x32xf32> to vector<16x32xbf16>
    %c0_9 = arith.constant 0 : index
    %c0_10 = arith.constant 0 : index
    %27 = vector.load %arg4[%c0_9, %c0_10] : memref<32x256xbf16, #tpu.memory_space<vmem>>, vector<32x256xbf16>
    %cst_11 = arith.constant dense<0.000000e+00> : vector<16x256xf32>
    %28 = tpu.matmul %26, %27, %cst_11 {dimension_numbers = #tpu.dot_dimension_numbers<[1], [0], [0], [1], [0, 0, 1, 1], [], []>} : vector<16x32xbf16>, vector<32x256xbf16>, vector<16x256xf32> -> vector<16x256xf32>
    %c0_12 = arith.constant 0 : index
    %c0_13 = arith.constant 0 : index
    %29 = vector.load %arg5[%c0_12, %c0_13] : memref<1x256xf32, #tpu.memory_space<vmem>>, vector<1x256xf32>
    %30 = vector.broadcast %29 : vector<1x256xf32> to vector<16x256xf32>
    %31 = arith.addf %28, %30 : vector<16x256xf32>
    %cst_14 = arith.constant 5.000000e-01 : f32
    %32 = vector.broadcast %cst_14 : f32 to vector<16x256xf32>
    %33 = arith.mulf %32, %31 : vector<16x256xf32>
    %cst_15 = arith.constant 0.707106769 : f32
    %34 = vector.broadcast %cst_15 : f32 to vector<16x256xf32>
    %35 = arith.mulf %31, %34 : vector<16x256xf32>
    %36 = math.erf %35 : vector<16x256xf32>
    %cst_16 = arith.constant 1.000000e+00 : f32
    %37 = vector.broadcast %cst_16 : f32 to vector<16x256xf32>
    %38 = arith.addf %37, %36 : vector<16x256xf32>
    %39 = arith.mulf %33, %38 : vector<16x256xf32>
    %40 = arith.truncf %39 : vector<16x256xf32> to vector<16x256xbf16>
    %c0_17 = arith.constant 0 : index
    %c0_18 = arith.constant 0 : index
    %41 = vector.load %arg6[%c0_17, %c0_18] : memref<16x256xbf16, #tpu.memory_space<vmem>>, vector<16x256xbf16>
    tpu.vector_store %arg6[%c0_17, %c0_18], %40 {strides = array<i32>} : memref<16x256xbf16, #tpu.memory_space<vmem>>, vector<16x256xbf16>,
    return
  }
  func.func @transform_0(%arg0: i32) -> (i32, i32) {
    %c0_i32 = arith.constant 0 : i32
    %c0_i32_0 = arith.constant 0 : i32
    return %arg0, %c0_i32 : i32, i32
  }
  func.func @transform_1(%arg0: i32) -> (i32, i32) {
    %c0_i32 = arith.constant 0 : i32
    %c0_i32_0 = arith.constant 0 : i32
    %c0_i32_1 = arith.constant 0 : i32
    return %c0_i32, %c0_i32_0 : i32, i32
  }
  func.func @transform_2(%arg0: i32) -> (i32, i32) {
    %c0_i32 = arith.constant 0 : i32
    %c0_i32_0 = arith.constant 0 : i32
    %c0_i32_1 = arith.constant 0 : i32
    return %c0_i32, %c0_i32_0 : i32, i32
  }
  func.func @transform_3(%arg0: i32) -> (i32, i32) {
    %c0_i32 = arith.constant 0 : i32
    %c0_i32_0 = arith.constant 0 : i32
    %c0_i32_1 = arith.constant 0 : i32
    return %c0_i32, %c0_i32_0 : i32, i32
  }
  func.func @transform_4(%arg0: i32) -> (i32, i32) {
    %c0_i32 = arith.constant 0 : i32
    %c0_i32_0 = arith.constant 0 : i32
    %c0_i32_1 = arith.constant 0 : i32
    return %c0_i32, %c0_i32_0 : i32, i32
  }
  func.func @transform_5(%arg0: i32) -> (i32, i32) {
    %c0_i32 = arith.constant 0 : i32
    %c0_i32_0 = arith.constant 0 : i32
    return %arg0, %c0_i32 : i32, i32
  }
}

module attributes {stable_mosaic.version = 11 : i64} {
  func.func @_fused_linear_kernel(%arg0: i32, %arg1: memref<16x64xbf16, #tpu.memory_space<vmem>>, %arg2: memref<64x256xbf16, #tpu.memory_space<vmem>>, %arg3: memref<1x256xf32, #tpu.memory_space<vmem>>, %arg4: memref<16x32xbf16, #tpu.memory_space<vmem>>, %arg5: memref<16x256xbf16, #tpu.memory_space<vmem>>) attributes {dimension_semantics = [#tpu.dimension_semantics<parallel>], iteration_bounds = array<i64: 1>, scalar_prefetch = 0 : i64, scratch_operands = 0 : i64, tpu.core_type = #tpu.core_type<tc>, window_params = [{transform_indices = @transform_0, window_bounds = array<i64: 16, 64>}, {pipeline_mode = #tpu.pipeline_mode<synchronous>, transform_indices = @transform_1, window_bounds = array<i64: 64, 256>}, {pipeline_mode = #tpu.pipeline_mode<synchronous>, transform_indices = @transform_2, window_bounds = array<i64: 1, 256>}, {transform_indices = @transform_3, window_bounds = array<i64: 16, 32>}, {transform_indices = @transform_4, window_bounds = array<i64: 16, 256>}]} {
    %c0 = arith.constant 0 : index
    %c0_0 = arith.constant 0 : index
    %0 = vector.load %arg1[%c0, %c0_0] : memref<16x64xbf16, #tpu.memory_space<vmem>>, vector<16x64xbf16>
    %c0_1 = arith.constant 0 : index
    %c0_2 = arith.constant 0 : index
    %1 = vector.load %arg2[%c0_1, %c0_2] : memref<64x256xbf16, #tpu.memory_space<vmem>>, vector<64x256xbf16>
    %cst = arith.constant dense<0.000000e+00> : vector<16x256xf32>
    %2 = tpu.matmul %0, %1, %cst {dimension_numbers = #tpu.dot_dimension_numbers<[1], [0], [0], [1], [0, 0, 1, 1], [], []>} : vector<16x64xbf16>, vector<64x256xbf16>, vector<16x256xf32> -> vector<16x256xf32>
    %c0_3 = arith.constant 0 : index
    %c0_4 = arith.constant 0 : index
    %3 = vector.load %arg3[%c0_3, %c0_4] : memref<1x256xf32, #tpu.memory_space<vmem>>, vector<1x256xf32>
    %4 = vector.broadcast %3 : vector<1x256xf32> to vector<16x256xf32>
    %5 = arith.addf %2, %4 : vector<16x256xf32>
    %c0_5 = arith.constant 0 : index
    %c0_6 = arith.constant 0 : index
    %6 = vector.load %arg4[%c0_5, %c0_6] : memref<16x32xbf16, #tpu.memory_space<vmem>>, vector<16x32xbf16>
    %7 = arith.extf %6 : vector<16x32xbf16> to vector<16x32xf32>
    %cst_7 = arith.constant 0.000000e+00 : f32
    %8 = vector.broadcast %cst_7 : f32 to vector<16x224xf32>
    %9 = tpu.concatenate %7, %8 in 1 : vector<16x32xf32>, vector<16x224xf32> -> vector<16x256xf32>
    %10 = arith.addf %5, %9 : vector<16x256xf32>
    %11 = arith.truncf %10 : vector<16x256xf32> to vector<16x256xbf16>
    %c0_8 = arith.constant 0 : index
    %c0_9 = arith.constant 0 : index
    %12 = vector.load %arg5[%c0_8, %c0_9] : memref<16x256xbf16, #tpu.memory_space<vmem>>, vector<16x256xbf16>
    tpu.vector_store %arg5[%c0_8, %c0_9], %11 {strides = array<i32>} : memref<16x256xbf16, #tpu.memory_space<vmem>>, vector<16x256xbf16>,
    return
  }
  func.func @transform_0(%arg0: i32) -> (i32, i32) {
    %c0_i32 = arith.constant 0 : i32
    %c0_i32_0 = arith.constant 0 : i32
    return %arg0, %c0_i32 : i32, i32
  }
  func.func @transform_1(%arg0: i32) -> (i32, i32) {
    %c0_i32 = arith.constant 0 : i32
    %c0_i32_0 = arith.constant 0 : i32
    %c0_i32_1 = arith.constant 0 : i32
    return %c0_i32, %c0_i32_0 : i32, i32
  }
  func.func @transform_2(%arg0: i32) -> (i32, i32) {
    %c0_i32 = arith.constant 0 : i32
    %c0_i32_0 = arith.constant 0 : i32
    %c0_i32_1 = arith.constant 0 : i32
    return %c0_i32, %c0_i32_0 : i32, i32
  }
  func.func @transform_3(%arg0: i32) -> (i32, i32) {
    %c0_i32 = arith.constant 0 : i32
    %c0_i32_0 = arith.constant 0 : i32
    return %arg0, %c0_i32 : i32, i32
  }
  func.func @transform_4(%arg0: i32) -> (i32, i32) {
    %c0_i32 = arith.constant 0 : i32
    %c0_i32_0 = arith.constant 0 : i32
    return %arg0, %c0_i32 : i32, i32
  }
}

module attributes {stable_mosaic.version = 11 : i64} {
  func.func @_fused_linear_kernel(%arg0: i32, %arg1: memref<16x32xbf16, #tpu.memory_space<vmem>>, %arg2: memref<1x32xf32, #tpu.memory_space<vmem>>, %arg3: memref<1x32xf32, #tpu.memory_space<vmem>>, %arg4: memref<32x256xbf16, #tpu.memory_space<vmem>>, %arg5: memref<1x256xf32, #tpu.memory_space<vmem>>, %arg6: memref<16x256xf32, #tpu.memory_space<vmem>>) attributes {dimension_semantics = [#tpu.dimension_semantics<parallel>], iteration_bounds = array<i64: 1>, scalar_prefetch = 0 : i64, scratch_operands = 0 : i64, tpu.core_type = #tpu.core_type<tc>, window_params = [{transform_indices = @transform_0, window_bounds = array<i64: 16, 32>}, {pipeline_mode = #tpu.pipeline_mode<synchronous>, transform_indices = @transform_1, window_bounds = array<i64: 1, 32>}, {pipeline_mode = #tpu.pipeline_mode<synchronous>, transform_indices = @transform_2, window_bounds = array<i64: 1, 32>}, {pipeline_mode = #tpu.pipeline_mode<synchronous>, transform_indices = @transform_3, window_bounds = array<i64: 32, 256>}, {pipeline_mode = #tpu.pipeline_mode<synchronous>, transform_indices = @transform_4, window_bounds = array<i64: 1, 256>}, {transform_indices = @transform_5, window_bounds = array<i64: 16, 256>}]} {
    %c0 = arith.constant 0 : index
    %c0_0 = arith.constant 0 : index
    %0 = vector.load %arg1[%c0, %c0_0] : memref<16x32xbf16, #tpu.memory_space<vmem>>, vector<16x32xbf16>
    %1 = arith.extf %0 : vector<16x32xbf16> to vector<16x32xf32>
    %cst = arith.constant dense<0.000000e+00> : vector<16xf32>
    %2 = vector.multi_reduction <add>, %1, %cst [1] : vector<16x32xf32> to vector<16xf32>
    %3 = vector.shape_cast %2 : vector<16xf32> to vector<16x1xf32>
    %cst_1 = arith.constant 3.200000e+01 : f32
    %4 = vector.broadcast %cst_1 : f32 to vector<16x1xf32>
    %5 = arith.divf %3, %4 : vector<16x1xf32>
    %6 = vector.broadcast %5 : vector<16x1xf32> to vector<16x32xf32>
    %7 = arith.subf %1, %6 : vector<16x32xf32>
    %8 = arith.mulf %7, %7 : vector<16x32xf32>
    %cst_2 = arith.constant dense<0.000000e+00> : vector<16xf32>
    %9 = vector.multi_reduction <add>, %8, %cst_2 [1] : vector<16x32xf32> to vector<16xf32>
    %10 = vector.shape_cast %9 : vector<16xf32> to vector<16x1xf32>
    %cst_3 = arith.constant 3.200000e+01 : f32
    %11 = vector.broadcast %cst_3 : f32 to vector<16x1xf32>
    %12 = arith.divf %10, %11 : vector<16x1xf32>
    %13 = vector.broadcast %5 : vector<16x1xf32> to vector<16x32xf32>
    %14 = arith.subf %1, %13 : vector<16x32xf32>
    %cst_4 = arith.constant 9.99999974E-6 : f32
    %15 = vector.broadcast %cst_4 : f32 to vector<16x1xf32>
    %16 = arith.addf %12, %15 : vector<16x1xf32>
    %17 = math.rsqrt %16 : vector<16x1xf32>
    %18 = vector.broadcast %17 : vector<16x1xf32> to vector<16x32xf32>
    %19 = arith.mulf %14, %18 : vector<16x32xf32>
    %c0_5 = arith.constant 0 : index
    %c0_6 = arith.constant 0 : index
    %20 = vector.load %arg2[%c0_5, %c0_6] : memref<1x32xf32, #tpu.memory_space<vmem>>, vector<1x32xf32>
    %21 = vector.broadcast %20 : vector<1x32xf32> to vector<16x32xf32>
    %22 = arith.mulf %19, %21 : vector<16x32xf32>
    %c0_7 = arith.constant 0 : index
    %c0_8 = arith.constant 0 : index
    %23 = vector.load %arg3[%c0_7, %c0_8] : memref<1x32xf32, #tpu.memory_space<vmem>>, vector<1x32xf32>
    %24 = vector.broadcast %23 : vector<1x32xf32> to vector<16x32xf32>
    %25 = arith.addf %22, %24 : vector<16x32xf32>
    %26 = arith.truncf %25 : vector<16x32xf32> to vector<16x32xbf16>
    %c0_9 = arith.constant 0 : index
    %c0_10 = arith.constant 0 : index
    %27 = vector.load %arg4[%c0_9, %c0_10] : memref<32x256xbf16, #tpu.memory_space<vmem>>, vector<32x256xbf16>
    %cst_11 = arith.constant dense<0.000000e+00> : vector<16x256xf32>
    %28 = tpu.matmul %26, %27, %cst_11 {dimension_numbers = #tpu.dot_dimension_numbers<[1], [0], [0], [1], [0, 0, 1, 1], [], []>} : vector<16x32xbf16>, vector<32x256xbf16>, vector<16x256xf32> -> vector<16x256xf32>
    %c0_12 = arith.constant 0 : index
    %c0_13 = arith.constant 0 : index
    %29 = vector.load %arg5[%c0_12, %c0_13] : memref<1x256xf32, #tpu.memory_space<vmem>>, vector<1x256xf32>
    %30 = vector.broadcast %29 : vector<1x256xf32> to vector<16x256xf32>
    %31 = arith.addf %28, %30 : vector<16x256xf32>
    %c0_14 = arith.constant 0 : index
    %c0_15 = arith.constant 0 : index
    %32 = vector.load %arg6[%c0_14, %c0_15] : memref<16x256xf32, #tpu.memory_space<vmem>>, vector<16x256xf32>
    tpu.vector_store %arg6[%c0_14, %c0_15], %31 {strides = array<i32>} : memref<16x256xf32, #tpu.memory_space<vmem>>, vector<16x256xf32>,
    return
  }
  func.func @transform_0(%arg0: i32) -> (i32, i32) {
    %c0_i32 = arith.constant 0 : i32
    %c0_i32_0 = arith.constant 0 : i32
    return %arg0, %c0_i32 : i32, i32
  }
  func.func @transform_1(%arg0: i32) -> (i32, i32) {
    %c0_i32 = arith.constant 0 : i32
    %c0_i32_0 = arith.constant 0 : i32
    %c0_i32_1 = arith.constant 0 : i32
    return %c0_i32, %c0_i32_0 : i32, i32
  }
  func.func @transform_2(%arg0: i32) -> (i32, i32) {
    %c0_i32 = arith.constant 0 : i32
    %c0_i32_0 = arith.constant 0 : i32
    %c0_i32_1 = arith.constant 0 : i32
    return %c0_i32, %c0_i32_0 : i32, i32
  }
  func.func @transform_3(%arg0: i32) -> (i32, i32) {
    %c0_i32 = arith.constant 0 : i32
    %c0_i32_0 = arith.constant 0 : i32
    %c0_i32_1 = arith.constant 0 : i32
    return %c0_i32, %c0_i32_0 : i32, i32
  }
  func.func @transform_4(%arg0: i32) -> (i32, i32) {
    %c0_i32 = arith.constant 0 : i32
    %c0_i32_0 = arith.constant 0 : i32
    %c0_i32_1 = arith.constant 0 : i32
    return %c0_i32, %c0_i32_0 : i32, i32
  }
  func.func @transform_5(%arg0: i32) -> (i32, i32) {
    %c0_i32 = arith.constant 0 : i32
    %c0_i32_0 = arith.constant 0 : i32
    return %arg0, %c0_i32 : i32, i32
  }
}

</mosaic_0001>

<llo_original>
// kernel: vit_forward.12
$region0: #{vit_forward.12}
  #allocation0 [shape = 'u32[]', space=smem, size = 0x4, offset = 0x4, fixed_abs, tag = 'smem constant byte address 0x4 - core index']
  #allocation1 [shape = 'u32[72,128]{1,0:T(1,128)}', space=vmem, size = 0x9000, scoped, tag = 'internal scratch']
  %s0 = inlined_call_operand.vmem [shape: f32[16,384], index: 0, kind: input, shape index: {}]
  %s1 = inlined_call_operand.vmem [shape: f32[1,384], index: 1, kind: input, shape index: {}]
  %s2 = inlined_call_operand.vmem [shape: f32[1,384], index: 2, kind: input, shape index: {}]
  %s3 = inlined_call_operand.vmem [shape: bf16[384,256], index: 3, kind: input, shape index: {}]
  %s4 = inlined_call_operand.vmem [shape: f32[1,256], index: 4, kind: input, shape index: {}]
  %s5 = inlined_call_operand.vmem [shape: f32[1,256], index: 5, kind: input, shape index: {}]
  %s6 = inlined_call_operand.vmem [shape: f32[1,256], index: 6, kind: input, shape index: {}]
  %s7 = inlined_call_operand.vmem [shape: bf16[16,256], index: 7, kind: output, shape index: {}]
  %s8 = sld [smem:[#allocation0]]
  $region38: #{vit_forward.12} parent=0
    _
  %s10 = ssub.s32 1, %s8
  %s11 = scalar_select 0, %s10, %s8
  // Predicated region
  $region2: #{vit_forward.12} parent=0 // pred_check
    _
  $region3: #{vit_forward.12} parent=0 // pred_check_branch
    %13 = sbr.rel (0) target = $region5
  $region4: #{vit_forward.12} parent=0 // pred_region
    _
  $region5: #{vit_forward.12} parent=0 // pred_fallthru
    _
  // Predicated region
  $region6: #{vit_forward.12} parent=0 // pred_check
    _
  $region7: #{vit_forward.12} parent=0 // pred_check_branch
    %15 = sbr.rel (0) target = $region9
  $region8: #{vit_forward.12} parent=0 // pred_region
    _
  $region9: #{vit_forward.12} parent=0 // pred_fallthru
    _
  // Predicated region
  $region10: #{vit_forward.12} parent=0 // pred_check
    _
  $region11: #{vit_forward.12} parent=0 // pred_check_branch
    %17 = sbr.rel (0) target = $region13
  $region12: #{vit_forward.12} parent=0 // pred_region
    _
  $region13: #{vit_forward.12} parent=0 // pred_fallthru
    _
  // Predicated region
  $region14: #{vit_forward.12} parent=0 // pred_check
    _
  $region15: #{vit_forward.12} parent=0 // pred_check_branch
    %19 = sbr.rel (0) target = $region17
  $region16: #{vit_forward.12} parent=0 // pred_region
    _
  $region17: #{vit_forward.12} parent=0 // pred_fallthru
    _
  // Predicated region
  $region18: #{vit_forward.12} parent=0 // pred_check
    _
  $region19: #{vit_forward.12} parent=0 // pred_check_branch
    %21 = sbr.rel (0) target = $region21
  $region20: #{vit_forward.12} parent=0 // pred_region
    _
  $region21: #{vit_forward.12} parent=0 // pred_fallthru
    _
  // Predicated region
  $region22: #{vit_forward.12} parent=0 // pred_check
    _
  $region23: #{vit_forward.12} parent=0 // pred_check_branch
    %23 = sbr.rel (0) target = $region25
  $region24: #{vit_forward.12} parent=0 // pred_region
    _
  $region25: #{vit_forward.12} parent=0 // pred_fallthru
    _
  // Predicated region
  $region26: #{vit_forward.12} parent=0 // pred_check
    _
  $region27: #{vit_forward.12} parent=0 // pred_check_branch
    %25 = sbr.rel (0) target = $region29
  $region28: #{vit_forward.12} parent=0 // pred_region
    _
  $region29: #{vit_forward.12} parent=0 // pred_fallthru
    _
  %v26 = vld [vmem:[%s0] sm:$0xff]
  %v27 = vld [vmem:[%s0 + $0x8] sm:$0xff]
  %v28 = vld [vmem:[%s0 + $0x10] sm:$0xff]
  %v29 = vld [vmem:[%s0 + $0x18] sm:$0xff]
  %v30 = vld [vmem:[%s0 + $0x20] sm:$0xff]
  %v31 = vld [vmem:[%s0 + $0x28] sm:$0xff]
  %v32 = vadd.f32 %v26, %v27
  %v33 = vadd.f32 %v32, %v28
  %34 = vadd.xlane.f32.xlu0 %v33
  %v35 = vpop.xlane.xlu0 %34
  %v36 = vadd.f32 %v29, %v30
  %v37 = vadd.f32 %v36, %v31
  %38 = vadd.xlane.f32.xlu0 %v37
  %v39 = vpop.xlane.xlu0 %38
  %v40 = vrcp.pop 384.0
  %v41 = vmul.f32 384.0, %v40
  %v42 = vsub.f32 1.0, %v41
  %v43 = vmul.f32 %v40, %v42
  %v44 = vadd.f32 %v40, %v43
  %vm45 = vweird.f32 %v40
  %v46 = vsel %vm45, %v40, %v44
  %v47 = vmul.f32 %v35, %v46
  %v48 = vmul.f32 %v39, %v46
  %v49 = vsub.f32 %v26, %v47
  %v50 = vsub.f32 %v27, %v47
  %v51 = vsub.f32 %v28, %v47
  %v52 = vsub.f32 %v29, %v48
  %v53 = vsub.f32 %v30, %v48
  %v54 = vsub.f32 %v31, %v48
  %v55 = vmul.f32 %v49, %v49
  %v56 = vmul.f32 %v50, %v50
  %v57 = vmul.f32 %v51, %v51
  %v58 = vmul.f32 %v52, %v52
  %v59 = vmul.f32 %v53, %v53
  %v60 = vmul.f32 %v54, %v54
  %v61 = vadd.f32 %v55, %v56
  %v62 = vadd.f32 %v61, %v57
  %63 = vadd.xlane.f32.xlu0 %v62
  %v64 = vpop.xlane.xlu0 %63
  %v65 = vadd.f32 %v58, %v59
  %v66 = vadd.f32 %v65, %v60
  %67 = vadd.xlane.f32.xlu0 %v66
  %v68 = vpop.xlane.xlu0 %67
  %v69 = vmul.f32 %v64, %v46
  %v70 = vmul.f32 %v68, %v46
  %v71 = vadd.f32 %v69, 1e-05
  %v72 = vadd.f32 %v70, 1e-05
  %v73 = vrsqrt.pop %v71
  %v74 = vmul.f32 %v73, %v71
  %v75 = vmul.f32 %v74, %v73
  %v76 = vmul.f32 0.5, %v75
  %v77 = vsub.f32 1.5, %v76
  %v78 = vmul.f32 %v73, %v77
  %vm79 = vweird.f32 %v71
  %vm80 = vweird.f32 %v73
  %vm81 = vmor %vm79, %vm80
  %v82 = vsel %vm81, %v73, %v78
  %v83 = vrsqrt.pop %v72
  %v84 = vmul.f32 %v83, %v72
  %v85 = vmul.f32 %v84, %v83
  %v86 = vmul.f32 0.5, %v85
  %v87 = vsub.f32 1.5, %v86
  %v88 = vmul.f32 %v83, %v87
  %vm89 = vweird.f32 %v72
  %vm90 = vweird.f32 %v83
  %vm91 = vmor %vm89, %vm90
  %v92 = vsel %vm91, %v83, %v88
  %v93 = vmul.f32 %v49, %v82
  %v94 = vmul.f32 %v50, %v82
  %v95 = vmul.f32 %v51, %v82
  %v96 = vmul.f32 %v52, %v92
  %v97 = vmul.f32 %v53, %v92
  %v98 = vmul.f32 %v54, %v92
  %v99 = vld [vmem:[%s1] sm:$0x7]
  %v101 = vperm.slane %v99, 0
  %v102 = vperm.slane %v99, 1
  %v103 = vperm.slane %v99, 2
  %v107 = vmul.f32 %v93, %v101
  %v108 = vmul.f32 %v94, %v102
  %v109 = vmul.f32 %v95, %v103
  %v110 = vmul.f32 %v96, %v101
  %v111 = vmul.f32 %v97, %v102
  %v112 = vmul.f32 %v98, %v103
  %v113 = vld [vmem:[%s2] sm:$0x7]
  %v115 = vperm.slane %v113, 0
  %v116 = vperm.slane %v113, 1
  %v117 = vperm.slane %v113, 2
  %v121 = vadd.f32 %v107, %v115
  %v122 = vadd.f32 %v108, %v116
  %v123 = vadd.f32 %v109, %v117
  %v124 = vadd.f32 %v110, %v115
  %v125 = vadd.f32 %v111, %v116
  %v126 = vadd.f32 %v112, %v117
  %v127 = vpack.c.bf16 %v124, %v121
  %v128 = vpack.c.bf16 %v125, %v122
  %v129 = vpack.c.bf16 %v126, %v123
  %v130 = vld [vmem:[%s3] sm:$0xff]
  %v131 = vld [vmem:[%s3 + $0x8] sm:$0xff]
  %v132 = vld [vmem:[%s3 + $0x10] sm:$0xff]
  %v133 = vld [vmem:[%s3 + $0x18] sm:$0xff]
  %v134 = vld [vmem:[%s3 + $0x20] sm:$0xff]
  %v135 = vld [vmem:[%s3 + $0x28] sm:$0xff]
  %v136 = vld [vmem:[%s3 + $0x30] sm:$0xff]
  %v137 = vld [vmem:[%s3 + $0x38] sm:$0xff]
  %v138 = vld [vmem:[%s3 + $0x40] sm:$0xff]
  %v139 = vld [vmem:[%s3 + $0x48] sm:$0xff]
  %v140 = vld [vmem:[%s3 + $0x50] sm:$0xff]
  %v141 = vld [vmem:[%s3 + $0x58] sm:$0xff]
  %v142 = vld [vmem:[%s3 + $0x60] sm:$0xff]
  %v143 = vld [vmem:[%s3 + $0x68] sm:$0xff]
  %v144 = vld [vmem:[%s3 + $0x70] sm:$0xff]
  %v145 = vld [vmem:[%s3 + $0x78] sm:$0xff]
  %v146 = vld [vmem:[%s3 + $0x80] sm:$0xff]
  %v147 = vld [vmem:[%s3 + $0x88] sm:$0xff]
  %v148 = vld [vmem:[%s3 + $0x90] sm:$0xff]
  %v149 = vld [vmem:[%s3 + $0x98] sm:$0xff]
  %v150 = vld [vmem:[%s3 + $0xa0] sm:$0xff]
  %v151 = vld [vmem:[%s3 + $0xa8] sm:$0xff]
  %v152 = vld [vmem:[%s3 + $0xb0] sm:$0xff]
  %v153 = vld [vmem:[%s3 + $0xb8] sm:$0xff]
  %v154 = vld [vmem:[%s3 + $0xc0] sm:$0xff]
  %v155 = vld [vmem:[%s3 + $0xc8] sm:$0xff]
  %v156 = vld [vmem:[%s3 + $0xd0] sm:$0xff]
  %v157 = vld [vmem:[%s3 + $0xd8] sm:$0xff]
  %v158 = vld [vmem:[%s3 + $0xe0] sm:$0xff]
  %v159 = vld [vmem:[%s3 + $0xe8] sm:$0xff]
  %v160 = vld [vmem:[%s3 + $0xf0] sm:$0xff]
  %v161 = vld [vmem:[%s3 + $0xf8] sm:$0xff]
  %v162 = vld [vmem:[%s3 + $0x100] sm:$0xff]
  %v163 = vld [vmem:[%s3 + $0x108] sm:$0xff]
  %v164 = vld [vmem:[%s3 + $0x110] sm:$0xff]
  %v165 = vld [vmem:[%s3 + $0x118] sm:$0xff]
  %v166 = vld [vmem:[%s3 + $0x120] sm:$0xff]
  %v167 = vld [vmem:[%s3 + $0x128] sm:$0xff]
  %v168 = vld [vmem:[%s3 + $0x130] sm:$0xff]
  %v169 = vld [vmem:[%s3 + $0x138] sm:$0xff]
  %v170 = vld [vmem:[%s3 + $0x140] sm:$0xff]
  %v171 = vld [vmem:[%s3 + $0x148] sm:$0xff]
  %v172 = vld [vmem:[%s3 + $0x150] sm:$0xff]
  %v173 = vld [vmem:[%s3 + $0x158] sm:$0xff]
  %v174 = vld [vmem:[%s3 + $0x160] sm:$0xff]
  %v175 = vld [vmem:[%s3 + $0x168] sm:$0xff]
  %v176 = vld [vmem:[%s3 + $0x170] sm:$0xff]
  %v177 = vld [vmem:[%s3 + $0x178] sm:$0xff]
  %v178 = vld [vmem:[%s4] sm:$0x3]
  %v180 = vperm.slane %v178, 0
  %v181 = vperm.slane %v178, 1
  %v232 = vunpack.c.l.b16 %v130
  %v233 = vunpack.c.h.b16 %v130
  %v234 = vunpack.c.l.b16 %v131
  %v235 = vunpack.c.h.b16 %v131
  %v236 = vunpack.c.l.b16 %v132
  %v237 = vunpack.c.h.b16 %v132
  %v238 = vunpack.c.l.b16 %v133
  %v239 = vunpack.c.h.b16 %v133
  %v240 = vunpack.c.l.b16 %v134
  %v241 = vunpack.c.h.b16 %v134
  %v242 = vunpack.c.l.b16 %v135
  %v243 = vunpack.c.h.b16 %v135
  %v244 = vunpack.c.l.b16 %v136
  %v245 = vunpack.c.h.b16 %v136
  %v246 = vunpack.c.l.b16 %v137
  %v247 = vunpack.c.h.b16 %v137
  %v248 = vunpack.c.l.b16 %v138
  %v249 = vunpack.c.h.b16 %v138
  %v250 = vunpack.c.l.b16 %v139
  %v251 = vunpack.c.h.b16 %v139
  %v252 = vunpack.c.l.b16 %v140
  %v253 = vunpack.c.h.b16 %v140
  %v254 = vunpack.c.l.b16 %v141
  %v255 = vunpack.c.h.b16 %v141
  %v256 = vunpack.c.l.b16 %v142
  %v257 = vunpack.c.h.b16 %v142
  %v258 = vunpack.c.l.b16 %v143
  %v259 = vunpack.c.h.b16 %v143
  %v260 = vunpack.c.l.b16 %v144
  %v261 = vunpack.c.h.b16 %v144
  %v262 = vunpack.c.l.b16 %v145
  %v263 = vunpack.c.h.b16 %v145
  %v264 = vunpack.c.l.b16 %v146
  %v265 = vunpack.c.h.b16 %v146
  %v266 = vunpack.c.l.b16 %v147
  %v267 = vunpack.c.h.b16 %v147
  %v268 = vunpack.c.l.b16 %v148
  %v269 = vunpack.c.h.b16 %v148
  %v270 = vunpack.c.l.b16 %v149
  %v271 = vunpack.c.h.b16 %v149
  %v272 = vunpack.c.l.b16 %v150
  %v273 = vunpack.c.h.b16 %v150
  %v274 = vunpack.c.l.b16 %v151
  %v275 = vunpack.c.h.b16 %v151
  %v276 = vunpack.c.l.b16 %v152
  %v277 = vunpack.c.h.b16 %v152
  %v278 = vunpack.c.l.b16 %v153
  %v279 = vunpack.c.h.b16 %v153
  %v280 = vunpack.c.l.b16 %v154
  %v281 = vunpack.c.h.b16 %v154
  %v282 = vunpack.c.l.b16 %v155
  %v283 = vunpack.c.h.b16 %v155
  %v284 = vunpack.c.l.b16 %v156
  %v285 = vunpack.c.h.b16 %v156
  %v286 = vunpack.c.l.b16 %v157
  %v287 = vunpack.c.h.b16 %v157
  %v288 = vunpack.c.l.b16 %v158
  %v289 = vunpack.c.h.b16 %v158
  %v290 = vunpack.c.l.b16 %v159
  %v291 = vunpack.c.h.b16 %v159
  %v292 = vunpack.c.l.b16 %v160
  %v293 = vunpack.c.h.b16 %v160
  %v294 = vunpack.c.l.b16 %v161
  %v295 = vunpack.c.h.b16 %v161
  %v296 = vunpack.c.l.b16 %v162
  %v297 = vunpack.c.h.b16 %v162
  %v298 = vunpack.c.l.b16 %v163
  %v299 = vunpack.c.h.b16 %v163
  %v300 = vunpack.c.l.b16 %v164
  %v301 = vunpack.c.h.b16 %v164
  %v302 = vunpack.c.l.b16 %v165
  %v303 = vunpack.c.h.b16 %v165
  %v304 = vunpack.c.l.b16 %v166
  %v305 = vunpack.c.h.b16 %v166
  %v306 = vunpack.c.l.b16 %v167
  %v307 = vunpack.c.h.b16 %v167
  %v308 = vunpack.c.l.b16 %v168
  %v309 = vunpack.c.h.b16 %v168
  %v310 = vunpack.c.l.b16 %v169
  %v311 = vunpack.c.h.b16 %v169
  %v312 = vunpack.c.l.b16 %v170
  %v313 = vunpack.c.h.b16 %v170
  %v314 = vunpack.c.l.b16 %v171
  %v315 = vunpack.c.h.b16 %v171
  %v316 = vunpack.c.l.b16 %v172
  %v317 = vunpack.c.h.b16 %v172
  %v318 = vunpack.c.l.b16 %v173
  %v319 = vunpack.c.h.b16 %v173
  %v320 = vunpack.c.l.b16 %v174
  %v321 = vunpack.c.h.b16 %v174
  %v322 = vunpack.c.l.b16 %v175
  %v323 = vunpack.c.h.b16 %v175
  %v324 = vunpack.c.l.b16 %v176
  %v325 = vunpack.c.h.b16 %v176
  %v326 = vunpack.c.l.b16 %v177
  %v327 = vunpack.c.h.b16 %v177
  %v328 = vpack.c.b16 %v234, %v232
  %v329 = vpack.c.b16 %v235, %v233
  %v330 = vpack.c.b16 %v238, %v236
  %v331 = vpack.c.b16 %v239, %v237
  %v332 = vpack.c.b16 %v242, %v240
  %v333 = vpack.c.b16 %v243, %v241
  %v334 = vpack.c.b16 %v246, %v244
  %v335 = vpack.c.b16 %v247, %v245
  %v336 = vpack.c.b16 %v250, %v248
  %v337 = vpack.c.b16 %v251, %v249
  %v338 = vpack.c.b16 %v254, %v252
  %v339 = vpack.c.b16 %v255, %v253
  %v340 = vpack.c.b16 %v258, %v256
  %v341 = vpack.c.b16 %v259, %v257
  %v342 = vpack.c.b16 %v262, %v260
  %v343 = vpack.c.b16 %v263, %v261
  %v344 = vpack.c.b16 %v266, %v264
  %v345 = vpack.c.b16 %v267, %v265
  %v346 = vpack.c.b16 %v270, %v268
  %v347 = vpack.c.b16 %v271, %v269
  %v348 = vpack.c.b16 %v274, %v272
  %v349 = vpack.c.b16 %v275, %v273
  %v350 = vpack.c.b16 %v278, %v276
  %v351 = vpack.c.b16 %v279, %v277
  %v352 = vpack.c.b16 %v282, %v280
  %v353 = vpack.c.b16 %v283, %v281
  %v354 = vpack.c.b16 %v286, %v284
  %v355 = vpack.c.b16 %v287, %v285
  %v356 = vpack.c.b16 %v290, %v288
  %v357 = vpack.c.b16 %v291, %v289
  %v358 = vpack.c.b16 %v294, %v292
  %v359 = vpack.c.b16 %v295, %v293
  %v360 = vpack.c.b16 %v298, %v296
  %v361 = vpack.c.b16 %v299, %v297
  %v362 = vpack.c.b16 %v302, %v300
  %v363 = vpack.c.b16 %v303, %v301
  %v364 = vpack.c.b16 %v306, %v304
  %v365 = vpack.c.b16 %v307, %v305
  %v366 = vpack.c.b16 %v310, %v308
  %v367 = vpack.c.b16 %v311, %v309
  %v368 = vpack.c.b16 %v314, %v312
  %v369 = vpack.c.b16 %v315, %v313
  %v370 = vpack.c.b16 %v318, %v316
  %v371 = vpack.c.b16 %v319, %v317
  %v372 = vpack.c.b16 %v322, %v320
  %v373 = vpack.c.b16 %v323, %v321
  %v374 = vpack.c.b16 %v326, %v324
  %v375 = vpack.c.b16 %v327, %v325
  %424 = vmatpush.bf16.msra.mxu0 %v342
  %425 = vmatpush.bf16.msra.mxu0 %v340
  %426 = vmatpush.bf16.msra.mxu0 %v338
  %427 = vmatpush.bf16.msra.mxu0 %v336
  %428 = vmatpush.bf16.msra.mxu0 %v334
  %429 = vmatpush.bf16.msra.mxu0 %v332
  %430 = vmatpush.bf16.msra.mxu0 %v330
  %431 = vmatpush.bf16.msra.mxu0 %v328
  %432 = vmatmul.bf16.gmra.mxu0 %v127
  %v433 = vpop.f32.mrf.mxu0
  %v434 = vadd.f32 %v180, %v433
  %v435 = vpop.f32.mrf.mxu0
  %v436 = vadd.f32 %v180, %v435
  %437 = vdwg.mxu0
  %438 = vmatpush.bf16.msra.mxu0 %v358
  %439 = vmatpush.bf16.msra.mxu0 %v356
  %440 = vmatpush.bf16.msra.mxu0 %v354
  %441 = vmatpush.bf16.msra.mxu0 %v352
  %442 = vmatpush.bf16.msra.mxu0 %v350
  %443 = vmatpush.bf16.msra.mxu0 %v348
  %444 = vmatpush.bf16.msra.mxu0 %v346
  %445 = vmatpush.bf16.msra.mxu0 %v344
  %446 = vmatmul.bf16.gmra.mxu0 %v128
  %v447 = vpop.f32.mrf.mxu0
  %v448 = vadd.f32 %v434, %v447
  %v449 = vpop.f32.mrf.mxu0
  %v450 = vadd.f32 %v436, %v449
  %451 = vdwg.mxu0
  %452 = vmatpush.bf16.msra.mxu0 %v374
  %453 = vmatpush.bf16.msra.mxu0 %v372
  %454 = vmatpush.bf16.msra.mxu0 %v370
  %455 = vmatpush.bf16.msra.mxu0 %v368
  %456 = vmatpush.bf16.msra.mxu0 %v366
  %457 = vmatpush.bf16.msra.mxu0 %v364
  %458 = vmatpush.bf16.msra.mxu0 %v362
  %459 = vmatpush.bf16.msra.mxu0 %v360
  %460 = vmatmul.bf16.gmra.mxu0 %v129
  %v461 = vpop.f32.mrf.mxu0
  %v462 = vadd.f32 %v448, %v461
  %v463 = vpop.f32.mrf.mxu0
  %v464 = vadd.f32 %v450, %v463
  %465 = vdwg.mxu0
  %466 = vmatpush.bf16.msra.mxu0 %v343
  %467 = vmatpush.bf16.msra.mxu0 %v341
  %468 = vmatpush.bf16.msra.mxu0 %v339
  %469 = vmatpush.bf16.msra.mxu0 %v337
  %470 = vmatpush.bf16.msra.mxu0 %v335
  %471 = vmatpush.bf16.msra.mxu0 %v333
  %472 = vmatpush.bf16.msra.mxu0 %v331
  %473 = vmatpush.bf16.msra.mxu0 %v329
  %474 = vmatmul.bf16.gmra.mxu0 %v127
  %v475 = vpop.f32.mrf.mxu0
  %v476 = vadd.f32 %v181, %v475
  %v477 = vpop.f32.mrf.mxu0
  %v478 = vadd.f32 %v181, %v477
  %479 = vdwg.mxu0
  %480 = vmatpush.bf16.msra.mxu0 %v359
  %481 = vmatpush.bf16.msra.mxu0 %v357
  %482 = vmatpush.bf16.msra.mxu0 %v355
  %483 = vmatpush.bf16.msra.mxu0 %v353
  %484 = vmatpush.bf16.msra.mxu0 %v351
  %485 = vmatpush.bf16.msra.mxu0 %v349
  %486 = vmatpush.bf16.msra.mxu0 %v347
  %487 = vmatpush.bf16.msra.mxu0 %v345
  %488 = vmatmul.bf16.gmra.mxu0 %v128
  %v489 = vpop.f32.mrf.mxu0
  %v490 = vadd.f32 %v476, %v489
  %v491 = vpop.f32.mrf.mxu0
  %v492 = vadd.f32 %v478, %v491
  %493 = vdwg.mxu0
  %494 = vmatpush.bf16.msra.mxu0 %v375
  %495 = vmatpush.bf16.msra.mxu0 %v373
  %496 = vmatpush.bf16.msra.mxu0 %v371
  %497 = vmatpush.bf16.msra.mxu0 %v369
  %498 = vmatpush.bf16.msra.mxu0 %v367
  %499 = vmatpush.bf16.msra.mxu0 %v365
  %500 = vmatpush.bf16.msra.mxu0 %v363
  %501 = vmatpush.bf16.msra.mxu0 %v361
  %502 = vmatmul.bf16.gmra.mxu0 %v129
  %v503 = vpop.f32.mrf.mxu0
  %v504 = vadd.f32 %v490, %v503
  %v505 = vpop.f32.mrf.mxu0
  %v506 = vadd.f32 %v492, %v505
  %507 = vdwg.mxu0
  %v508 = vlaneseq
  %v509 = vand.u32 %v508, 127
  %v510 = vadd.s32 %v509, 128
  %vm511 = vcmp.lt.s32.totalorder %v509, 32
  %vm512 = vcmp.lt.s32.totalorder %v510, 32
  %v513 = vsel %vm511, 1, 0
  %v514 = vsel %vm512, 1, 0
  %vm515 = vcmp.eq.s32.totalorder %v513, 1
  %vm516 = vcmp.eq.s32.totalorder %v514, 1
  %v517 = vsel %vm515, %v462, 0.0
  %v518 = vsel %vm516, %v504, 0.0
  %v519 = vsel %vm515, %v464, 0.0
  %v520 = vsel %vm516, %v506, 0.0
  %v521 = vadd.f32 %v517, %v518
  %522 = vadd.xlane.f32.xlu0 %v521
  %v523 = vpop.xlane.xlu0 %522
  %v524 = vadd.f32 %v519, %v520
  %525 = vadd.xlane.f32.xlu0 %v524
  %v526 = vpop.xlane.xlu0 %525
  %v527 = vmul.f32 %v523, 0.03125
  %v528 = vmul.f32 %v526, 0.03125
  %v529 = vsub.f32 %v517, %v527
  %v530 = vsub.f32 %v518, %v527
  %v531 = vsub.f32 %v519, %v528
  %v532 = vsub.f32 %v520, %v528
  %v533 = vsel %vm515, %v529, 0.0
  %v534 = vsel %vm516, %v530, 0.0
  %v535 = vsel %vm515, %v531, 0.0
  %v536 = vsel %vm516, %v532, 0.0
  %v537 = vmul.f32 %v533, %v533
  %v538 = vmul.f32 %v534, %v534
  %v539 = vmul.f32 %v535, %v535
  %v540 = vmul.f32 %v536, %v536
  %v541 = vadd.f32 %v537, %v538
  %542 = vadd.xlane.f32.xlu0 %v541
  %v543 = vpop.xlane.xlu0 %542
  %v544 = vadd.f32 %v539, %v540
  %545 = vadd.xlane.f32.xlu0 %v544
  %v546 = vpop.xlane.xlu0 %545
  %v547 = vmul.f32 %v543, 0.03125
  %v548 = vmul.f32 %v546, 0.03125
  %v549 = vadd.f32 %v547, 1e-05
  %v550 = vadd.f32 %v548, 1e-05
  %v551 = vrsqrt.pop %v549
  %v552 = vmul.f32 %v551, %v549
  %v553 = vmul.f32 %v552, %v551
  %v554 = vmul.f32 0.5, %v553
  %v555 = vsub.f32 1.5, %v554
  %v556 = vmul.f32 %v551, %v555
  %vm557 = vweird.f32 %v549
  %vm558 = vweird.f32 %v551
  %vm559 = vmor %vm557, %vm558
  %v560 = vsel %vm559, %v551, %v556
  %v561 = vrsqrt.pop %v550
  %v562 = vmul.f32 %v561, %v550
  %v563 = vmul.f32 %v562, %v561
  %v564 = vmul.f32 0.5, %v563
  %v565 = vsub.f32 1.5, %v564
  %v566 = vmul.f32 %v561, %v565
  %vm567 = vweird.f32 %v550
  %vm568 = vweird.f32 %v561
  %vm569 = vmor %vm567, %vm568
  %v570 = vsel %vm569, %v561, %v566
  %v571 = vmul.f32 %v533, %v560
  %v572 = vmul.f32 %v534, %v560
  %v573 = vmul.f32 %v535, %v570
  %v574 = vmul.f32 %v536, %v570
  %v575 = vld [vmem:[%s5] sm:$0x3]
  %v577 = vperm.slane %v575, 0
  %v578 = vperm.slane %v575, 1
  %v581 = vmul.f32 %v571, %v577
  %v582 = vmul.f32 %v572, %v578
  %v583 = vmul.f32 %v573, %v577
  %v584 = vmul.f32 %v574, %v578
  %v585 = vld [vmem:[%s6] sm:$0x3]
  %v587 = vperm.slane %v585, 0
  %v588 = vperm.slane %v585, 1
  %v591 = vadd.f32 %v581, %v587
  %v592 = vadd.f32 %v582, %v588
  %v593 = vadd.f32 %v583, %v587
  %v594 = vadd.f32 %v584, %v588
  %v595 = vpack.c.bf16 %v592, %v591
  %v596 = vpack.c.bf16 %v594, %v593
  %597 = vst [vmem:[%s7] sm:$0xff] %v595
  %598 = vst [vmem:[%s7 + $0x8] sm:$0xff] %v596
  // Predicated region
  $region30: #{vit_forward.12} parent=0 // pred_check
    _
  $region31: #{vit_forward.12} parent=0 // pred_check_branch
    %600 = sbr.rel (0) target = $region33
  $region32: #{vit_forward.12} parent=0 // pred_region
    _
  $region33: #{vit_forward.12} parent=0 // pred_fallthru
    _
  // Predicated region
  $region34: #{vit_forward.12} parent=0 // pred_check
    _
  $region35: #{vit_forward.12} parent=0 // pred_check_branch
    %602 = sbr.rel (0) target = $region37
  $region36: #{vit_forward.12} parent=0 // pred_region
    _
  $region37: #{vit_forward.12} parent=0 // pred_fallthru
    _

// kernel: vit_forward.13
$region0: #{vit_forward.13}
  #allocation0 [shape = 'u32[]', space=smem, size = 0x4, offset = 0x4, fixed_abs, tag = 'smem constant byte address 0x4 - core index']
  #allocation1 [shape = 'u32[72,128]{1,0:T(1,128)}', space=vmem, size = 0x9000, scoped, tag = 'internal scratch']
  %s0 = inlined_call_operand.vmem [shape: bf16[32,32], index: 0, kind: input, shape index: {}]
  %s1 = inlined_call_operand.vmem [shape: f32[1,32], index: 1, kind: input, shape index: {}]
  %s2 = inlined_call_operand.vmem [shape: f32[1,32], index: 2, kind: input, shape index: {}]
  %s3 = inlined_call_operand.vmem [shape: bf16[32,256], index: 3, kind: input, shape index: {}]
  %s4 = inlined_call_operand.vmem [shape: bf16[32,256], index: 4, kind: output, shape index: {}]
  %s5 = sld [smem:[#allocation0]]
  $region49: #{vit_forward.13} parent=0
    _
  %s7 = ssub.s32 1, %s5
  %s8 = scalar_select 0, %s7, %s5
  loop: start=0, step=1, limit=4
  $region2: #{vit_forward.13} parent=0 // loop_pre_header
    _
  $region3: #{vit_forward.13} parent=0 // loop_header
    %s10 = sphi 0, %s14
    %p11 = scmp.ge.s32.totalorder %s10, 4
    %s20 = sphi 0, %s22
    %s23 = sphi 0, %s20
    %s24 = sphi 0, %s23
    %s40 = sphi 0, %s24
    %s44 = sphi 0, %s44
    %s46 = sphi 0, %s44
    %s47 = sphi 0, %s46
    %s61 = sphi 0, %s47
    %s65 = sphi 0, %s65
    %s67 = sphi 0, %s65
    %s68 = sphi 0, %s67
    %s82 = sphi 0, %s68
    %s86 = sphi 0, %s86
    %s88 = sphi 0, %s86
    %s89 = sphi 0, %s88
    %s103 = sphi 0, %s89
    %s109 = sphi 0, %s111
    %s112 = sphi 0, %s109
    %s113 = sphi 0, %s112
    %s129 = sphi 0, %s113
  $region4: #{vit_forward.13} parent=0 // loop_header_branch
    %13 = sbr.rel (%p11) target = $region8
  $region5: #{vit_forward.13} parent=0 // loop_body
    %s15 = ssub.s32 %s10, 1
    %s16 = ssub.s32 %s10, 2
    %s17 = sadd.s32 %s10, 1
    %s18 = ssub.s32 %s10, %s17
    %p19 = scmp.eq.s32.totalorder %s18, 0
    %s21 = sadd.s32 %s20, 1
    %s22 = scalar_select %p19, %s20, %s21
    %p25 = pneg %p19
    %p26 = scmp.eq.s32.totalorder %s10, 1
    %p27 = por %p25, %p26
    %p28 = scmp.ne.s32.totalorder %s20, %s23
    %p29 = scmp.eq.s32.totalorder %s10, 0
    %p30 = por %p28, %p29
    %p31 = scmp.ne.s32.totalorder %s20, %s23
    %p32 = scmp.eq.s32.totalorder %s15, 1
    %p33 = por %p31, %p32
    %p34 = scmp.ne.s32.totalorder %s23, %s24
    %p35 = scmp.eq.s32.totalorder %s15, 0
    %p36 = por %p34, %p35
    %p37 = scmp.ne.s32.totalorder %s23, %s24
    %p38 = scmp.eq.s32.totalorder %s16, 1
    %p39 = por %p37, %p38
    %p41 = scmp.ne.s32.totalorder %s24, %s40
    %p42 = scmp.eq.s32.totalorder %s16, 0
    %p43 = por %p41, %p42
    %s45 = sadd.s32 %s44, 1
    %p48 = scmp.eq.s32.totalorder %s10, 1
    %p49 = scmp.ne.s32.totalorder %s44, %s46
    %p50 = scmp.eq.s32.totalorder %s10, 0
    %p51 = por %p49, %p50
    %p52 = scmp.ne.s32.totalorder %s44, %s46
    %p53 = scmp.eq.s32.totalorder %s15, 1
    %p54 = por %p52, %p53
    %p55 = scmp.ne.s32.totalorder %s46, %s47
    %p56 = scmp.eq.s32.totalorder %s15, 0
    %p57 = por %p55, %p56
    %p58 = scmp.ne.s32.totalorder %s46, %s47
    %p59 = scmp.eq.s32.totalorder %s16, 1
    %p60 = por %p58, %p59
    %p62 = scmp.ne.s32.totalorder %s47, %s61
    %p63 = scmp.eq.s32.totalorder %s16, 0
    %p64 = por %p62, %p63
    %s66 = sadd.s32 %s65, 1
    %p69 = scmp.eq.s32.totalorder %s10, 1
    %p70 = scmp.ne.s32.totalorder %s65, %s67
    %p71 = scmp.eq.s32.totalorder %s10, 0
    %p72 = por %p70, %p71
    %p73 = scmp.ne.s32.totalorder %s65, %s67
    %p74 = scmp.eq.s32.totalorder %s15, 1
    %p75 = por %p73, %p74
    %p76 = scmp.ne.s32.totalorder %s67, %s68
    %p77 = scmp.eq.s32.totalorder %s15, 0
    %p78 = por %p76, %p77
    %p79 = scmp.ne.s32.totalorder %s67, %s68
    %p80 = scmp.eq.s32.totalorder %s16, 1
    %p81 = por %p79, %p80
    %p83 = scmp.ne.s32.totalorder %s68, %s82
    %p84 = scmp.eq.s32.totalorder %s16, 0
    %p85 = por %p83, %p84
    %s87 = sadd.s32 %s86, 1
    %p90 = scmp.eq.s32.totalorder %s10, 1
    %p91 = scmp.ne.s32.totalorder %s86, %s88
    %p92 = scmp.eq.s32.totalorder %s10, 0
    %p93 = por %p91, %p92
    %p94 = scmp.ne.s32.totalorder %s86, %s88
    %p95 = scmp.eq.s32.totalorder %s15, 1
    %p96 = por %p94, %p95
    %p97 = scmp.ne.s32.totalorder %s88, %s89
    %p98 = scmp.eq.s32.totalorder %s15, 0
    %p99 = por %p97, %p98
    %p100 = scmp.ne.s32.totalorder %s88, %s89
    %p101 = scmp.eq.s32.totalorder %s16, 1
    %p102 = por %p100, %p101
    %p104 = scmp.ne.s32.totalorder %s89, %s103
    %p105 = scmp.eq.s32.totalorder %s16, 0
    %p106 = por %p104, %p105
    %s107 = ssub.s32 %s10, %s17
    %p108 = scmp.eq.s32.totalorder %s107, 0
    %s110 = sadd.s32 %s109, 1
    %s111 = scalar_select %p108, %s109, %s110
    %p114 = pneg %p108
    %p115 = scmp.eq.s32.totalorder %s10, 1
    %p116 = por %p114, %p115
    %p117 = scmp.ne.s32.totalorder %s109, %s112
    %p118 = scmp.eq.s32.totalorder %s10, 0
    %p119 = por %p117, %p118
    %p120 = scmp.ne.s32.totalorder %s109, %s112
    %p121 = scmp.eq.s32.totalorder %s15, 1
    %p122 = por %p120, %p121
    %p123 = scmp.ne.s32.totalorder %s112, %s113
    %p124 = scmp.eq.s32.totalorder %s15, 0
    %p125 = por %p123, %p124
    %p126 = scmp.ne.s32.totalorder %s112, %s113
    %p127 = scmp.eq.s32.totalorder %s16, 1
    %p128 = por %p126, %p127
    %p130 = scmp.ne.s32.totalorder %s113, %s129
    %p131 = scmp.eq.s32.totalorder %s16, 0
    %p132 = por %p130, %p131
    %p133 = scmp.le.s32.totalorder 1, %s10
    %p134 = scmp.lt.s32.totalorder %s10, 3
    %p135 = pnand %p133, %p134
    %p136 = pneg %p135
    // Predicated region
    $region9: #{vit_forward.13} parent=5 // pred_check
      _
    $region10: #{vit_forward.13} parent=5 // pred_check_branch
      %138 = sbr.rel (%p135) target = $region12
    $region11: #{vit_forward.13} parent=5 // pred_region
      %s139 = ssub.s32 %s10, 1
      // Predicated region
      $region13: #{vit_forward.13} parent=11 // pred_check
        %p140 = pneg %p57
      $region14: #{vit_forward.13} parent=11 // pred_check_branch
        %142 = sbr.rel (%p140) target = $region16
      $region15: #{vit_forward.13} parent=11 // pred_region
        _
      $region16: #{vit_forward.13} parent=11 // pred_fallthru
        _
      // Predicated region
      $region17: #{vit_forward.13} parent=11 // pred_check
        %p143 = pneg %p78
      $region18: #{vit_forward.13} parent=11 // pred_check_branch
        %145 = sbr.rel (%p143) target = $region20
      $region19: #{vit_forward.13} parent=11 // pred_region
        _
      $region20: #{vit_forward.13} parent=11 // pred_fallthru
        _
      // Predicated region
      $region21: #{vit_forward.13} parent=11 // pred_check
        %p146 = pneg %p99
      $region22: #{vit_forward.13} parent=11 // pred_check_branch
        %148 = sbr.rel (%p146) target = $region24
      $region23: #{vit_forward.13} parent=11 // pred_region
        _
      $region24: #{vit_forward.13} parent=11 // pred_fallthru
        _
    $region12: #{vit_forward.13} parent=5 // pred_fallthru
      _
    %p149 = scmp.lt.s32.totalorder %s10, 2
    // Predicated region
    $region25: #{vit_forward.13} parent=5 // pred_check
      %p150 = pneg %p149
    $region26: #{vit_forward.13} parent=5 // pred_check_branch
      %152 = sbr.rel (%p150) target = $region28
    $region27: #{vit_forward.13} parent=5 // pred_region
      // Predicated region
      $region29: #{vit_forward.13} parent=27 // pred_check
        %p153 = pneg %p30
      $region30: #{vit_forward.13} parent=27 // pred_check_branch
        %155 = sbr.rel (%p153) target = $region32
      $region31: #{vit_forward.13} parent=27 // pred_region
        %s156 = smul.u32 2, %s10
        %p157 = scmp.lt.s32.totalorder %s156, 3
        %s158 = scalar_select %p157, %s156, 3
        %s159 = smul.addr %s158, 4
        %s160 = scalar_lea.vmem %s0, %s159
        %s161 = smul.u32 2, %s10
      $region32: #{vit_forward.13} parent=27 // pred_fallthru
        _
    $region28: #{vit_forward.13} parent=5 // pred_fallthru
      _
    %p162 = scmp.le.s32.totalorder 1, %s10
    %p163 = scmp.lt.s32.totalorder %s10, 3
    %p164 = pnand %p162, %p163
    %p165 = pneg %p164
    // Predicated region
    $region33: #{vit_forward.13} parent=5 // pred_check
      _
    $region34: #{vit_forward.13} parent=5 // pred_check_branch
      %167 = sbr.rel (%p164) target = $region36
    $region35: #{vit_forward.13} parent=5 // pred_region
      %s168 = ssub.s32 %s10, 1
      %s169 = smul.u32 2, %s15
      %p170 = scmp.lt.s32.totalorder %s169, 3
      %s171 = scalar_select %p170, %s169, 3
      %s172 = smul.addr %s171, 4
      %s173 = scalar_lea.vmem %s0, %s172
      %p174 = pneg %p36
      %p175 = pneg %p33
      %p176 = pneg %p57
      %p177 = pneg %p54
      %p178 = pneg %p78
      %p179 = pneg %p75
      %p180 = pneg %p99
      %p181 = pneg %p96
      %p182 = pneg %p125
      %p183 = pneg %p122
      %s184 = smul.u32 2, %s15
      %p185 = scmp.lt.s32.totalorder %s184, 3
      %s186 = scalar_select %p185, %s184, 3
      %s187 = smul.addr %s186, 2
      %s188 = smul.addr %s187, 4
      %s189 = scalar_lea.vmem %s4, %s188
      %s190 = smul.u32 2, %s15
      %p191 = scmp.lt.s32.totalorder %s190, 3
      %s192 = scalar_select %p191, %s190, 3
      %s193 = smul.addr %s192, 4
      %s194 = scalar_lea.vmem %s0, %s193
      %s195 = smul.u32 2, %s15
      %s196 = smul.u32 2, %s15
      %p197 = scmp.lt.s32.totalorder %s196, 3
      %s198 = scalar_select %p197, %s196, 3
      %s199 = smul.addr %s198, 2
      %s200 = smul.addr %s199, 4
      %s201 = scalar_lea.vmem %s4, %s200
      %s202 = smul.u32 2, %s15
      %v204 = vld [vmem:[%s194] sm:$0xf]
      %v205 = vld [vmem:[%s194 + $0x4] sm:$0xf]
      %v206 = vunpack.c.l.bf16 %v204
      %v207 = vunpack.c.l.bf16 %v205
      %vm208 = vcmask 261120
      %v209 = vsel %vm208, %v206, 0.0
      %210 = vadd.xlane.f32.xlu0 %v209
      %v211 = vpop.xlane.xlu0 %210
      %v212 = vsel %vm208, %v207, 0.0
      %213 = vadd.xlane.f32.xlu0 %v212
      %v214 = vpop.xlane.xlu0 %213
      %v215 = vrcp.pop 32.0
      %v216 = vmul.f32 32.0, %v215
      %v217 = vsub.f32 1.0, %v216
      %v218 = vmul.f32 %v215, %v217
      %v219 = vadd.f32 %v215, %v218
      %vm220 = vweird.f32 %v215
      %v221 = vsel %vm220, %v215, %v219
      %v222 = vmul.f32 %v211, %v221
      %v223 = vmul.f32 %v214, %v221
      %v224 = vsub.f32 %v206, %v222
      %v225 = vsub.f32 %v207, %v223
      %v226 = vmul.f32 %v224, %v224
      %v227 = vmul.f32 %v225, %v225
      %v228 = vsel %vm208, %v226, 0.0
      %229 = vadd.xlane.f32.xlu0 %v228
      %v230 = vpop.xlane.xlu0 %229
      %v231 = vsel %vm208, %v227, 0.0
      %232 = vadd.xlane.f32.xlu0 %v231
      %v233 = vpop.xlane.xlu0 %232
      %v234 = vmul.f32 %v230, %v221
      %v235 = vmul.f32 %v233, %v221
      %v236 = vadd.f32 %v234, 1e-05
      %v237 = vadd.f32 %v235, 1e-05
      %v238 = vrsqrt.pop %v236
      %v239 = vmul.f32 %v238, %v236
      %v240 = vmul.f32 %v239, %v238
      %v241 = vmul.f32 0.5, %v240
      %v242 = vsub.f32 1.5, %v241
      %v243 = vmul.f32 %v238, %v242
      %vm244 = vweird.f32 %v236
      %vm245 = vweird.f32 %v238
      %vm246 = vmor %vm244, %vm245
      %v247 = vsel %vm246, %v238, %v243
      %v248 = vrsqrt.pop %v237
      %v249 = vmul.f32 %v248, %v237
      %v250 = vmul.f32 %v249, %v248
      %v251 = vmul.f32 0.5, %v250
      %v252 = vsub.f32 1.5, %v251
      %v253 = vmul.f32 %v248, %v252
      %vm254 = vweird.f32 %v237
      %vm255 = vweird.f32 %v248
      %vm256 = vmor %vm254, %vm255
      %v257 = vsel %vm256, %v248, %v253
      %v258 = vmul.f32 %v224, %v247
      %v259 = vmul.f32 %v225, %v257
      %v260 = vld [vmem:[%s1] sm:$0x1]
      %v262 = vperm.slane %v260, 0
      %v264 = vmul.f32 %v258, %v262
      %v265 = vmul.f32 %v259, %v262
      %v266 = vld [vmem:[%s2] sm:$0x1]
      %v268 = vperm.slane %v266, 0
      %v270 = vadd.f32 %v264, %v268
      %v271 = vadd.f32 %v265, %v268
      %v272 = vpack.c.bf16 %v271, %v270
      %v273 = vld [vmem:[%s3] sm:$0xff]
      %v274 = vld [vmem:[%s3 + $0x8] sm:$0xff]
      %v275 = vld [vmem:[%s3 + $0x10] sm:$0xff]
      %v276 = vld [vmem:[%s3 + $0x18] sm:$0xff]
      %v281 = vunpack.c.l.b16 %v273
      %v282 = vunpack.c.h.b16 %v273
      %v283 = vunpack.c.l.b16 %v274
      %v284 = vunpack.c.h.b16 %v274
      %v285 = vunpack.c.l.b16 %v275
      %v286 = vunpack.c.h.b16 %v275
      %v287 = vunpack.c.l.b16 %v276
      %v288 = vunpack.c.h.b16 %v276
      %v289 = vpack.c.b16 %v283, %v281
      %v290 = vpack.c.b16 %v284, %v282
      %v291 = vpack.c.b16 %v287, %v285
      %v292 = vpack.c.b16 %v288, %v286
      %v298 = vsel %vm208, %v272, 0
      %300 = vmatpush.bf16.msra.mxu0 0
      %301 = vmatpush.bf16.msra.mxu0 0
      %302 = vmatpush.bf16.msra.mxu0 0
      %303 = vmatpush.bf16.msra.mxu0 0
      %304 = vmatpush.bf16.msra.mxu0 0
      %305 = vmatpush.bf16.msra.mxu0 0
      %306 = vmatpush.bf16.msra.mxu0 %v291
      %307 = vmatpush.bf16.msra.mxu0 %v289
      %308 = vmatmul.bf16.gmra.mxu0 %v298
      %v309 = vpop.f32.mrf.mxu0
      %v310 = vadd.f32 0.0, %v309
      %v311 = vpop.f32.mrf.mxu0
      %v312 = vadd.f32 0.0, %v311
      %313 = vdwg.mxu0
      %314 = vmatpush.bf16.msra.mxu0 0
      %315 = vmatpush.bf16.msra.mxu0 0
      %316 = vmatpush.bf16.msra.mxu0 0
      %317 = vmatpush.bf16.msra.mxu0 0
      %318 = vmatpush.bf16.msra.mxu0 0
      %319 = vmatpush.bf16.msra.mxu0 0
      %320 = vmatpush.bf16.msra.mxu0 %v292
      %321 = vmatpush.bf16.msra.mxu0 %v290
      %322 = vmatmul.bf16.gmra.mxu0 %v298
      %v323 = vpop.f32.mrf.mxu0
      %v324 = vadd.f32 0.0, %v323
      %v325 = vpop.f32.mrf.mxu0
      %v326 = vadd.f32 0.0, %v325
      %327 = vdwg.mxu0
      %v328 = vpack.c.bf16 %v324, %v310
      %v329 = vpack.c.bf16 %v326, %v312
      %330 = vst [vmem:[%s201] sm:$0xff] %v328
      %331 = vst [vmem:[%s201 + $0x8] sm:$0xff] %v329
      %s332 = smul.u32 2, %s15
      %p333 = scmp.lt.s32.totalorder %s332, 3
      %s334 = scalar_select %p333, %s332, 3
      %s335 = smul.addr %s334, 2
      %s336 = smul.addr %s335, 4
      %s337 = scalar_lea.vmem %s4, %s336
      // Predicated region
      $region37: #{vit_forward.13} parent=35 // pred_check
        %p338 = pneg %p122
      $region38: #{vit_forward.13} parent=35 // pred_check_branch
        %340 = sbr.rel (%p338) target = $region40
      $region39: #{vit_forward.13} parent=35 // pred_region
        %s341 = smul.u32 2, %s15
      $region40: #{vit_forward.13} parent=35 // pred_fallthru
        _
    $region36: #{vit_forward.13} parent=5 // pred_fallthru
      _
    %p342 = scmp.le.s32.totalorder 2, %s10
    // Predicated region
    $region41: #{vit_forward.13} parent=5 // pred_check
      %p343 = pneg %p342
    $region42: #{vit_forward.13} parent=5 // pred_check_branch
      %345 = sbr.rel (%p343) target = $region44
    $region43: #{vit_forward.13} parent=5 // pred_region
      %s346 = ssub.s32 %s10, 2
      // Predicated region
      $region45: #{vit_forward.13} parent=43 // pred_check
        %p347 = pneg %p128
      $region46: #{vit_forward.13} parent=43 // pred_check_branch
        %349 = sbr.rel (%p347) target = $region48
      $region47: #{vit_forward.13} parent=43 // pred_region
        %s350 = smul.u32 2, %s16
        %p351 = scmp.lt.s32.totalorder %s350, 3
        %s352 = scalar_select %p351, %s350, 3
        %s353 = smul.addr %s352, 2
        %s354 = smul.addr %s353, 4
        %s355 = scalar_lea.vmem %s4, %s354
      $region48: #{vit_forward.13} parent=43 // pred_fallthru
        _
    $region44: #{vit_forward.13} parent=5 // pred_fallthru
      _
  $region6: #{vit_forward.13} parent=0 // loop_footer
    %s14 = sadd.s32 1, %s10
  $region7: #{vit_forward.13} parent=0 // loop_footer_branch
    %9 = sbr.rel target = $region3
  $region8: #{vit_forward.13} parent=0 // loop_exit
    _

// kernel: vit_forward.15
$region0: #{vit_forward.15}
  #allocation0 [shape = 'u32[]', space=smem, size = 0x4, offset = 0x4, fixed_abs, tag = 'smem constant byte address 0x4 - core index']
  #allocation1 [shape = 'u32[72,128]{1,0:T(1,128)}', space=vmem, size = 0x9000, scoped, tag = 'internal scratch']
  %s0 = inlined_call_operand.vmem [shape: bf16[32,32], index: 0, kind: input, shape index: {}]
  %s1 = inlined_call_operand.vmem [shape: bf16[32,256], index: 1, kind: input, shape index: {}]
  %s2 = inlined_call_operand.vmem [shape: f32[1,256], index: 2, kind: input, shape index: {}]
  %s3 = inlined_call_operand.vmem [shape: bf16[32,32], index: 3, kind: input, shape index: {}]
  %s4 = inlined_call_operand.vmem [shape: bf16[32,256], index: 4, kind: output, shape index: {}]
  %s5 = sld [smem:[#allocation0]]
  $region49: #{vit_forward.15} parent=0
    _
  %s7 = ssub.s32 1, %s5
  %s8 = scalar_select 0, %s7, %s5
  loop: start=0, step=1, limit=4
  $region2: #{vit_forward.15} parent=0 // loop_pre_header
    _
  $region3: #{vit_forward.15} parent=0 // loop_header
    %s10 = sphi 0, %s14
    %p11 = scmp.ge.s32.totalorder %s10, 4
    %s20 = sphi 0, %s22
    %s23 = sphi 0, %s20
    %s24 = sphi 0, %s23
    %s40 = sphi 0, %s24
    %s44 = sphi 0, %s44
    %s46 = sphi 0, %s44
    %s47 = sphi 0, %s46
    %s61 = sphi 0, %s47
    %s65 = sphi 0, %s65
    %s67 = sphi 0, %s65
    %s68 = sphi 0, %s67
    %s82 = sphi 0, %s68
    %s88 = sphi 0, %s90
    %s91 = sphi 0, %s88
    %s92 = sphi 0, %s91
    %s108 = sphi 0, %s92
    %s114 = sphi 0, %s116
    %s117 = sphi 0, %s114
    %s118 = sphi 0, %s117
    %s134 = sphi 0, %s118
  $region4: #{vit_forward.15} parent=0 // loop_header_branch
    %13 = sbr.rel (%p11) target = $region8
  $region5: #{vit_forward.15} parent=0 // loop_body
    %s15 = ssub.s32 %s10, 1
    %s16 = ssub.s32 %s10, 2
    %s17 = sadd.s32 %s10, 1
    %s18 = ssub.s32 %s10, %s17
    %p19 = scmp.eq.s32.totalorder %s18, 0
    %s21 = sadd.s32 %s20, 1
    %s22 = scalar_select %p19, %s20, %s21
    %p25 = pneg %p19
    %p26 = scmp.eq.s32.totalorder %s10, 1
    %p27 = por %p25, %p26
    %p28 = scmp.ne.s32.totalorder %s20, %s23
    %p29 = scmp.eq.s32.totalorder %s10, 0
    %p30 = por %p28, %p29
    %p31 = scmp.ne.s32.totalorder %s20, %s23
    %p32 = scmp.eq.s32.totalorder %s15, 1
    %p33 = por %p31, %p32
    %p34 = scmp.ne.s32.totalorder %s23, %s24
    %p35 = scmp.eq.s32.totalorder %s15, 0
    %p36 = por %p34, %p35
    %p37 = scmp.ne.s32.totalorder %s23, %s24
    %p38 = scmp.eq.s32.totalorder %s16, 1
    %p39 = por %p37, %p38
    %p41 = scmp.ne.s32.totalorder %s24, %s40
    %p42 = scmp.eq.s32.totalorder %s16, 0
    %p43 = por %p41, %p42
    %s45 = sadd.s32 %s44, 1
    %p48 = scmp.eq.s32.totalorder %s10, 1
    %p49 = scmp.ne.s32.totalorder %s44, %s46
    %p50 = scmp.eq.s32.totalorder %s10, 0
    %p51 = por %p49, %p50
    %p52 = scmp.ne.s32.totalorder %s44, %s46
    %p53 = scmp.eq.s32.totalorder %s15, 1
    %p54 = por %p52, %p53
    %p55 = scmp.ne.s32.totalorder %s46, %s47
    %p56 = scmp.eq.s32.totalorder %s15, 0
    %p57 = por %p55, %p56
    %p58 = scmp.ne.s32.totalorder %s46, %s47
    %p59 = scmp.eq.s32.totalorder %s16, 1
    %p60 = por %p58, %p59
    %p62 = scmp.ne.s32.totalorder %s47, %s61
    %p63 = scmp.eq.s32.totalorder %s16, 0
    %p64 = por %p62, %p63
    %s66 = sadd.s32 %s65, 1
    %p69 = scmp.eq.s32.totalorder %s10, 1
    %p70 = scmp.ne.s32.totalorder %s65, %s67
    %p71 = scmp.eq.s32.totalorder %s10, 0
    %p72 = por %p70, %p71
    %p73 = scmp.ne.s32.totalorder %s65, %s67
    %p74 = scmp.eq.s32.totalorder %s15, 1
    %p75 = por %p73, %p74
    %p76 = scmp.ne.s32.totalorder %s67, %s68
    %p77 = scmp.eq.s32.totalorder %s15, 0
    %p78 = por %p76, %p77
    %p79 = scmp.ne.s32.totalorder %s67, %s68
    %p80 = scmp.eq.s32.totalorder %s16, 1
    %p81 = por %p79, %p80
    %p83 = scmp.ne.s32.totalorder %s68, %s82
    %p84 = scmp.eq.s32.totalorder %s16, 0
    %p85 = por %p83, %p84
    %s86 = ssub.s32 %s10, %s17
    %p87 = scmp.eq.s32.totalorder %s86, 0
    %s89 = sadd.s32 %s88, 1
    %s90 = scalar_select %p87, %s88, %s89
    %p93 = pneg %p87
    %p94 = scmp.eq.s32.totalorder %s10, 1
    %p95 = por %p93, %p94
    %p96 = scmp.ne.s32.totalorder %s88, %s91
    %p97 = scmp.eq.s32.totalorder %s10, 0
    %p98 = por %p96, %p97
    %p99 = scmp.ne.s32.totalorder %s88, %s91
    %p100 = scmp.eq.s32.totalorder %s15, 1
    %p101 = por %p99, %p100
    %p102 = scmp.ne.s32.totalorder %s91, %s92
    %p103 = scmp.eq.s32.totalorder %s15, 0
    %p104 = por %p102, %p103
    %p105 = scmp.ne.s32.totalorder %s91, %s92
    %p106 = scmp.eq.s32.totalorder %s16, 1
    %p107 = por %p105, %p106
    %p109 = scmp.ne.s32.totalorder %s92, %s108
    %p110 = scmp.eq.s32.totalorder %s16, 0
    %p111 = por %p109, %p110
    %s112 = ssub.s32 %s10, %s17
    %p113 = scmp.eq.s32.totalorder %s112, 0
    %s115 = sadd.s32 %s114, 1
    %s116 = scalar_select %p113, %s114, %s115
    %p119 = pneg %p113
    %p120 = scmp.eq.s32.totalorder %s10, 1
    %p121 = por %p119, %p120
    %p122 = scmp.ne.s32.totalorder %s114, %s117
    %p123 = scmp.eq.s32.totalorder %s10, 0
    %p124 = por %p122, %p123
    %p125 = scmp.ne.s32.totalorder %s114, %s117
    %p126 = scmp.eq.s32.totalorder %s15, 1
    %p127 = por %p125, %p126
    %p128 = scmp.ne.s32.totalorder %s117, %s118
    %p129 = scmp.eq.s32.totalorder %s15, 0
    %p130 = por %p128, %p129
    %p131 = scmp.ne.s32.totalorder %s117, %s118
    %p132 = scmp.eq.s32.totalorder %s16, 1
    %p133 = por %p131, %p132
    %p135 = scmp.ne.s32.totalorder %s118, %s134
    %p136 = scmp.eq.s32.totalorder %s16, 0
    %p137 = por %p135, %p136
    %p138 = scmp.le.s32.totalorder 1, %s10
    %p139 = scmp.lt.s32.totalorder %s10, 3
    %p140 = pnand %p138, %p139
    %p141 = pneg %p140
    // Predicated region
    $region9: #{vit_forward.15} parent=5 // pred_check
      _
    $region10: #{vit_forward.15} parent=5 // pred_check_branch
      %143 = sbr.rel (%p140) target = $region12
    $region11: #{vit_forward.15} parent=5 // pred_region
      %s144 = ssub.s32 %s10, 1
      // Predicated region
      $region13: #{vit_forward.15} parent=11 // pred_check
        %p145 = pneg %p57
      $region14: #{vit_forward.15} parent=11 // pred_check_branch
        %147 = sbr.rel (%p145) target = $region16
      $region15: #{vit_forward.15} parent=11 // pred_region
        _
      $region16: #{vit_forward.15} parent=11 // pred_fallthru
        _
      // Predicated region
      $region17: #{vit_forward.15} parent=11 // pred_check
        %p148 = pneg %p78
      $region18: #{vit_forward.15} parent=11 // pred_check_branch
        %150 = sbr.rel (%p148) target = $region20
      $region19: #{vit_forward.15} parent=11 // pred_region
        _
      $region20: #{vit_forward.15} parent=11 // pred_fallthru
        _
    $region12: #{vit_forward.15} parent=5 // pred_fallthru
      _
    %p151 = scmp.lt.s32.totalorder %s10, 2
    // Predicated region
    $region21: #{vit_forward.15} parent=5 // pred_check
      %p152 = pneg %p151
    $region22: #{vit_forward.15} parent=5 // pred_check_branch
      %154 = sbr.rel (%p152) target = $region24
    $region23: #{vit_forward.15} parent=5 // pred_region
      // Predicated region
      $region25: #{vit_forward.15} parent=23 // pred_check
        %p155 = pneg %p30
      $region26: #{vit_forward.15} parent=23 // pred_check_branch
        %157 = sbr.rel (%p155) target = $region28
      $region27: #{vit_forward.15} parent=23 // pred_region
        %s158 = smul.u32 2, %s10
        %p159 = scmp.lt.s32.totalorder %s158, 3
        %s160 = scalar_select %p159, %s158, 3
        %s161 = smul.addr %s160, 4
        %s162 = scalar_lea.vmem %s0, %s161
        %s163 = smul.u32 2, %s10
      $region28: #{vit_forward.15} parent=23 // pred_fallthru
        _
      // Predicated region
      $region29: #{vit_forward.15} parent=23 // pred_check
        %p164 = pneg %p98
      $region30: #{vit_forward.15} parent=23 // pred_check_branch
        %166 = sbr.rel (%p164) target = $region32
      $region31: #{vit_forward.15} parent=23 // pred_region
        %s167 = smul.u32 2, %s10
        %p168 = scmp.lt.s32.totalorder %s167, 3
        %s169 = scalar_select %p168, %s167, 3
        %s170 = smul.addr %s169, 4
        %s171 = scalar_lea.vmem %s3, %s170
        %s172 = smul.u32 2, %s10
      $region32: #{vit_forward.15} parent=23 // pred_fallthru
        _
    $region24: #{vit_forward.15} parent=5 // pred_fallthru
      _
    %p173 = scmp.le.s32.totalorder 1, %s10
    %p174 = scmp.lt.s32.totalorder %s10, 3
    %p175 = pnand %p173, %p174
    %p176 = pneg %p175
    // Predicated region
    $region33: #{vit_forward.15} parent=5 // pred_check
      _
    $region34: #{vit_forward.15} parent=5 // pred_check_branch
      %178 = sbr.rel (%p175) target = $region36
    $region35: #{vit_forward.15} parent=5 // pred_region
      %s179 = ssub.s32 %s10, 1
      %s180 = smul.u32 2, %s15
      %p181 = scmp.lt.s32.totalorder %s180, 3
      %s182 = scalar_select %p181, %s180, 3
      %s183 = smul.addr %s182, 4
      %s184 = scalar_lea.vmem %s0, %s183
      %p185 = pneg %p36
      %p186 = pneg %p33
      %p187 = pneg %p57
      %p188 = pneg %p54
      %p189 = pneg %p78
      %p190 = pneg %p75
      %s191 = smul.u32 2, %s15
      %p192 = scmp.lt.s32.totalorder %s191, 3
      %s193 = scalar_select %p192, %s191, 3
      %s194 = smul.addr %s193, 4
      %s195 = scalar_lea.vmem %s3, %s194
      %p196 = pneg %p104
      %p197 = pneg %p101
      %p198 = pneg %p130
      %p199 = pneg %p127
      %s200 = smul.u32 2, %s15
      %p201 = scmp.lt.s32.totalorder %s200, 3
      %s202 = scalar_select %p201, %s200, 3
      %s203 = smul.addr %s202, 2
      %s204 = smul.addr %s203, 4
      %s205 = scalar_lea.vmem %s4, %s204
      %s206 = smul.u32 2, %s15
      %p207 = scmp.lt.s32.totalorder %s206, 3
      %s208 = scalar_select %p207, %s206, 3
      %s209 = smul.addr %s208, 4
      %s210 = scalar_lea.vmem %s0, %s209
      %s211 = smul.u32 2, %s15
      %s212 = smul.u32 2, %s15
      %p213 = scmp.lt.s32.totalorder %s212, 3
      %s214 = scalar_select %p213, %s212, 3
      %s215 = smul.addr %s214, 4
      %s216 = scalar_lea.vmem %s3, %s215
      %s217 = smul.u32 2, %s15
      %s218 = smul.u32 2, %s15
      %p219 = scmp.lt.s32.totalorder %s218, 3
      %s220 = scalar_select %p219, %s218, 3
      %s221 = smul.addr %s220, 2
      %s222 = smul.addr %s221, 4
      %s223 = scalar_lea.vmem %s4, %s222
      %s224 = smul.u32 2, %s15
      %v226 = vld [vmem:[%s210] sm:$0xf]
      %v227 = vld [vmem:[%s210 + $0x4] sm:$0xf]
      %v228 = vld [vmem:[%s1] sm:$0xff]
      %v229 = vld [vmem:[%s1 + $0x8] sm:$0xff]
      %v230 = vld [vmem:[%s1 + $0x10] sm:$0xff]
      %v231 = vld [vmem:[%s1 + $0x18] sm:$0xff]
      %v232 = vld [vmem:[%s2] sm:$0x3]
      %v234 = vperm.slane %v232, 0
      %v235 = vperm.slane %v232, 1
      %v240 = vunpack.c.l.b16 %v226
      %v241 = vunpack.c.l.b16 %v227
      %v242 = vpack.c.b16 %v241, %v240
      %v247 = vunpack.c.l.b16 %v228
      %v248 = vunpack.c.h.b16 %v228
      %v249 = vunpack.c.l.b16 %v229
      %v250 = vunpack.c.h.b16 %v229
      %v251 = vunpack.c.l.b16 %v230
      %v252 = vunpack.c.h.b16 %v230
      %v253 = vunpack.c.l.b16 %v231
      %v254 = vunpack.c.h.b16 %v231
      %v255 = vpack.c.b16 %v249, %v247
      %v256 = vpack.c.b16 %v250, %v248
      %v257 = vpack.c.b16 %v253, %v251
      %v258 = vpack.c.b16 %v254, %v252
      %vm263 = vcmask 261120
      %v265 = vsel %vm263, %v242, 0
      %267 = vmatpush.bf16.msra.mxu0 0
      %268 = vmatpush.bf16.msra.mxu0 0
      %269 = vmatpush.bf16.msra.mxu0 0
      %270 = vmatpush.bf16.msra.mxu0 0
      %271 = vmatpush.bf16.msra.mxu0 0
      %272 = vmatpush.bf16.msra.mxu0 0
      %273 = vmatpush.bf16.msra.mxu0 %v257
      %274 = vmatpush.bf16.msra.mxu0 %v255
      %275 = vmatmul.bf16.gmra.mxu0 %v265
      %v276 = vpop.f32.mrf.mxu0
      %v277 = vadd.f32 %v234, %v276
      %v278 = vpop.f32.mrf.mxu0
      %v279 = vadd.f32 %v234, %v278
      %280 = vdwg.mxu0
      %281 = vmatpush.bf16.msra.mxu0 0
      %282 = vmatpush.bf16.msra.mxu0 0
      %283 = vmatpush.bf16.msra.mxu0 0
      %284 = vmatpush.bf16.msra.mxu0 0
      %285 = vmatpush.bf16.msra.mxu0 0
      %286 = vmatpush.bf16.msra.mxu0 0
      %287 = vmatpush.bf16.msra.mxu0 %v258
      %288 = vmatpush.bf16.msra.mxu0 %v256
      %289 = vmatmul.bf16.gmra.mxu0 %v265
      %v290 = vpop.f32.mrf.mxu0
      %v291 = vadd.f32 %v235, %v290
      %v292 = vpop.f32.mrf.mxu0
      %v293 = vadd.f32 %v235, %v292
      %294 = vdwg.mxu0
      %v295 = vld [vmem:[%s216] sm:$0xf]
      %v296 = vld [vmem:[%s216 + $0x4] sm:$0xf]
      %v297 = vunpack.c.l.bf16 %v295
      %v298 = vunpack.c.l.bf16 %v296
      %v299 = vsel %vm263, %v297, 0.0
      %v300 = vsel %vm263, %v298, 0.0
      %v301 = vadd.f32 %v277, %v299
      %v302 = vadd.f32 %v291, 0.0
      %v303 = vadd.f32 %v279, %v300
      %v304 = vadd.f32 %v293, 0.0
      %v305 = vpack.c.bf16 %v302, %v301
      %v306 = vpack.c.bf16 %v304, %v303
      %307 = vst [vmem:[%s223] sm:$0xff] %v305
      %308 = vst [vmem:[%s223 + $0x8] sm:$0xff] %v306
      %s309 = smul.u32 2, %s15
      %p310 = scmp.lt.s32.totalorder %s309, 3
      %s311 = scalar_select %p310, %s309, 3
      %s312 = smul.addr %s311, 2
      %s313 = smul.addr %s312, 4
      %s314 = scalar_lea.vmem %s4, %s313
      // Predicated region
      $region37: #{vit_forward.15} parent=35 // pred_check
        %p315 = pneg %p127
      $region38: #{vit_forward.15} parent=35 // pred_check_branch
        %317 = sbr.rel (%p315) target = $region40
      $region39: #{vit_forward.15} parent=35 // pred_region
        %s318 = smul.u32 2, %s15
      $region40: #{vit_forward.15} parent=35 // pred_fallthru
        _
    $region36: #{vit_forward.15} parent=5 // pred_fallthru
      _
    %p319 = scmp.le.s32.totalorder 2, %s10
    // Predicated region
    $region41: #{vit_forward.15} parent=5 // pred_check
      %p320 = pneg %p319
    $region42: #{vit_forward.15} parent=5 // pred_check_branch
      %322 = sbr.rel (%p320) target = $region44
    $region43: #{vit_forward.15} parent=5 // pred_region
      %s323 = ssub.s32 %s10, 2
      // Predicated region
      $region45: #{vit_forward.15} parent=43 // pred_check
        %p324 = pneg %p133
      $region46: #{vit_forward.15} parent=43 // pred_check_branch
        %326 = sbr.rel (%p324) target = $region48
      $region47: #{vit_forward.15} parent=43 // pred_region
        %s327 = smul.u32 2, %s16
        %p328 = scmp.lt.s32.totalorder %s327, 3
        %s329 = scalar_select %p328, %s327, 3
        %s330 = smul.addr %s329, 2
        %s331 = smul.addr %s330, 4
        %s332 = scalar_lea.vmem %s4, %s331
      $region48: #{vit_forward.15} parent=43 // pred_fallthru
        _
    $region44: #{vit_forward.15} parent=5 // pred_fallthru
      _
  $region6: #{vit_forward.15} parent=0 // loop_footer
    %s14 = sadd.s32 1, %s10
  $region7: #{vit_forward.15} parent=0 // loop_footer_branch
    %9 = sbr.rel target = $region3
  $region8: #{vit_forward.15} parent=0 // loop_exit
    _

// kernel: vit_forward.14
$region0: #{vit_forward.14}
  #allocation0 [shape = 'u32[]', space=smem, size = 0x4, offset = 0x4, fixed_abs, tag = 'smem constant byte address 0x4 - core index']
  #allocation1 [shape = 'u32[72,128]{1,0:T(1,128)}', space=vmem, size = 0x9000, scoped, tag = 'internal scratch']
  %s0 = inlined_call_operand.vmem [shape: bf16[4,5,96], index: 0, kind: input, shape index: {}]
  %s1 = inlined_call_operand.vmem [shape: bf16[4,5,32], index: 1, kind: output, shape index: {}]
  %s2 = sld [smem:[#allocation0]]
  $region37: #{vit_forward.14} parent=0
    _
  %s4 = ssub.s32 1, %s2
  %s5 = scalar_select 0, %s4, %s2
  loop: start=0, step=1, limit=4
  $region2: #{vit_forward.14} parent=0 // loop_pre_header
    _
  $region3: #{vit_forward.14} parent=0 // loop_header
    %s7 = sphi 0, %s11
    %p8 = scmp.ge.s32.totalorder %s7, 4
    %s17 = sphi 0, %s19
    %s20 = sphi 0, %s17
    %s21 = sphi 0, %s20
    %s37 = sphi 0, %s21
    %s43 = sphi 0, %s45
    %s46 = sphi 0, %s43
    %s47 = sphi 0, %s46
    %s63 = sphi 0, %s47
  $region4: #{vit_forward.14} parent=0 // loop_header_branch
    %10 = sbr.rel (%p8) target = $region8
  $region5: #{vit_forward.14} parent=0 // loop_body
    %s12 = ssub.s32 %s7, 1
    %s13 = ssub.s32 %s7, 2
    %s14 = sadd.s32 %s7, 1
    %s15 = ssub.s32 %s7, %s14
    %p16 = scmp.eq.s32.totalorder %s15, 0
    %s18 = sadd.s32 %s17, 1
    %s19 = scalar_select %p16, %s17, %s18
    %p22 = pneg %p16
    %p23 = scmp.eq.s32.totalorder %s7, 1
    %p24 = por %p22, %p23
    %p25 = scmp.ne.s32.totalorder %s17, %s20
    %p26 = scmp.eq.s32.totalorder %s7, 0
    %p27 = por %p25, %p26
    %p28 = scmp.ne.s32.totalorder %s17, %s20
    %p29 = scmp.eq.s32.totalorder %s12, 1
    %p30 = por %p28, %p29
    %p31 = scmp.ne.s32.totalorder %s20, %s21
    %p32 = scmp.eq.s32.totalorder %s12, 0
    %p33 = por %p31, %p32
    %p34 = scmp.ne.s32.totalorder %s20, %s21
    %p35 = scmp.eq.s32.totalorder %s13, 1
    %p36 = por %p34, %p35
    %p38 = scmp.ne.s32.totalorder %s21, %s37
    %p39 = scmp.eq.s32.totalorder %s13, 0
    %p40 = por %p38, %p39
    %s41 = ssub.s32 %s7, %s14
    %p42 = scmp.eq.s32.totalorder %s41, 0
    %s44 = sadd.s32 %s43, 1
    %s45 = scalar_select %p42, %s43, %s44
    %p48 = pneg %p42
    %p49 = scmp.eq.s32.totalorder %s7, 1
    %p50 = por %p48, %p49
    %p51 = scmp.ne.s32.totalorder %s43, %s46
    %p52 = scmp.eq.s32.totalorder %s7, 0
    %p53 = por %p51, %p52
    %p54 = scmp.ne.s32.totalorder %s43, %s46
    %p55 = scmp.eq.s32.totalorder %s12, 1
    %p56 = por %p54, %p55
    %p57 = scmp.ne.s32.totalorder %s46, %s47
    %p58 = scmp.eq.s32.totalorder %s12, 0
    %p59 = por %p57, %p58
    %p60 = scmp.ne.s32.totalorder %s46, %s47
    %p61 = scmp.eq.s32.totalorder %s13, 1
    %p62 = por %p60, %p61
    %p64 = scmp.ne.s32.totalorder %s47, %s63
    %p65 = scmp.eq.s32.totalorder %s13, 0
    %p66 = por %p64, %p65
    %p67 = scmp.le.s32.totalorder 1, %s7
    %p68 = scmp.lt.s32.totalorder %s7, 3
    %p69 = pnand %p67, %p68
    %p70 = pneg %p69
    // Predicated region
    $region9: #{vit_forward.14} parent=5 // pred_check
      _
    $region10: #{vit_forward.14} parent=5 // pred_check_branch
      %72 = sbr.rel (%p69) target = $region12
    $region11: #{vit_forward.14} parent=5 // pred_region
      %s73 = ssub.s32 %s7, 1
    $region12: #{vit_forward.14} parent=5 // pred_fallthru
      _
    %p74 = scmp.lt.s32.totalorder %s7, 2
    // Predicated region
    $region13: #{vit_forward.14} parent=5 // pred_check
      %p75 = pneg %p74
    $region14: #{vit_forward.14} parent=5 // pred_check_branch
      %77 = sbr.rel (%p75) target = $region16
    $region15: #{vit_forward.14} parent=5 // pred_region
      // Predicated region
      $region17: #{vit_forward.14} parent=15 // pred_check
        %p78 = pneg %p27
      $region18: #{vit_forward.14} parent=15 // pred_check_branch
        %80 = sbr.rel (%p78) target = $region20
      $region19: #{vit_forward.14} parent=15 // pred_region
        %s81 = smul.u32 2, %s7
        %p82 = scmp.lt.s32.totalorder %s81, 3
        %s83 = scalar_select %p82, %s81, 3
        %s84 = smul.addr %s83, 4
        %s85 = scalar_lea.vmem %s0, %s84
        %s86 = smul.u32 2, %s7
      $region20: #{vit_forward.14} parent=15 // pred_fallthru
        _
    $region16: #{vit_forward.14} parent=5 // pred_fallthru
      _
    %p87 = scmp.le.s32.totalorder 1, %s7
    %p88 = scmp.lt.s32.totalorder %s7, 3
    %p89 = pnand %p87, %p88
    %p90 = pneg %p89
    // Predicated region
    $region21: #{vit_forward.14} parent=5 // pred_check
      _
    $region22: #{vit_forward.14} parent=5 // pred_check_branch
      %92 = sbr.rel (%p89) target = $region24
    $region23: #{vit_forward.14} parent=5 // pred_region
      %s93 = ssub.s32 %s7, 1
      %s94 = smul.u32 2, %s12
      %p95 = scmp.lt.s32.totalorder %s94, 3
      %s96 = scalar_select %p95, %s94, 3
      %s97 = smul.addr %s96, 4
      %s98 = scalar_lea.vmem %s0, %s97
      %p99 = pneg %p33
      %p100 = pneg %p30
      %p101 = pneg %p59
      %p102 = pneg %p56
      %s103 = smul.u32 2, %s12
      %p104 = scmp.lt.s32.totalorder %s103, 3
      %s105 = scalar_select %p104, %s103, 3
      %s106 = smul.addr %s105, 4
      %s107 = scalar_lea.vmem %s1, %s106
      %s108 = smul.u32 2, %s12
      %p109 = scmp.lt.s32.totalorder %s108, 3
      %s110 = scalar_select %p109, %s108, 3
      %s111 = smul.addr %s110, 4
      %s112 = scalar_lea.vmem %s0, %s111
      %s113 = smul.u32 2, %s12
      %s114 = smul.u32 2, %s12
      %p115 = scmp.lt.s32.totalorder %s114, 3
      %s116 = scalar_select %p115, %s114, 3
      %s117 = smul.addr %s116, 4
      %s118 = scalar_lea.vmem %s1, %s117
      %s119 = smul.u32 2, %s12
      %v120 = vld [vmem:[%s112] sm:$0x7]
      %v121 = vld [vmem:[%s112 + $0x4] sm:$0x7]
      %v122 = vunpack.c.l.bf16 %v120
      %v123 = vunpack.c.l.bf16 %v121
      %v124 = vmul.f32 %v122, 0.25
      %v125 = vmul.f32 %v123, 0.25
      %127 = vrot.lane.b32.xlu0 %v122, 96
      %v128 = vpop.permute.xlu0 %127
      %vm129 = vcmask 130048
      %v131 = vsel %vm129, %v124, 0
      %v133 = vsel %vm129, %v128, 0
      %135 = vmatpush.xpose.msra.mxu0 0.0
      %136 = vmatpush.xpose.msra.mxu0 0.0
      %137 = vmatpush.xpose.msra.mxu0 0.0
      %138 = vmatpush.xpose.msra.mxu0 0.0
      %139 = vmatpush.xpose.msra.mxu0 0.0
      %140 = vmatpush.xpose.msra.mxu0 0.0
      %141 = vmatpush.xpose.msra.mxu0 0.0
      %142 = vmatpush.xpose.msra.mxu0 0.0
      %143 = vmatpush.xpose.msra.mxu0 0.0
      %144 = vmatpush.xpose.msra.mxu0 0.0
      %145 = vmatpush.xpose.msra.mxu0 0.0
      %146 = vmatpush.xpose.msra.mxu0 0.0
      %147 = vmatpush.xpose.msra.mxu0 0.0
      %148 = vmatpush.xpose.msra.mxu0 0.0
      %149 = vmatpush.xpose.msra.mxu0 0.0
      %150 = vmatpush.xpose.msra.mxu0 %v133
      %151 = vmatmul.f32.gmra.mxu0 %v131
      %v152 = vpop.f32.mrf.mxu0
      %v153 = vadd.f32 0.0, %v152
      %154 = vdwg.mxu0
      %156 = vrot.lane.b32.xlu0 %v123, 96
      %v157 = vpop.permute.xlu0 %156
      %v159 = vsel %vm129, %v125, 0
      %v161 = vsel %vm129, %v157, 0
      %163 = vmatpush.xpose.msra.mxu0 0.0
      %164 = vmatpush.xpose.msra.mxu0 0.0
      %165 = vmatpush.xpose.msra.mxu0 0.0
      %166 = vmatpush.xpose.msra.mxu0 0.0
      %167 = vmatpush.xpose.msra.mxu0 0.0
      %168 = vmatpush.xpose.msra.mxu0 0.0
      %169 = vmatpush.xpose.msra.mxu0 0.0
      %170 = vmatpush.xpose.msra.mxu0 0.0
      %171 = vmatpush.xpose.msra.mxu0 0.0
      %172 = vmatpush.xpose.msra.mxu0 0.0
      %173 = vmatpush.xpose.msra.mxu0 0.0
      %174 = vmatpush.xpose.msra.mxu0 0.0
      %175 = vmatpush.xpose.msra.mxu0 0.0
      %176 = vmatpush.xpose.msra.mxu0 0.0
      %177 = vmatpush.xpose.msra.mxu0 0.0
      %178 = vmatpush.xpose.msra.mxu0 %v161
      %179 = vmatmul.f32.gmra.mxu0 %v159
      %v180 = vpop.f32.mrf.mxu0
      %v181 = vadd.f32 0.0, %v180
      %182 = vdwg.mxu0
      %vm183 = vcmask 36864
      %v184 = vsel %vm183, %v153, -inf
      %185 = vmax.xlane.f32.xlu0 %v184
      %v186 = vpop.xlane.xlu0 %185
      %v187 = vsel %vm183, %v181, -inf
      %188 = vmax.xlane.f32.xlu0 %v187
      %v189 = vpop.xlane.xlu0 %188
      %v190 = vsub.f32 %v153, %v186
      %v191 = vsub.f32 %v181, %v189
      %v192 = vmul.f32 %v190, 1.442695
      %v193 = vpow.pop %v192
      %v194 = vmul.f32 %v191, 1.442695
      %v195 = vpow.pop %v194
      %v196 = vsel %vm183, %v193, 0.0
      %197 = vadd.xlane.f32.xlu0 %v196
      %v198 = vpop.xlane.xlu0 %197
      %v199 = vsel %vm183, %v195, 0.0
      %200 = vadd.xlane.f32.xlu0 %v199
      %v201 = vpop.xlane.xlu0 %200
      %202 = vrot.lane.b32.xlu0 %v122, 64
      %v203 = vpop.permute.xlu0 %202
      %vm204 = vcmask 39936
      %v206 = vsel %vm204, %v193, 0
      %vm208 = vcmask 1044480
      %v209 = vsel %vm208, %v203, 0
      %211 = vmatpush.msra.mxu0 0.0
      %212 = vmatpush.msra.mxu0 0.0
      %213 = vmatpush.msra.mxu0 0.0
      %214 = vmatpush.msra.mxu0 0.0
      %215 = vmatpush.msra.mxu0 0.0
      %216 = vmatpush.msra.mxu0 0.0
      %217 = vmatpush.msra.mxu0 0.0
      %218 = vmatpush.msra.mxu0 0.0
      %219 = vmatpush.msra.mxu0 0.0
      %220 = vmatpush.msra.mxu0 0.0
      %221 = vmatpush.msra.mxu0 0.0
      %222 = vmatpush.msra.mxu0 0.0
      %223 = vmatpush.msra.mxu0 0.0
      %224 = vmatpush.msra.mxu0 0.0
      %225 = vmatpush.msra.mxu0 0.0
      %226 = vmatpush.msra.mxu0 %v209
      %227 = vmatmul.f32.gmra.mxu0 %v206
      %v228 = vpop.f32.mrf.mxu0
      %v229 = vadd.f32 0.0, %v228
      %230 = vdwg.mxu0
      %231 = vrot.lane.b32.xlu0 %v123, 64
      %v232 = vpop.permute.xlu0 %231
      %v234 = vsel %vm204, %v195, 0
      %v236 = vsel %vm208, %v232, 0
      %238 = vmatpush.msra.mxu0 0.0
      %239 = vmatpush.msra.mxu0 0.0
      %240 = vmatpush.msra.mxu0 0.0
      %241 = vmatpush.msra.mxu0 0.0
      %242 = vmatpush.msra.mxu0 0.0
      %243 = vmatpush.msra.mxu0 0.0
      %244 = vmatpush.msra.mxu0 0.0
      %245 = vmatpush.msra.mxu0 0.0
      %246 = vmatpush.msra.mxu0 0.0
      %247 = vmatpush.msra.mxu0 0.0
      %248 = vmatpush.msra.mxu0 0.0
      %249 = vmatpush.msra.mxu0 0.0
      %250 = vmatpush.msra.mxu0 0.0
      %251 = vmatpush.msra.mxu0 0.0
      %252 = vmatpush.msra.mxu0 0.0
      %253 = vmatpush.msra.mxu0 %v236
      %254 = vmatmul.f32.gmra.mxu0 %v234
      %v255 = vpop.f32.mrf.mxu0
      %v256 = vadd.f32 0.0, %v255
      %257 = vdwg.mxu0
      %v258 = vrcp.pop %v198
      %v259 = vrcp.pop %v201
      %v260 = vmul.f32 %v229, %v258
      %v261 = vmul.f32 %v256, %v259
      %262 = vrot.lane.b32.xlu0 %v124, 112
      %v263 = vpop.permute.xlu0 %262
      %264 = vrot.lane.b32.xlu0 %v122, 80
      %v265 = vpop.permute.xlu0 %264
      %v266 = vsel %vm129, %v263, 0
      %v268 = vsel %vm129, %v265, 0
      %270 = vmatpush.xpose.msra.mxu0 0.0
      %271 = vmatpush.xpose.msra.mxu0 0.0
      %272 = vmatpush.xpose.msra.mxu0 0.0
      %273 = vmatpush.xpose.msra.mxu0 0.0
      %274 = vmatpush.xpose.msra.mxu0 0.0
      %275 = vmatpush.xpose.msra.mxu0 0.0
      %276 = vmatpush.xpose.msra.mxu0 0.0
      %277 = vmatpush.xpose.msra.mxu0 0.0
      %278 = vmatpush.xpose.msra.mxu0 0.0
      %279 = vmatpush.xpose.msra.mxu0 0.0
      %280 = vmatpush.xpose.msra.mxu0 0.0
      %281 = vmatpush.xpose.msra.mxu0 0.0
      %282 = vmatpush.xpose.msra.mxu0 0.0
      %283 = vmatpush.xpose.msra.mxu0 0.0
      %284 = vmatpush.xpose.msra.mxu0 0.0
      %285 = vmatpush.xpose.msra.mxu0 %v268
      %286 = vmatmul.f32.gmra.mxu0 %v266
      %v287 = vpop.f32.mrf.mxu0
      %v288 = vadd.f32 0.0, %v287
      %289 = vdwg.mxu0
      %290 = vrot.lane.b32.xlu0 %v125, 112
      %v291 = vpop.permute.xlu0 %290
      %292 = vrot.lane.b32.xlu0 %v123, 80
      %v293 = vpop.permute.xlu0 %292
      %v294 = vsel %vm129, %v291, 0
      %v296 = vsel %vm129, %v293, 0
      %298 = vmatpush.xpose.msra.mxu0 0.0
      %299 = vmatpush.xpose.msra.mxu0 0.0
      %300 = vmatpush.xpose.msra.mxu0 0.0
      %301 = vmatpush.xpose.msra.mxu0 0.0
      %302 = vmatpush.xpose.msra.mxu0 0.0
      %303 = vmatpush.xpose.msra.mxu0 0.0
      %304 = vmatpush.xpose.msra.mxu0 0.0
      %305 = vmatpush.xpose.msra.mxu0 0.0
      %306 = vmatpush.xpose.msra.mxu0 0.0
      %307 = vmatpush.xpose.msra.mxu0 0.0
      %308 = vmatpush.xpose.msra.mxu0 0.0
      %309 = vmatpush.xpose.msra.mxu0 0.0
      %310 = vmatpush.xpose.msra.mxu0 0.0
      %311 = vmatpush.xpose.msra.mxu0 0.0
      %312 = vmatpush.xpose.msra.mxu0 0.0
      %313 = vmatpush.xpose.msra.mxu0 %v296
      %314 = vmatmul.f32.gmra.mxu0 %v294
      %v315 = vpop.f32.mrf.mxu0
      %v316 = vadd.f32 0.0, %v315
      %317 = vdwg.mxu0
      %v318 = vsel %vm183, %v288, -inf
      %319 = vmax.xlane.f32.xlu0 %v318
      %v320 = vpop.xlane.xlu0 %319
      %v321 = vsel %vm183, %v316, -inf
      %322 = vmax.xlane.f32.xlu0 %v321
      %v323 = vpop.xlane.xlu0 %322
      %v324 = vsub.f32 %v288, %v320
      %v325 = vsub.f32 %v316, %v323
      %v326 = vmul.f32 %v324, 1.442695
      %v327 = vpow.pop %v326
      %v328 = vmul.f32 %v325, 1.442695
      %v329 = vpow.pop %v328
      %v330 = vsel %vm183, %v327, 0.0
      %331 = vadd.xlane.f32.xlu0 %v330
      %v332 = vpop.xlane.xlu0 %331
      %v333 = vsel %vm183, %v329, 0.0
      %334 = vadd.xlane.f32.xlu0 %v333
      %v335 = vpop.xlane.xlu0 %334
      %336 = vrot.lane.b32.xlu0 %v122, 48
      %v337 = vpop.permute.xlu0 %336
      %v339 = vsel %vm204, %v327, 0
      %v341 = vsel %vm208, %v337, 0
      %343 = vmatpush.msra.mxu0 0.0
      %344 = vmatpush.msra.mxu0 0.0
      %345 = vmatpush.msra.mxu0 0.0
      %346 = vmatpush.msra.mxu0 0.0
      %347 = vmatpush.msra.mxu0 0.0
      %348 = vmatpush.msra.mxu0 0.0
      %349 = vmatpush.msra.mxu0 0.0
      %350 = vmatpush.msra.mxu0 0.0
      %351 = vmatpush.msra.mxu0 0.0
      %352 = vmatpush.msra.mxu0 0.0
      %353 = vmatpush.msra.mxu0 0.0
      %354 = vmatpush.msra.mxu0 0.0
      %355 = vmatpush.msra.mxu0 0.0
      %356 = vmatpush.msra.mxu0 0.0
      %357 = vmatpush.msra.mxu0 0.0
      %358 = vmatpush.msra.mxu0 %v341
      %359 = vmatmul.f32.gmra.mxu0 %v339
      %v360 = vpop.f32.mrf.mxu0
      %v361 = vadd.f32 0.0, %v360
      %362 = vdwg.mxu0
      %363 = vrot.lane.b32.xlu0 %v123, 48
      %v364 = vpop.permute.xlu0 %363
      %v366 = vsel %vm204, %v329, 0
      %v368 = vsel %vm208, %v364, 0
      %370 = vmatpush.msra.mxu0 0.0
      %371 = vmatpush.msra.mxu0 0.0
      %372 = vmatpush.msra.mxu0 0.0
      %373 = vmatpush.msra.mxu0 0.0
      %374 = vmatpush.msra.mxu0 0.0
      %375 = vmatpush.msra.mxu0 0.0
      %376 = vmatpush.msra.mxu0 0.0
      %377 = vmatpush.msra.mxu0 0.0
      %378 = vmatpush.msra.mxu0 0.0
      %379 = vmatpush.msra.mxu0 0.0
      %380 = vmatpush.msra.mxu0 0.0
      %381 = vmatpush.msra.mxu0 0.0
      %382 = vmatpush.msra.mxu0 0.0
      %383 = vmatpush.msra.mxu0 0.0
      %384 = vmatpush.msra.mxu0 0.0
      %385 = vmatpush.msra.mxu0 %v368
      %386 = vmatmul.f32.gmra.mxu0 %v366
      %v387 = vpop.f32.mrf.mxu0
      %v388 = vadd.f32 0.0, %v387
      %389 = vdwg.mxu0
      %v390 = vrcp.pop %v332
      %v391 = vrcp.pop %v335
      %v392 = vmul.f32 %v361, %v390
      %v393 = vmul.f32 %v388, %v391
      %396 = vrot.lane.b32.xlu0 %v392, 16
      %v397 = vpop.permute.xlu0 %396
      %398 = vrot.lane.b32.xlu0 %v393, 16
      %v399 = vpop.permute.xlu0 %398
      %v402 = vsel %vm129, %v260, %v397
      %v403 = vsel %vm129, %v261, %v399
      %v404 = vpack.c.bf16 %v402, %v402
      %v405 = vpack.c.bf16 %v403, %v403
      %vm406 = vcmask 256000
      %vm407 = vsmask.f32 2304
      %vm408 = vmand %vm406, %vm407
      %v409 = vld [vmem:[%s118] sm:$0x7]
      %v410 = vsel %vm408, %v404, %v409
      %411 = vst [vmem:[%s118] sm:$0x7] %v410
      %v412 = vld [vmem:[%s118 + $0x4] sm:$0x7]
      %v413 = vsel %vm408, %v405, %v412
      %414 = vst [vmem:[%s118 + $0x4] sm:$0x7] %v413
      %s415 = smul.u32 2, %s12
      %p416 = scmp.lt.s32.totalorder %s415, 3
      %s417 = scalar_select %p416, %s415, 3
      %s418 = smul.addr %s417, 4
      %s419 = scalar_lea.vmem %s1, %s418
      // Predicated region
      $region25: #{vit_forward.14} parent=23 // pred_check
        %p420 = pneg %p56
      $region26: #{vit_forward.14} parent=23 // pred_check_branch
        %422 = sbr.rel (%p420) target = $region28
      $region27: #{vit_forward.14} parent=23 // pred_region
        %s423 = smul.u32 2, %s12
      $region28: #{vit_forward.14} parent=23 // pred_fallthru
        _
    $region24: #{vit_forward.14} parent=5 // pred_fallthru
      _
    %p424 = scmp.le.s32.totalorder 2, %s7
    // Predicated region
    $region29: #{vit_forward.14} parent=5 // pred_check
      %p425 = pneg %p424
    $region30: #{vit_forward.14} parent=5 // pred_check_branch
      %427 = sbr.rel (%p425) target = $region32
    $region31: #{vit_forward.14} parent=5 // pred_region
      %s428 = ssub.s32 %s7, 2
      // Predicated region
      $region33: #{vit_forward.14} parent=31 // pred_check
        %p429 = pneg %p62
      $region34: #{vit_forward.14} parent=31 // pred_check_branch
        %431 = sbr.rel (%p429) target = $region36
      $region35: #{vit_forward.14} parent=31 // pred_region
        %s432 = smul.u32 2, %s13
        %p433 = scmp.lt.s32.totalorder %s432, 3
        %s434 = scalar_select %p433, %s432, 3
        %s435 = smul.addr %s434, 4
        %s436 = scalar_lea.vmem %s1, %s435
      $region36: #{vit_forward.14} parent=31 // pred_fallthru
        _
    $region32: #{vit_forward.14} parent=5 // pred_fallthru
      _
  $region6: #{vit_forward.14} parent=0 // loop_footer
    %s11 = sadd.s32 1, %s7
  $region7: #{vit_forward.14} parent=0 // loop_footer_branch
    %6 = sbr.rel target = $region3
  $region8: #{vit_forward.14} parent=0 // loop_exit
    _

// kernel: vit_forward.16
$region0: #{vit_forward.16}
  #allocation0 [shape = 'u32[]', space=smem, size = 0x4, offset = 0x4, fixed_abs, tag = 'smem constant byte address 0x4 - core index']
  #allocation1 [shape = 'u32[72,128]{1,0:T(1,128)}', space=vmem, size = 0x9000, scoped, tag = 'internal scratch']
  %s0 = inlined_call_operand.vmem [shape: bf16[32,32], index: 0, kind: input, shape index: {}]
  %s1 = inlined_call_operand.vmem [shape: f32[1,32], index: 1, kind: input, shape index: {}]
  %s2 = inlined_call_operand.vmem [shape: f32[1,32], index: 2, kind: input, shape index: {}]
  %s3 = inlined_call_operand.vmem [shape: bf16[32,256], index: 3, kind: input, shape index: {}]
  %s4 = inlined_call_operand.vmem [shape: f32[1,256], index: 4, kind: input, shape index: {}]
  %s5 = inlined_call_operand.vmem [shape: bf16[32,256], index: 5, kind: output, shape index: {}]
  %s6 = sld [smem:[#allocation0]]
  $region53: #{vit_forward.16} parent=0
    _
  %s8 = ssub.s32 1, %s6
  %s9 = scalar_select 0, %s8, %s6
  loop: start=0, step=1, limit=4
  $region2: #{vit_forward.16} parent=0 // loop_pre_header
    _
  $region3: #{vit_forward.16} parent=0 // loop_header
    %s11 = sphi 0, %s15
    %p12 = scmp.ge.s32.totalorder %s11, 4
    %s21 = sphi 0, %s23
    %s24 = sphi 0, %s21
    %s25 = sphi 0, %s24
    %s41 = sphi 0, %s25
    %s45 = sphi 0, %s45
    %s47 = sphi 0, %s45
    %s48 = sphi 0, %s47
    %s62 = sphi 0, %s48
    %s66 = sphi 0, %s66
    %s68 = sphi 0, %s66
    %s69 = sphi 0, %s68
    %s83 = sphi 0, %s69
    %s87 = sphi 0, %s87
    %s89 = sphi 0, %s87
    %s90 = sphi 0, %s89
    %s104 = sphi 0, %s90
    %s108 = sphi 0, %s108
    %s110 = sphi 0, %s108
    %s111 = sphi 0, %s110
    %s125 = sphi 0, %s111
    %s131 = sphi 0, %s133
    %s134 = sphi 0, %s131
    %s135 = sphi 0, %s134
    %s151 = sphi 0, %s135
  $region4: #{vit_forward.16} parent=0 // loop_header_branch
    %14 = sbr.rel (%p12) target = $region8
  $region5: #{vit_forward.16} parent=0 // loop_body
    %s16 = ssub.s32 %s11, 1
    %s17 = ssub.s32 %s11, 2
    %s18 = sadd.s32 %s11, 1
    %s19 = ssub.s32 %s11, %s18
    %p20 = scmp.eq.s32.totalorder %s19, 0
    %s22 = sadd.s32 %s21, 1
    %s23 = scalar_select %p20, %s21, %s22
    %p26 = pneg %p20
    %p27 = scmp.eq.s32.totalorder %s11, 1
    %p28 = por %p26, %p27
    %p29 = scmp.ne.s32.totalorder %s21, %s24
    %p30 = scmp.eq.s32.totalorder %s11, 0
    %p31 = por %p29, %p30
    %p32 = scmp.ne.s32.totalorder %s21, %s24
    %p33 = scmp.eq.s32.totalorder %s16, 1
    %p34 = por %p32, %p33
    %p35 = scmp.ne.s32.totalorder %s24, %s25
    %p36 = scmp.eq.s32.totalorder %s16, 0
    %p37 = por %p35, %p36
    %p38 = scmp.ne.s32.totalorder %s24, %s25
    %p39 = scmp.eq.s32.totalorder %s17, 1
    %p40 = por %p38, %p39
    %p42 = scmp.ne.s32.totalorder %s25, %s41
    %p43 = scmp.eq.s32.totalorder %s17, 0
    %p44 = por %p42, %p43
    %s46 = sadd.s32 %s45, 1
    %p49 = scmp.eq.s32.totalorder %s11, 1
    %p50 = scmp.ne.s32.totalorder %s45, %s47
    %p51 = scmp.eq.s32.totalorder %s11, 0
    %p52 = por %p50, %p51
    %p53 = scmp.ne.s32.totalorder %s45, %s47
    %p54 = scmp.eq.s32.totalorder %s16, 1
    %p55 = por %p53, %p54
    %p56 = scmp.ne.s32.totalorder %s47, %s48
    %p57 = scmp.eq.s32.totalorder %s16, 0
    %p58 = por %p56, %p57
    %p59 = scmp.ne.s32.totalorder %s47, %s48
    %p60 = scmp.eq.s32.totalorder %s17, 1
    %p61 = por %p59, %p60
    %p63 = scmp.ne.s32.totalorder %s48, %s62
    %p64 = scmp.eq.s32.totalorder %s17, 0
    %p65 = por %p63, %p64
    %s67 = sadd.s32 %s66, 1
    %p70 = scmp.eq.s32.totalorder %s11, 1
    %p71 = scmp.ne.s32.totalorder %s66, %s68
    %p72 = scmp.eq.s32.totalorder %s11, 0
    %p73 = por %p71, %p72
    %p74 = scmp.ne.s32.totalorder %s66, %s68
    %p75 = scmp.eq.s32.totalorder %s16, 1
    %p76 = por %p74, %p75
    %p77 = scmp.ne.s32.totalorder %s68, %s69
    %p78 = scmp.eq.s32.totalorder %s16, 0
    %p79 = por %p77, %p78
    %p80 = scmp.ne.s32.totalorder %s68, %s69
    %p81 = scmp.eq.s32.totalorder %s17, 1
    %p82 = por %p80, %p81
    %p84 = scmp.ne.s32.totalorder %s69, %s83
    %p85 = scmp.eq.s32.totalorder %s17, 0
    %p86 = por %p84, %p85
    %s88 = sadd.s32 %s87, 1
    %p91 = scmp.eq.s32.totalorder %s11, 1
    %p92 = scmp.ne.s32.totalorder %s87, %s89
    %p93 = scmp.eq.s32.totalorder %s11, 0
    %p94 = por %p92, %p93
    %p95 = scmp.ne.s32.totalorder %s87, %s89
    %p96 = scmp.eq.s32.totalorder %s16, 1
    %p97 = por %p95, %p96
    %p98 = scmp.ne.s32.totalorder %s89, %s90
    %p99 = scmp.eq.s32.totalorder %s16, 0
    %p100 = por %p98, %p99
    %p101 = scmp.ne.s32.totalorder %s89, %s90
    %p102 = scmp.eq.s32.totalorder %s17, 1
    %p103 = por %p101, %p102
    %p105 = scmp.ne.s32.totalorder %s90, %s104
    %p106 = scmp.eq.s32.totalorder %s17, 0
    %p107 = por %p105, %p106
    %s109 = sadd.s32 %s108, 1
    %p112 = scmp.eq.s32.totalorder %s11, 1
    %p113 = scmp.ne.s32.totalorder %s108, %s110
    %p114 = scmp.eq.s32.totalorder %s11, 0
    %p115 = por %p113, %p114
    %p116 = scmp.ne.s32.totalorder %s108, %s110
    %p117 = scmp.eq.s32.totalorder %s16, 1
    %p118 = por %p116, %p117
    %p119 = scmp.ne.s32.totalorder %s110, %s111
    %p120 = scmp.eq.s32.totalorder %s16, 0
    %p121 = por %p119, %p120
    %p122 = scmp.ne.s32.totalorder %s110, %s111
    %p123 = scmp.eq.s32.totalorder %s17, 1
    %p124 = por %p122, %p123
    %p126 = scmp.ne.s32.totalorder %s111, %s125
    %p127 = scmp.eq.s32.totalorder %s17, 0
    %p128 = por %p126, %p127
    %s129 = ssub.s32 %s11, %s18
    %p130 = scmp.eq.s32.totalorder %s129, 0
    %s132 = sadd.s32 %s131, 1
    %s133 = scalar_select %p130, %s131, %s132
    %p136 = pneg %p130
    %p137 = scmp.eq.s32.totalorder %s11, 1
    %p138 = por %p136, %p137
    %p139 = scmp.ne.s32.totalorder %s131, %s134
    %p140 = scmp.eq.s32.totalorder %s11, 0
    %p141 = por %p139, %p140
    %p142 = scmp.ne.s32.totalorder %s131, %s134
    %p143 = scmp.eq.s32.totalorder %s16, 1
    %p144 = por %p142, %p143
    %p145 = scmp.ne.s32.totalorder %s134, %s135
    %p146 = scmp.eq.s32.totalorder %s16, 0
    %p147 = por %p145, %p146
    %p148 = scmp.ne.s32.totalorder %s134, %s135
    %p149 = scmp.eq.s32.totalorder %s17, 1
    %p150 = por %p148, %p149
    %p152 = scmp.ne.s32.totalorder %s135, %s151
    %p153 = scmp.eq.s32.totalorder %s17, 0
    %p154 = por %p152, %p153
    %p155 = scmp.le.s32.totalorder 1, %s11
    %p156 = scmp.lt.s32.totalorder %s11, 3
    %p157 = pnand %p155, %p156
    %p158 = pneg %p157
    // Predicated region
    $region9: #{vit_forward.16} parent=5 // pred_check
      _
    $region10: #{vit_forward.16} parent=5 // pred_check_branch
      %160 = sbr.rel (%p157) target = $region12
    $region11: #{vit_forward.16} parent=5 // pred_region
      %s161 = ssub.s32 %s11, 1
      // Predicated region
      $region13: #{vit_forward.16} parent=11 // pred_check
        %p162 = pneg %p58
      $region14: #{vit_forward.16} parent=11 // pred_check_branch
        %164 = sbr.rel (%p162) target = $region16
      $region15: #{vit_forward.16} parent=11 // pred_region
        _
      $region16: #{vit_forward.16} parent=11 // pred_fallthru
        _
      // Predicated region
      $region17: #{vit_forward.16} parent=11 // pred_check
        %p165 = pneg %p79
      $region18: #{vit_forward.16} parent=11 // pred_check_branch
        %167 = sbr.rel (%p165) target = $region20
      $region19: #{vit_forward.16} parent=11 // pred_region
        _
      $region20: #{vit_forward.16} parent=11 // pred_fallthru
        _
      // Predicated region
      $region21: #{vit_forward.16} parent=11 // pred_check
        %p168 = pneg %p100
      $region22: #{vit_forward.16} parent=11 // pred_check_branch
        %170 = sbr.rel (%p168) target = $region24
      $region23: #{vit_forward.16} parent=11 // pred_region
        _
      $region24: #{vit_forward.16} parent=11 // pred_fallthru
        _
      // Predicated region
      $region25: #{vit_forward.16} parent=11 // pred_check
        %p171 = pneg %p121
      $region26: #{vit_forward.16} parent=11 // pred_check_branch
        %173 = sbr.rel (%p171) target = $region28
      $region27: #{vit_forward.16} parent=11 // pred_region
        _
      $region28: #{vit_forward.16} parent=11 // pred_fallthru
        _
    $region12: #{vit_forward.16} parent=5 // pred_fallthru
      _
    %p174 = scmp.lt.s32.totalorder %s11, 2
    // Predicated region
    $region29: #{vit_forward.16} parent=5 // pred_check
      %p175 = pneg %p174
    $region30: #{vit_forward.16} parent=5 // pred_check_branch
      %177 = sbr.rel (%p175) target = $region32
    $region31: #{vit_forward.16} parent=5 // pred_region
      // Predicated region
      $region33: #{vit_forward.16} parent=31 // pred_check
        %p178 = pneg %p31
      $region34: #{vit_forward.16} parent=31 // pred_check_branch
        %180 = sbr.rel (%p178) target = $region36
      $region35: #{vit_forward.16} parent=31 // pred_region
        %s181 = smul.u32 2, %s11
        %p182 = scmp.lt.s32.totalorder %s181, 3
        %s183 = scalar_select %p182, %s181, 3
        %s184 = smul.addr %s183, 4
        %s185 = scalar_lea.vmem %s0, %s184
        %s186 = smul.u32 2, %s11
      $region36: #{vit_forward.16} parent=31 // pred_fallthru
        _
    $region32: #{vit_forward.16} parent=5 // pred_fallthru
      _
    %p187 = scmp.le.s32.totalorder 1, %s11
    %p188 = scmp.lt.s32.totalorder %s11, 3
    %p189 = pnand %p187, %p188
    %p190 = pneg %p189
    // Predicated region
    $region37: #{vit_forward.16} parent=5 // pred_check
      _
    $region38: #{vit_forward.16} parent=5 // pred_check_branch
      %192 = sbr.rel (%p189) target = $region40
    $region39: #{vit_forward.16} parent=5 // pred_region
      %s193 = ssub.s32 %s11, 1
      %s194 = smul.u32 2, %s16
      %p195 = scmp.lt.s32.totalorder %s194, 3
      %s196 = scalar_select %p195, %s194, 3
      %s197 = smul.addr %s196, 4
      %s198 = scalar_lea.vmem %s0, %s197
      %p199 = pneg %p37
      %p200 = pneg %p34
      %p201 = pneg %p58
      %p202 = pneg %p55
      %p203 = pneg %p79
      %p204 = pneg %p76
      %p205 = pneg %p100
      %p206 = pneg %p97
      %p207 = pneg %p121
      %p208 = pneg %p118
      %p209 = pneg %p147
      %p210 = pneg %p144
      %s211 = smul.u32 2, %s16
      %p212 = scmp.lt.s32.totalorder %s211, 3
      %s213 = scalar_select %p212, %s211, 3
      %s214 = smul.addr %s213, 2
      %s215 = smul.addr %s214, 4
      %s216 = scalar_lea.vmem %s5, %s215
      %s217 = smul.u32 2, %s16
      %p218 = scmp.lt.s32.totalorder %s217, 3
      %s219 = scalar_select %p218, %s217, 3
      %s220 = smul.addr %s219, 4
      %s221 = scalar_lea.vmem %s0, %s220
      %s222 = smul.u32 2, %s16
      %s223 = smul.u32 2, %s16
      %p224 = scmp.lt.s32.totalorder %s223, 3
      %s225 = scalar_select %p224, %s223, 3
      %s226 = smul.addr %s225, 2
      %s227 = smul.addr %s226, 4
      %s228 = scalar_lea.vmem %s5, %s227
      %s229 = smul.u32 2, %s16
      %v231 = vld [vmem:[%s221] sm:$0xf]
      %v232 = vld [vmem:[%s221 + $0x4] sm:$0xf]
      %v233 = vunpack.c.l.bf16 %v231
      %v234 = vunpack.c.l.bf16 %v232
      %vm235 = vcmask 261120
      %v236 = vsel %vm235, %v233, 0.0
      %237 = vadd.xlane.f32.xlu0 %v236
      %v238 = vpop.xlane.xlu0 %237
      %v239 = vsel %vm235, %v234, 0.0
      %240 = vadd.xlane.f32.xlu0 %v239
      %v241 = vpop.xlane.xlu0 %240
      %v242 = vrcp.pop 32.0
      %v243 = vmul.f32 32.0, %v242
      %v244 = vsub.f32 1.0, %v243
      %v245 = vmul.f32 %v242, %v244
      %v246 = vadd.f32 %v242, %v245
      %vm247 = vweird.f32 %v242
      %v248 = vsel %vm247, %v242, %v246
      %v249 = vmul.f32 %v238, %v248
      %v250 = vmul.f32 %v241, %v248
      %v251 = vsub.f32 %v233, %v249
      %v252 = vsub.f32 %v234, %v250
      %v253 = vmul.f32 %v251, %v251
      %v254 = vmul.f32 %v252, %v252
      %v255 = vsel %vm235, %v253, 0.0
      %256 = vadd.xlane.f32.xlu0 %v255
      %v257 = vpop.xlane.xlu0 %256
      %v258 = vsel %vm235, %v254, 0.0
      %259 = vadd.xlane.f32.xlu0 %v258
      %v260 = vpop.xlane.xlu0 %259
      %v261 = vmul.f32 %v257, %v248
      %v262 = vmul.f32 %v260, %v248
      %v263 = vadd.f32 %v261, 1e-05
      %v264 = vadd.f32 %v262, 1e-05
      %v265 = vrsqrt.pop %v263
      %v266 = vmul.f32 %v265, %v263
      %v267 = vmul.f32 %v266, %v265
      %v268 = vmul.f32 0.5, %v267
      %v269 = vsub.f32 1.5, %v268
      %v270 = vmul.f32 %v265, %v269
      %vm271 = vweird.f32 %v263
      %vm272 = vweird.f32 %v265
      %vm273 = vmor %vm271, %vm272
      %v274 = vsel %vm273, %v265, %v270
      %v275 = vrsqrt.pop %v264
      %v276 = vmul.f32 %v275, %v264
      %v277 = vmul.f32 %v276, %v275
      %v278 = vmul.f32 0.5, %v277
      %v279 = vsub.f32 1.5, %v278
      %v280 = vmul.f32 %v275, %v279
      %vm281 = vweird.f32 %v264
      %vm282 = vweird.f32 %v275
      %vm283 = vmor %vm281, %vm282
      %v284 = vsel %vm283, %v275, %v280
      %v285 = vmul.f32 %v251, %v274
      %v286 = vmul.f32 %v252, %v284
      %v287 = vld [vmem:[%s1] sm:$0x1]
      %v289 = vperm.slane %v287, 0
      %v291 = vmul.f32 %v285, %v289
      %v292 = vmul.f32 %v286, %v289
      %v293 = vld [vmem:[%s2] sm:$0x1]
      %v295 = vperm.slane %v293, 0
      %v297 = vadd.f32 %v291, %v295
      %v298 = vadd.f32 %v292, %v295
      %v299 = vpack.c.bf16 %v298, %v297
      %v300 = vld [vmem:[%s3] sm:$0xff]
      %v301 = vld [vmem:[%s3 + $0x8] sm:$0xff]
      %v302 = vld [vmem:[%s3 + $0x10] sm:$0xff]
      %v303 = vld [vmem:[%s3 + $0x18] sm:$0xff]
      %v304 = vld [vmem:[%s4] sm:$0x3]
      %v306 = vperm.slane %v304, 0
      %v307 = vperm.slane %v304, 1
      %v314 = vunpack.c.l.b16 %v300
      %v315 = vunpack.c.h.b16 %v300
      %v316 = vunpack.c.l.b16 %v301
      %v317 = vunpack.c.h.b16 %v301
      %v318 = vunpack.c.l.b16 %v302
      %v319 = vunpack.c.h.b16 %v302
      %v320 = vunpack.c.l.b16 %v303
      %v321 = vunpack.c.h.b16 %v303
      %v322 = vpack.c.b16 %v316, %v314
      %v323 = vpack.c.b16 %v317, %v315
      %v324 = vpack.c.b16 %v320, %v318
      %v325 = vpack.c.b16 %v321, %v319
      %v331 = vsel %vm235, %v299, 0
      %333 = vmatpush.bf16.msra.mxu0 0
      %334 = vmatpush.bf16.msra.mxu0 0
      %335 = vmatpush.bf16.msra.mxu0 0
      %336 = vmatpush.bf16.msra.mxu0 0
      %337 = vmatpush.bf16.msra.mxu0 0
      %338 = vmatpush.bf16.msra.mxu0 0
      %339 = vmatpush.bf16.msra.mxu0 %v324
      %340 = vmatpush.bf16.msra.mxu0 %v322
      %341 = vmatmul.bf16.gmra.mxu0 %v331
      %v342 = vpop.f32.mrf.mxu0
      %v343 = vadd.f32 %v306, %v342
      %v344 = vpop.f32.mrf.mxu0
      %v345 = vadd.f32 %v306, %v344
      %346 = vdwg.mxu0
      %347 = vmatpush.bf16.msra.mxu0 0
      %348 = vmatpush.bf16.msra.mxu0 0
      %349 = vmatpush.bf16.msra.mxu0 0
      %350 = vmatpush.bf16.msra.mxu0 0
      %351 = vmatpush.bf16.msra.mxu0 0
      %352 = vmatpush.bf16.msra.mxu0 0
      %353 = vmatpush.bf16.msra.mxu0 %v325
      %354 = vmatpush.bf16.msra.mxu0 %v323
      %355 = vmatmul.bf16.gmra.mxu0 %v331
      %v356 = vpop.f32.mrf.mxu0
      %v357 = vadd.f32 %v307, %v356
      %v358 = vpop.f32.mrf.mxu0
      %v359 = vadd.f32 %v307, %v358
      %360 = vdwg.mxu0
      %v361 = vmul.f32 %v343, 0.5
      %v362 = vmul.f32 %v357, 0.5
      %v363 = vmul.f32 %v345, 0.5
      %v364 = vmul.f32 %v359, 0.5
      %v365 = vmul.f32 %v343, 0.70710677
      %v366 = vmul.f32 %v357, 0.70710677
      %v367 = vmul.f32 %v345, 0.70710677
      %v368 = vmul.f32 %v359, 0.70710677
      %v369 = vmul.f32 %v365, %v365
      %v370 = vmin.f32 16.0, %v369
      %v371 = vmul.f32 %v370, 2.1237322e-06
      %v372 = vadd.f32 %v371, 0.00028619796
      %v373 = vmul.f32 %v370, %v372
      %v374 = vadd.f32 %v373, 0.0036580483
      %v375 = vmul.f32 %v370, %v374
      %v376 = vadd.f32 %v375, 0.05243302
      %v377 = vmul.f32 %v370, %v376
      %v378 = vadd.f32 %v377, 0.18741608
      %v379 = vmul.f32 %v370, %v378
      %v380 = vadd.f32 %v379, 1.1283791
      %v381 = vmul.f32 %v365, %v380
      %v382 = vmul.f32 %v370, 3.8918573e-05
      %v383 = vadd.f32 %v382, 0.001143296
      %v384 = vmul.f32 %v370, %v383
      %v385 = vadd.f32 %v384, 0.014752088
      %v386 = vmul.f32 %v370, %v385
      %v387 = vadd.f32 %v386, 0.112945676
      %v388 = vmul.f32 %v370, %v387
      %v389 = vadd.f32 %v388, 0.4994258
      %v390 = vmul.f32 %v370, %v389
      %v391 = vadd.f32 %v390, 1.0
      %v392 = vrcp.pop %v391
      %v393 = vmul.f32 %v391, %v392
      %v394 = vsub.f32 1.0, %v393
      %v395 = vmul.f32 %v392, %v394
      %v396 = vadd.f32 %v392, %v395
      %vm397 = vweird.f32 %v391
      %vm398 = vweird.f32 %v392
      %vm399 = vmor %vm397, %vm398
      %v400 = vsel %vm399, %v392, %v396
      %v401 = vand.u32 2147483647, %v391
      %vm402 = vcmp.eq.f32.partialorder %v401, 8.507059e+37
      %v403 = vand.u32 %v391, 2147483648
      %v404 = vor.u32 1.1754944e-38, %v403
      %v405 = vsel %vm402, %v404, %v400
      %v406 = vmul.f32 %v381, %v405
      %v407 = vmin.f32 %v406, 1.0
      %v408 = vmax.f32 %v407, -1.0
      %v409 = vmul.f32 %v366, %v366
      %v410 = vmin.f32 16.0, %v409
      %v411 = vmul.f32 %v410, 2.1237322e-06
      %v412 = vadd.f32 %v411, 0.00028619796
      %v413 = vmul.f32 %v410, %v412
      %v414 = vadd.f32 %v413, 0.0036580483
      %v415 = vmul.f32 %v410, %v414
      %v416 = vadd.f32 %v415, 0.05243302
      %v417 = vmul.f32 %v410, %v416
      %v418 = vadd.f32 %v417, 0.18741608
      %v419 = vmul.f32 %v410, %v418
      %v420 = vadd.f32 %v419, 1.1283791
      %v421 = vmul.f32 %v366, %v420
      %v422 = vmul.f32 %v410, 3.8918573e-05
      %v423 = vadd.f32 %v422, 0.001143296
      %v424 = vmul.f32 %v410, %v423
      %v425 = vadd.f32 %v424, 0.014752088
      %v426 = vmul.f32 %v410, %v425
      %v427 = vadd.f32 %v426, 0.112945676
      %v428 = vmul.f32 %v410, %v427
      %v429 = vadd.f32 %v428, 0.4994258
      %v430 = vmul.f32 %v410, %v429
      %v431 = vadd.f32 %v430, 1.0
      %v432 = vrcp.pop %v431
      %v433 = vmul.f32 %v431, %v432
      %v434 = vsub.f32 1.0, %v433
      %v435 = vmul.f32 %v432, %v434
      %v436 = vadd.f32 %v432, %v435
      %vm437 = vweird.f32 %v431
      %vm438 = vweird.f32 %v432
      %vm439 = vmor %vm437, %vm438
      %v440 = vsel %vm439, %v432, %v436
      %v441 = vand.u32 2147483647, %v431
      %vm442 = vcmp.eq.f32.partialorder %v441, 8.507059e+37
      %v443 = vand.u32 %v431, 2147483648
      %v444 = vor.u32 1.1754944e-38, %v443
      %v445 = vsel %vm442, %v444, %v440
      %v446 = vmul.f32 %v421, %v445
      %v447 = vmin.f32 %v446, 1.0
      %v448 = vmax.f32 %v447, -1.0
      %v449 = vmul.f32 %v367, %v367
      %v450 = vmin.f32 16.0, %v449
      %v451 = vmul.f32 %v450, 2.1237322e-06
      %v452 = vadd.f32 %v451, 0.00028619796
      %v453 = vmul.f32 %v450, %v452
      %v454 = vadd.f32 %v453, 0.0036580483
      %v455 = vmul.f32 %v450, %v454
      %v456 = vadd.f32 %v455, 0.05243302
      %v457 = vmul.f32 %v450, %v456
      %v458 = vadd.f32 %v457, 0.18741608
      %v459 = vmul.f32 %v450, %v458
      %v460 = vadd.f32 %v459, 1.1283791
      %v461 = vmul.f32 %v367, %v460
      %v462 = vmul.f32 %v450, 3.8918573e-05
      %v463 = vadd.f32 %v462, 0.001143296
      %v464 = vmul.f32 %v450, %v463
      %v465 = vadd.f32 %v464, 0.014752088
      %v466 = vmul.f32 %v450, %v465
      %v467 = vadd.f32 %v466, 0.112945676
      %v468 = vmul.f32 %v450, %v467
      %v469 = vadd.f32 %v468, 0.4994258
      %v470 = vmul.f32 %v450, %v469
      %v471 = vadd.f32 %v470, 1.0
      %v472 = vrcp.pop %v471
      %v473 = vmul.f32 %v471, %v472
      %v474 = vsub.f32 1.0, %v473
      %v475 = vmul.f32 %v472, %v474
      %v476 = vadd.f32 %v472, %v475
      %vm477 = vweird.f32 %v471
      %vm478 = vweird.f32 %v472
      %vm479 = vmor %vm477, %vm478
      %v480 = vsel %vm479, %v472, %v476
      %v481 = vand.u32 2147483647, %v471
      %vm482 = vcmp.eq.f32.partialorder %v481, 8.507059e+37
      %v483 = vand.u32 %v471, 2147483648
      %v484 = vor.u32 1.1754944e-38, %v483
      %v485 = vsel %vm482, %v484, %v480
      %v486 = vmul.f32 %v461, %v485
      %v487 = vmin.f32 %v486, 1.0
      %v488 = vmax.f32 %v487, -1.0
      %v489 = vmul.f32 %v368, %v368
      %v490 = vmin.f32 16.0, %v489
      %v491 = vmul.f32 %v490, 2.1237322e-06
      %v492 = vadd.f32 %v491, 0.00028619796
      %v493 = vmul.f32 %v490, %v492
      %v494 = vadd.f32 %v493, 0.0036580483
      %v495 = vmul.f32 %v490, %v494
      %v496 = vadd.f32 %v495, 0.05243302
      %v497 = vmul.f32 %v490, %v496
      %v498 = vadd.f32 %v497, 0.18741608
      %v499 = vmul.f32 %v490, %v498
      %v500 = vadd.f32 %v499, 1.1283791
      %v501 = vmul.f32 %v368, %v500
      %v502 = vmul.f32 %v490, 3.8918573e-05
      %v503 = vadd.f32 %v502, 0.001143296
      %v504 = vmul.f32 %v490, %v503
      %v505 = vadd.f32 %v504, 0.014752088
      %v506 = vmul.f32 %v490, %v505
      %v507 = vadd.f32 %v506, 0.112945676
      %v508 = vmul.f32 %v490, %v507
      %v509 = vadd.f32 %v508, 0.4994258
      %v510 = vmul.f32 %v490, %v509
      %v511 = vadd.f32 %v510, 1.0
      %v512 = vrcp.pop %v511
      %v513 = vmul.f32 %v511, %v512
      %v514 = vsub.f32 1.0, %v513
      %v515 = vmul.f32 %v512, %v514
      %v516 = vadd.f32 %v512, %v515
      %vm517 = vweird.f32 %v511
      %vm518 = vweird.f32 %v512
      %vm519 = vmor %vm517, %vm518
      %v520 = vsel %vm519, %v512, %v516
      %v521 = vand.u32 2147483647, %v511
      %vm522 = vcmp.eq.f32.partialorder %v521, 8.507059e+37
      %v523 = vand.u32 %v511, 2147483648
      %v524 = vor.u32 1.1754944e-38, %v523
      %v525 = vsel %vm522, %v524, %v520
      %v526 = vmul.f32 %v501, %v525
      %v527 = vmin.f32 %v526, 1.0
      %v528 = vmax.f32 %v527, -1.0
      %v529 = vadd.f32 %v408, 1.0
      %v530 = vadd.f32 %v448, 1.0
      %v531 = vadd.f32 %v488, 1.0
      %v532 = vadd.f32 %v528, 1.0
      %v533 = vmul.f32 %v361, %v529
      %v534 = vmul.f32 %v362, %v530
      %v535 = vmul.f32 %v363, %v531
      %v536 = vmul.f32 %v364, %v532
      %v537 = vpack.c.bf16 %v534, %v533
      %v538 = vpack.c.bf16 %v536, %v535
      %539 = vst [vmem:[%s228] sm:$0xff] %v537
      %540 = vst [vmem:[%s228 + $0x8] sm:$0xff] %v538
      %s541 = smul.u32 2, %s16
      %p542 = scmp.lt.s32.totalorder %s541, 3
      %s543 = scalar_select %p542, %s541, 3
      %s544 = smul.addr %s543, 2
      %s545 = smul.addr %s544, 4
      %s546 = scalar_lea.vmem %s5, %s545
      // Predicated region
      $region41: #{vit_forward.16} parent=39 // pred_check
        %p547 = pneg %p144
      $region42: #{vit_forward.16} parent=39 // pred_check_branch
        %549 = sbr.rel (%p547) target = $region44
      $region43: #{vit_forward.16} parent=39 // pred_region
        %s550 = smul.u32 2, %s16
      $region44: #{vit_forward.16} parent=39 // pred_fallthru
        _
    $region40: #{vit_forward.16} parent=5 // pred_fallthru
      _
    %p551 = scmp.le.s32.totalorder 2, %s11
    // Predicated region
    $region45: #{vit_forward.16} parent=5 // pred_check
      %p552 = pneg %p551
    $region46: #{vit_forward.16} parent=5 // pred_check_branch
      %554 = sbr.rel (%p552) target = $region48
    $region47: #{vit_forward.16} parent=5 // pred_region
      %s555 = ssub.s32 %s11, 2
      // Predicated region
      $region49: #{vit_forward.16} parent=47 // pred_check
        %p556 = pneg %p150
      $region50: #{vit_forward.16} parent=47 // pred_check_branch
        %558 = sbr.rel (%p556) target = $region52
      $region51: #{vit_forward.16} parent=47 // pred_region
        %s559 = smul.u32 2, %s17
        %p560 = scmp.lt.s32.totalorder %s559, 3
        %s561 = scalar_select %p560, %s559, 3
        %s562 = smul.addr %s561, 2
        %s563 = smul.addr %s562, 4
        %s564 = scalar_lea.vmem %s5, %s563
      $region52: #{vit_forward.16} parent=47 // pred_fallthru
        _
    $region48: #{vit_forward.16} parent=5 // pred_fallthru
      _
  $region6: #{vit_forward.16} parent=0 // loop_footer
    %s15 = sadd.s32 1, %s11
  $region7: #{vit_forward.16} parent=0 // loop_footer_branch
    %10 = sbr.rel target = $region3
  $region8: #{vit_forward.16} parent=0 // loop_exit
    _

// kernel: vit_forward.17
$region0: #{vit_forward.17}
  #allocation0 [shape = 'u32[]', space=smem, size = 0x4, offset = 0x4, fixed_abs, tag = 'smem constant byte address 0x4 - core index']
  #allocation1 [shape = 'u32[72,128]{1,0:T(1,128)}', space=vmem, size = 0x9000, scoped, tag = 'internal scratch']
  %s0 = inlined_call_operand.vmem [shape: bf16[32,64], index: 0, kind: input, shape index: {}]
  %s1 = inlined_call_operand.vmem [shape: bf16[64,256], index: 1, kind: input, shape index: {}]
  %s2 = inlined_call_operand.vmem [shape: f32[1,256], index: 2, kind: input, shape index: {}]
  %s3 = inlined_call_operand.vmem [shape: bf16[32,32], index: 3, kind: input, shape index: {}]
  %s4 = inlined_call_operand.vmem [shape: bf16[32,256], index: 4, kind: output, shape index: {}]
  %s5 = sld [smem:[#allocation0]]
  $region49: #{vit_forward.17} parent=0
    _
  %s7 = ssub.s32 1, %s5
  %s8 = scalar_select 0, %s7, %s5
  loop: start=0, step=1, limit=4
  $region2: #{vit_forward.17} parent=0 // loop_pre_header
    _
  $region3: #{vit_forward.17} parent=0 // loop_header
    %s10 = sphi 0, %s14
    %p11 = scmp.ge.s32.totalorder %s10, 4
    %s20 = sphi 0, %s22
    %s23 = sphi 0, %s20
    %s24 = sphi 0, %s23
    %s40 = sphi 0, %s24
    %s44 = sphi 0, %s44
    %s46 = sphi 0, %s44
    %s47 = sphi 0, %s46
    %s61 = sphi 0, %s47
    %s65 = sphi 0, %s65
    %s67 = sphi 0, %s65
    %s68 = sphi 0, %s67
    %s82 = sphi 0, %s68
    %s88 = sphi 0, %s90
    %s91 = sphi 0, %s88
    %s92 = sphi 0, %s91
    %s108 = sphi 0, %s92
    %s114 = sphi 0, %s116
    %s117 = sphi 0, %s114
    %s118 = sphi 0, %s117
    %s134 = sphi 0, %s118
  $region4: #{vit_forward.17} parent=0 // loop_header_branch
    %13 = sbr.rel (%p11) target = $region8
  $region5: #{vit_forward.17} parent=0 // loop_body
    %s15 = ssub.s32 %s10, 1
    %s16 = ssub.s32 %s10, 2
    %s17 = sadd.s32 %s10, 1
    %s18 = ssub.s32 %s10, %s17
    %p19 = scmp.eq.s32.totalorder %s18, 0
    %s21 = sadd.s32 %s20, 1
    %s22 = scalar_select %p19, %s20, %s21
    %p25 = pneg %p19
    %p26 = scmp.eq.s32.totalorder %s10, 1
    %p27 = por %p25, %p26
    %p28 = scmp.ne.s32.totalorder %s20, %s23
    %p29 = scmp.eq.s32.totalorder %s10, 0
    %p30 = por %p28, %p29
    %p31 = scmp.ne.s32.totalorder %s20, %s23
    %p32 = scmp.eq.s32.totalorder %s15, 1
    %p33 = por %p31, %p32
    %p34 = scmp.ne.s32.totalorder %s23, %s24
    %p35 = scmp.eq.s32.totalorder %s15, 0
    %p36 = por %p34, %p35
    %p37 = scmp.ne.s32.totalorder %s23, %s24
    %p38 = scmp.eq.s32.totalorder %s16, 1
    %p39 = por %p37, %p38
    %p41 = scmp.ne.s32.totalorder %s24, %s40
    %p42 = scmp.eq.s32.totalorder %s16, 0
    %p43 = por %p41, %p42
    %s45 = sadd.s32 %s44, 1
    %p48 = scmp.eq.s32.totalorder %s10, 1
    %p49 = scmp.ne.s32.totalorder %s44, %s46
    %p50 = scmp.eq.s32.totalorder %s10, 0
    %p51 = por %p49, %p50
    %p52 = scmp.ne.s32.totalorder %s44, %s46
    %p53 = scmp.eq.s32.totalorder %s15, 1
    %p54 = por %p52, %p53
    %p55 = scmp.ne.s32.totalorder %s46, %s47
    %p56 = scmp.eq.s32.totalorder %s15, 0
    %p57 = por %p55, %p56
    %p58 = scmp.ne.s32.totalorder %s46, %s47
    %p59 = scmp.eq.s32.totalorder %s16, 1
    %p60 = por %p58, %p59
    %p62 = scmp.ne.s32.totalorder %s47, %s61
    %p63 = scmp.eq.s32.totalorder %s16, 0
    %p64 = por %p62, %p63
    %s66 = sadd.s32 %s65, 1
    %p69 = scmp.eq.s32.totalorder %s10, 1
    %p70 = scmp.ne.s32.totalorder %s65, %s67
    %p71 = scmp.eq.s32.totalorder %s10, 0
    %p72 = por %p70, %p71
    %p73 = scmp.ne.s32.totalorder %s65, %s67
    %p74 = scmp.eq.s32.totalorder %s15, 1
    %p75 = por %p73, %p74
    %p76 = scmp.ne.s32.totalorder %s67, %s68
    %p77 = scmp.eq.s32.totalorder %s15, 0
    %p78 = por %p76, %p77
    %p79 = scmp.ne.s32.totalorder %s67, %s68
    %p80 = scmp.eq.s32.totalorder %s16, 1
    %p81 = por %p79, %p80
    %p83 = scmp.ne.s32.totalorder %s68, %s82
    %p84 = scmp.eq.s32.totalorder %s16, 0
    %p85 = por %p83, %p84
    %s86 = ssub.s32 %s10, %s17
    %p87 = scmp.eq.s32.totalorder %s86, 0
    %s89 = sadd.s32 %s88, 1
    %s90 = scalar_select %p87, %s88, %s89
    %p93 = pneg %p87
    %p94 = scmp.eq.s32.totalorder %s10, 1
    %p95 = por %p93, %p94
    %p96 = scmp.ne.s32.totalorder %s88, %s91
    %p97 = scmp.eq.s32.totalorder %s10, 0
    %p98 = por %p96, %p97
    %p99 = scmp.ne.s32.totalorder %s88, %s91
    %p100 = scmp.eq.s32.totalorder %s15, 1
    %p101 = por %p99, %p100
    %p102 = scmp.ne.s32.totalorder %s91, %s92
    %p103 = scmp.eq.s32.totalorder %s15, 0
    %p104 = por %p102, %p103
    %p105 = scmp.ne.s32.totalorder %s91, %s92
    %p106 = scmp.eq.s32.totalorder %s16, 1
    %p107 = por %p105, %p106
    %p109 = scmp.ne.s32.totalorder %s92, %s108
    %p110 = scmp.eq.s32.totalorder %s16, 0
    %p111 = por %p109, %p110
    %s112 = ssub.s32 %s10, %s17
    %p113 = scmp.eq.s32.totalorder %s112, 0
    %s115 = sadd.s32 %s114, 1
    %s116 = scalar_select %p113, %s114, %s115
    %p119 = pneg %p113
    %p120 = scmp.eq.s32.totalorder %s10, 1
    %p121 = por %p119, %p120
    %p122 = scmp.ne.s32.totalorder %s114, %s117
    %p123 = scmp.eq.s32.totalorder %s10, 0
    %p124 = por %p122, %p123
    %p125 = scmp.ne.s32.totalorder %s114, %s117
    %p126 = scmp.eq.s32.totalorder %s15, 1
    %p127 = por %p125, %p126
    %p128 = scmp.ne.s32.totalorder %s117, %s118
    %p129 = scmp.eq.s32.totalorder %s15, 0
    %p130 = por %p128, %p129
    %p131 = scmp.ne.s32.totalorder %s117, %s118
    %p132 = scmp.eq.s32.totalorder %s16, 1
    %p133 = por %p131, %p132
    %p135 = scmp.ne.s32.totalorder %s118, %s134
    %p136 = scmp.eq.s32.totalorder %s16, 0
    %p137 = por %p135, %p136
    %p138 = scmp.le.s32.totalorder 1, %s10
    %p139 = scmp.lt.s32.totalorder %s10, 3
    %p140 = pnand %p138, %p139
    %p141 = pneg %p140
    // Predicated region
    $region9: #{vit_forward.17} parent=5 // pred_check
      _
    $region10: #{vit_forward.17} parent=5 // pred_check_branch
      %143 = sbr.rel (%p140) target = $region12
    $region11: #{vit_forward.17} parent=5 // pred_region
      %s144 = ssub.s32 %s10, 1
      // Predicated region
      $region13: #{vit_forward.17} parent=11 // pred_check
        %p145 = pneg %p57
      $region14: #{vit_forward.17} parent=11 // pred_check_branch
        %147 = sbr.rel (%p145) target = $region16
      $region15: #{vit_forward.17} parent=11 // pred_region
        _
      $region16: #{vit_forward.17} parent=11 // pred_fallthru
        _
      // Predicated region
      $region17: #{vit_forward.17} parent=11 // pred_check
        %p148 = pneg %p78
      $region18: #{vit_forward.17} parent=11 // pred_check_branch
        %150 = sbr.rel (%p148) target = $region20
      $region19: #{vit_forward.17} parent=11 // pred_region
        _
      $region20: #{vit_forward.17} parent=11 // pred_fallthru
        _
    $region12: #{vit_forward.17} parent=5 // pred_fallthru
      _
    %p151 = scmp.lt.s32.totalorder %s10, 2
    // Predicated region
    $region21: #{vit_forward.17} parent=5 // pred_check
      %p152 = pneg %p151
    $region22: #{vit_forward.17} parent=5 // pred_check_branch
      %154 = sbr.rel (%p152) target = $region24
    $region23: #{vit_forward.17} parent=5 // pred_region
      // Predicated region
      $region25: #{vit_forward.17} parent=23 // pred_check
        %p155 = pneg %p30
      $region26: #{vit_forward.17} parent=23 // pred_check_branch
        %157 = sbr.rel (%p155) target = $region28
      $region27: #{vit_forward.17} parent=23 // pred_region
        %s158 = smul.u32 2, %s10
        %p159 = scmp.lt.s32.totalorder %s158, 3
        %s160 = scalar_select %p159, %s158, 3
        %s161 = smul.addr %s160, 4
        %s162 = scalar_lea.vmem %s0, %s161
        %s163 = smul.u32 2, %s10
      $region28: #{vit_forward.17} parent=23 // pred_fallthru
        _
      // Predicated region
      $region29: #{vit_forward.17} parent=23 // pred_check
        %p164 = pneg %p98
      $region30: #{vit_forward.17} parent=23 // pred_check_branch
        %166 = sbr.rel (%p164) target = $region32
      $region31: #{vit_forward.17} parent=23 // pred_region
        %s167 = smul.u32 2, %s10
        %p168 = scmp.lt.s32.totalorder %s167, 3
        %s169 = scalar_select %p168, %s167, 3
        %s170 = smul.addr %s169, 4
        %s171 = scalar_lea.vmem %s3, %s170
        %s172 = smul.u32 2, %s10
      $region32: #{vit_forward.17} parent=23 // pred_fallthru
        _
    $region24: #{vit_forward.17} parent=5 // pred_fallthru
      _
    %p173 = scmp.le.s32.totalorder 1, %s10
    %p174 = scmp.lt.s32.totalorder %s10, 3
    %p175 = pnand %p173, %p174
    %p176 = pneg %p175
    // Predicated region
    $region33: #{vit_forward.17} parent=5 // pred_check
      _
    $region34: #{vit_forward.17} parent=5 // pred_check_branch
      %178 = sbr.rel (%p175) target = $region36
    $region35: #{vit_forward.17} parent=5 // pred_region
      %s179 = ssub.s32 %s10, 1
      %s180 = smul.u32 2, %s15
      %p181 = scmp.lt.s32.totalorder %s180, 3
      %s182 = scalar_select %p181, %s180, 3
      %s183 = smul.addr %s182, 4
      %s184 = scalar_lea.vmem %s0, %s183
      %p185 = pneg %p36
      %p186 = pneg %p33
      %p187 = pneg %p57
      %p188 = pneg %p54
      %p189 = pneg %p78
      %p190 = pneg %p75
      %s191 = smul.u32 2, %s15
      %p192 = scmp.lt.s32.totalorder %s191, 3
      %s193 = scalar_select %p192, %s191, 3
      %s194 = smul.addr %s193, 4
      %s195 = scalar_lea.vmem %s3, %s194
      %p196 = pneg %p104
      %p197 = pneg %p101
      %p198 = pneg %p130
      %p199 = pneg %p127
      %s200 = smul.u32 2, %s15
      %p201 = scmp.lt.s32.totalorder %s200, 3
      %s202 = scalar_select %p201, %s200, 3
      %s203 = smul.addr %s202, 2
      %s204 = smul.addr %s203, 4
      %s205 = scalar_lea.vmem %s4, %s204
      %s206 = smul.u32 2, %s15
      %p207 = scmp.lt.s32.totalorder %s206, 3
      %s208 = scalar_select %p207, %s206, 3
      %s209 = smul.addr %s208, 4
      %s210 = scalar_lea.vmem %s0, %s209
      %s211 = smul.u32 2, %s15
      %s212 = smul.u32 2, %s15
      %p213 = scmp.lt.s32.totalorder %s212, 3
      %s214 = scalar_select %p213, %s212, 3
      %s215 = smul.addr %s214, 4
      %s216 = scalar_lea.vmem %s3, %s215
      %s217 = smul.u32 2, %s15
      %s218 = smul.u32 2, %s15
      %p219 = scmp.lt.s32.totalorder %s218, 3
      %s220 = scalar_select %p219, %s218, 3
      %s221 = smul.addr %s220, 2
      %s222 = smul.addr %s221, 4
      %s223 = scalar_lea.vmem %s4, %s222
      %s224 = smul.u32 2, %s15
      %v226 = vld [vmem:[%s210] sm:$0xf]
      %v227 = vld [vmem:[%s210 + $0x4] sm:$0xf]
      %v228 = vld [vmem:[%s1] sm:$0xff]
      %v229 = vld [vmem:[%s1 + $0x8] sm:$0xff]
      %v230 = vld [vmem:[%s1 + $0x10] sm:$0xff]
      %v231 = vld [vmem:[%s1 + $0x18] sm:$0xff]
      %v232 = vld [vmem:[%s1 + $0x20] sm:$0xff]
      %v233 = vld [vmem:[%s1 + $0x28] sm:$0xff]
      %v234 = vld [vmem:[%s1 + $0x30] sm:$0xff]
      %v235 = vld [vmem:[%s1 + $0x38] sm:$0xff]
      %v236 = vld [vmem:[%s2] sm:$0x3]
      %v238 = vperm.slane %v236, 0
      %v239 = vperm.slane %v236, 1
      %v244 = vunpack.c.l.b16 %v226
      %v245 = vunpack.c.l.b16 %v227
      %v246 = vpack.c.b16 %v245, %v244
      %v255 = vunpack.c.l.b16 %v228
      %v256 = vunpack.c.h.b16 %v228
      %v257 = vunpack.c.l.b16 %v229
      %v258 = vunpack.c.h.b16 %v229
      %v259 = vunpack.c.l.b16 %v230
      %v260 = vunpack.c.h.b16 %v230
      %v261 = vunpack.c.l.b16 %v231
      %v262 = vunpack.c.h.b16 %v231
      %v263 = vunpack.c.l.b16 %v232
      %v264 = vunpack.c.h.b16 %v232
      %v265 = vunpack.c.l.b16 %v233
      %v266 = vunpack.c.h.b16 %v233
      %v267 = vunpack.c.l.b16 %v234
      %v268 = vunpack.c.h.b16 %v234
      %v269 = vunpack.c.l.b16 %v235
      %v270 = vunpack.c.h.b16 %v235
      %v271 = vpack.c.b16 %v257, %v255
      %v272 = vpack.c.b16 %v258, %v256
      %v273 = vpack.c.b16 %v261, %v259
      %v274 = vpack.c.b16 %v262, %v260
      %v275 = vpack.c.b16 %v265, %v263
      %v276 = vpack.c.b16 %v266, %v264
      %v277 = vpack.c.b16 %v269, %v267
      %v278 = vpack.c.b16 %v270, %v268
      %vm287 = vcmask 523264
      %v289 = vsel %vm287, %v246, 0
      %291 = vmatpush.bf16.msra.mxu0 0
      %292 = vmatpush.bf16.msra.mxu0 0
      %293 = vmatpush.bf16.msra.mxu0 0
      %294 = vmatpush.bf16.msra.mxu0 0
      %295 = vmatpush.bf16.msra.mxu0 %v277
      %296 = vmatpush.bf16.msra.mxu0 %v275
      %297 = vmatpush.bf16.msra.mxu0 %v273
      %298 = vmatpush.bf16.msra.mxu0 %v271
      %299 = vmatmul.bf16.gmra.mxu0 %v289
      %v300 = vpop.f32.mrf.mxu0
      %v301 = vadd.f32 %v238, %v300
      %v302 = vpop.f32.mrf.mxu0
      %v303 = vadd.f32 %v238, %v302
      %304 = vdwg.mxu0
      %305 = vmatpush.bf16.msra.mxu0 0
      %306 = vmatpush.bf16.msra.mxu0 0
      %307 = vmatpush.bf16.msra.mxu0 0
      %308 = vmatpush.bf16.msra.mxu0 0
      %309 = vmatpush.bf16.msra.mxu0 %v278
      %310 = vmatpush.bf16.msra.mxu0 %v276
      %311 = vmatpush.bf16.msra.mxu0 %v274
      %312 = vmatpush.bf16.msra.mxu0 %v272
      %313 = vmatmul.bf16.gmra.mxu0 %v289
      %v314 = vpop.f32.mrf.mxu0
      %v315 = vadd.f32 %v239, %v314
      %v316 = vpop.f32.mrf.mxu0
      %v317 = vadd.f32 %v239, %v316
      %318 = vdwg.mxu0
      %v319 = vld [vmem:[%s216] sm:$0xf]
      %v320 = vld [vmem:[%s216 + $0x4] sm:$0xf]
      %v321 = vunpack.c.l.bf16 %v319
      %v322 = vunpack.c.l.bf16 %v320
      %vm323 = vcmask 261120
      %v324 = vsel %vm323, %v321, 0.0
      %v325 = vsel %vm323, %v322, 0.0
      %v326 = vadd.f32 %v301, %v324
      %v327 = vadd.f32 %v315, 0.0
      %v328 = vadd.f32 %v303, %v325
      %v329 = vadd.f32 %v317, 0.0
      %v330 = vpack.c.bf16 %v327, %v326
      %v331 = vpack.c.bf16 %v329, %v328
      %332 = vst [vmem:[%s223] sm:$0xff] %v330
      %333 = vst [vmem:[%s223 + $0x8] sm:$0xff] %v331
      %s334 = smul.u32 2, %s15
      %p335 = scmp.lt.s32.totalorder %s334, 3
      %s336 = scalar_select %p335, %s334, 3
      %s337 = smul.addr %s336, 2
      %s338 = smul.addr %s337, 4
      %s339 = scalar_lea.vmem %s4, %s338
      // Predicated region
      $region37: #{vit_forward.17} parent=35 // pred_check
        %p340 = pneg %p127
      $region38: #{vit_forward.17} parent=35 // pred_check_branch
        %342 = sbr.rel (%p340) target = $region40
      $region39: #{vit_forward.17} parent=35 // pred_region
        %s343 = smul.u32 2, %s15
      $region40: #{vit_forward.17} parent=35 // pred_fallthru
        _
    $region36: #{vit_forward.17} parent=5 // pred_fallthru
      _
    %p344 = scmp.le.s32.totalorder 2, %s10
    // Predicated region
    $region41: #{vit_forward.17} parent=5 // pred_check
      %p345 = pneg %p344
    $region42: #{vit_forward.17} parent=5 // pred_check_branch
      %347 = sbr.rel (%p345) target = $region44
    $region43: #{vit_forward.17} parent=5 // pred_region
      %s348 = ssub.s32 %s10, 2
      // Predicated region
      $region45: #{vit_forward.17} parent=43 // pred_check
        %p349 = pneg %p133
      $region46: #{vit_forward.17} parent=43 // pred_check_branch
        %351 = sbr.rel (%p349) target = $region48
      $region47: #{vit_forward.17} parent=43 // pred_region
        %s352 = smul.u32 2, %s16
        %p353 = scmp.lt.s32.totalorder %s352, 3
        %s354 = scalar_select %p353, %s352, 3
        %s355 = smul.addr %s354, 2
        %s356 = smul.addr %s355, 4
        %s357 = scalar_lea.vmem %s4, %s356
      $region48: #{vit_forward.17} parent=43 // pred_fallthru
        _
    $region44: #{vit_forward.17} parent=5 // pred_fallthru
      _
  $region6: #{vit_forward.17} parent=0 // loop_footer
    %s14 = sadd.s32 1, %s10
  $region7: #{vit_forward.17} parent=0 // loop_footer_branch
    %9 = sbr.rel target = $region3
  $region8: #{vit_forward.17} parent=0 // loop_exit
    _

// kernel: vit_forward.20
$region0: #{vit_forward.20}
  #allocation0 [shape = 'u32[]', space=smem, size = 0x4, offset = 0x4, fixed_abs, tag = 'smem constant byte address 0x4 - core index']
  #allocation1 [shape = 'u32[72,128]{1,0:T(1,128)}', space=vmem, size = 0x9000, scoped, tag = 'internal scratch']
  %s0 = inlined_call_operand.vmem [shape: bf16[16,32], index: 0, kind: input, shape index: {}]
  %s1 = inlined_call_operand.vmem [shape: bf16[32,256], index: 1, kind: input, shape index: {}]
  %s2 = inlined_call_operand.vmem [shape: f32[1,256], index: 2, kind: input, shape index: {}]
  %s3 = inlined_call_operand.vmem [shape: bf16[16,32], index: 3, kind: input, shape index: {}]
  %s4 = inlined_call_operand.vmem [shape: bf16[16,256], index: 4, kind: output, shape index: {}]
  %s5 = sld [smem:[#allocation0]]
  $region26: #{vit_forward.20} parent=0
    _
  %s7 = ssub.s32 1, %s5
  %s8 = scalar_select 0, %s7, %s5
  // Predicated region
  $region2: #{vit_forward.20} parent=0 // pred_check
    _
  $region3: #{vit_forward.20} parent=0 // pred_check_branch
    %10 = sbr.rel (0) target = $region5
  $region4: #{vit_forward.20} parent=0 // pred_region
    _
  $region5: #{vit_forward.20} parent=0 // pred_fallthru
    _
  // Predicated region
  $region6: #{vit_forward.20} parent=0 // pred_check
    _
  $region7: #{vit_forward.20} parent=0 // pred_check_branch
    %12 = sbr.rel (0) target = $region9
  $region8: #{vit_forward.20} parent=0 // pred_region
    _
  $region9: #{vit_forward.20} parent=0 // pred_fallthru
    _
  // Predicated region
  $region10: #{vit_forward.20} parent=0 // pred_check
    _
  $region11: #{vit_forward.20} parent=0 // pred_check_branch
    %14 = sbr.rel (0) target = $region13
  $region12: #{vit_forward.20} parent=0 // pred_region
    _
  $region13: #{vit_forward.20} parent=0 // pred_fallthru
    _
  // Predicated region
  $region14: #{vit_forward.20} parent=0 // pred_check
    _
  $region15: #{vit_forward.20} parent=0 // pred_check_branch
    %16 = sbr.rel (0) target = $region17
  $region16: #{vit_forward.20} parent=0 // pred_region
    _
  $region17: #{vit_forward.20} parent=0 // pred_fallthru
    _
  %v18 = vld [vmem:[%s0] sm:$0xf]
  %v19 = vld [vmem:[%s0 + $0x4] sm:$0xf]
  %v20 = vld [vmem:[%s1] sm:$0xff]
  %v21 = vld [vmem:[%s1 + $0x8] sm:$0xff]
  %v22 = vld [vmem:[%s1 + $0x10] sm:$0xff]
  %v23 = vld [vmem:[%s1 + $0x18] sm:$0xff]
  %v24 = vld [vmem:[%s2] sm:$0x3]
  %v26 = vperm.slane %v24, 0
  %v27 = vperm.slane %v24, 1
  %v32 = vunpack.c.l.b16 %v18
  %v33 = vunpack.c.l.b16 %v19
  %v34 = vpack.c.b16 %v33, %v32
  %v39 = vunpack.c.l.b16 %v20
  %v40 = vunpack.c.h.b16 %v20
  %v41 = vunpack.c.l.b16 %v21
  %v42 = vunpack.c.h.b16 %v21
  %v43 = vunpack.c.l.b16 %v22
  %v44 = vunpack.c.h.b16 %v22
  %v45 = vunpack.c.l.b16 %v23
  %v46 = vunpack.c.h.b16 %v23
  %v47 = vpack.c.b16 %v41, %v39
  %v48 = vpack.c.b16 %v42, %v40
  %v49 = vpack.c.b16 %v45, %v43
  %v50 = vpack.c.b16 %v46, %v44
  %vm55 = vcmask 261120
  %v57 = vsel %vm55, %v34, 0
  %59 = vmatpush.bf16.msra.mxu0 0
  %60 = vmatpush.bf16.msra.mxu0 0
  %61 = vmatpush.bf16.msra.mxu0 0
  %62 = vmatpush.bf16.msra.mxu0 0
  %63 = vmatpush.bf16.msra.mxu0 0
  %64 = vmatpush.bf16.msra.mxu0 0
  %65 = vmatpush.bf16.msra.mxu0 %v49
  %66 = vmatpush.bf16.msra.mxu0 %v47
  %67 = vmatmul.bf16.gmra.mxu0 %v57
  %v68 = vpop.f32.mrf.mxu0
  %v69 = vadd.f32 %v26, %v68
  %v70 = vpop.f32.mrf.mxu0
  %v71 = vadd.f32 %v26, %v70
  %72 = vdwg.mxu0
  %73 = vmatpush.bf16.msra.mxu0 0
  %74 = vmatpush.bf16.msra.mxu0 0
  %75 = vmatpush.bf16.msra.mxu0 0
  %76 = vmatpush.bf16.msra.mxu0 0
  %77 = vmatpush.bf16.msra.mxu0 0
  %78 = vmatpush.bf16.msra.mxu0 0
  %79 = vmatpush.bf16.msra.mxu0 %v50
  %80 = vmatpush.bf16.msra.mxu0 %v48
  %81 = vmatmul.bf16.gmra.mxu0 %v57
  %v82 = vpop.f32.mrf.mxu0
  %v83 = vadd.f32 %v27, %v82
  %v84 = vpop.f32.mrf.mxu0
  %v85 = vadd.f32 %v27, %v84
  %86 = vdwg.mxu0
  %v87 = vld [vmem:[%s3] sm:$0xf]
  %v88 = vld [vmem:[%s3 + $0x4] sm:$0xf]
  %v89 = vunpack.c.l.bf16 %v87
  %v90 = vunpack.c.l.bf16 %v88
  %v91 = vsel %vm55, %v89, 0.0
  %v92 = vsel %vm55, %v90, 0.0
  %v93 = vadd.f32 %v69, %v91
  %v94 = vadd.f32 %v83, 0.0
  %v95 = vadd.f32 %v71, %v92
  %v96 = vadd.f32 %v85, 0.0
  %v97 = vpack.c.bf16 %v94, %v93
  %v98 = vpack.c.bf16 %v96, %v95
  %99 = vst [vmem:[%s4] sm:$0xff] %v97
  %100 = vst [vmem:[%s4 + $0x8] sm:$0xff] %v98
  // Predicated region
  $region18: #{vit_forward.20} parent=0 // pred_check
    _
  $region19: #{vit_forward.20} parent=0 // pred_check_branch
    %102 = sbr.rel (0) target = $region21
  $region20: #{vit_forward.20} parent=0 // pred_region
    _
  $region21: #{vit_forward.20} parent=0 // pred_fallthru
    _
  // Predicated region
  $region22: #{vit_forward.20} parent=0 // pred_check
    _
  $region23: #{vit_forward.20} parent=0 // pred_check_branch
    %104 = sbr.rel (0) target = $region25
  $region24: #{vit_forward.20} parent=0 // pred_region
    _
  $region25: #{vit_forward.20} parent=0 // pred_fallthru
    _

// kernel: vit_forward.18
$region0: #{vit_forward.18}
  #allocation0 [shape = 'u32[]', space=smem, size = 0x4, offset = 0x4, fixed_abs, tag = 'smem constant byte address 0x4 - core index']
  #allocation1 [shape = 'u32[72,128]{1,0:T(1,128)}', space=vmem, size = 0x9000, scoped, tag = 'internal scratch']
  %s0 = inlined_call_operand.vmem [shape: bf16[16,32], index: 0, kind: input, shape index: {}]
  %s1 = inlined_call_operand.vmem [shape: f32[1,32], index: 1, kind: input, shape index: {}]
  %s2 = inlined_call_operand.vmem [shape: f32[1,32], index: 2, kind: input, shape index: {}]
  %s3 = inlined_call_operand.vmem [shape: bf16[32,256], index: 3, kind: input, shape index: {}]
  %s4 = inlined_call_operand.vmem [shape: bf16[16,256], index: 4, kind: output, shape index: {}]
  %s5 = sld [smem:[#allocation0]]
  $region26: #{vit_forward.18} parent=0
    _
  %s7 = ssub.s32 1, %s5
  %s8 = scalar_select 0, %s7, %s5
  // Predicated region
  $region2: #{vit_forward.18} parent=0 // pred_check
    _
  $region3: #{vit_forward.18} parent=0 // pred_check_branch
    %10 = sbr.rel (0) target = $region5
  $region4: #{vit_forward.18} parent=0 // pred_region
    _
  $region5: #{vit_forward.18} parent=0 // pred_fallthru
    _
  // Predicated region
  $region6: #{vit_forward.18} parent=0 // pred_check
    _
  $region7: #{vit_forward.18} parent=0 // pred_check_branch
    %12 = sbr.rel (0) target = $region9
  $region8: #{vit_forward.18} parent=0 // pred_region
    _
  $region9: #{vit_forward.18} parent=0 // pred_fallthru
    _
  // Predicated region
  $region10: #{vit_forward.18} parent=0 // pred_check
    _
  $region11: #{vit_forward.18} parent=0 // pred_check_branch
    %14 = sbr.rel (0) target = $region13
  $region12: #{vit_forward.18} parent=0 // pred_region
    _
  $region13: #{vit_forward.18} parent=0 // pred_fallthru
    _
  // Predicated region
  $region14: #{vit_forward.18} parent=0 // pred_check
    _
  $region15: #{vit_forward.18} parent=0 // pred_check_branch
    %16 = sbr.rel (0) target = $region17
  $region16: #{vit_forward.18} parent=0 // pred_region
    _
  $region17: #{vit_forward.18} parent=0 // pred_fallthru
    _
  %v18 = vld [vmem:[%s0] sm:$0xf]
  %v19 = vld [vmem:[%s0 + $0x4] sm:$0xf]
  %v20 = vunpack.c.l.bf16 %v18
  %v21 = vunpack.c.l.bf16 %v19
  %vm22 = vcmask 261120
  %v23 = vsel %vm22, %v20, 0.0
  %24 = vadd.xlane.f32.xlu0 %v23
  %v25 = vpop.xlane.xlu0 %24
  %v26 = vsel %vm22, %v21, 0.0
  %27 = vadd.xlane.f32.xlu0 %v26
  %v28 = vpop.xlane.xlu0 %27
  %v29 = vrcp.pop 32.0
  %v30 = vmul.f32 32.0, %v29
  %v31 = vsub.f32 1.0, %v30
  %v32 = vmul.f32 %v29, %v31
  %v33 = vadd.f32 %v29, %v32
  %vm34 = vweird.f32 %v29
  %v35 = vsel %vm34, %v29, %v33
  %v36 = vmul.f32 %v25, %v35
  %v37 = vmul.f32 %v28, %v35
  %v38 = vsub.f32 %v20, %v36
  %v39 = vsub.f32 %v21, %v37
  %v40 = vmul.f32 %v38, %v38
  %v41 = vmul.f32 %v39, %v39
  %v42 = vsel %vm22, %v40, 0.0
  %43 = vadd.xlane.f32.xlu0 %v42
  %v44 = vpop.xlane.xlu0 %43
  %v45 = vsel %vm22, %v41, 0.0
  %46 = vadd.xlane.f32.xlu0 %v45
  %v47 = vpop.xlane.xlu0 %46
  %v48 = vmul.f32 %v44, %v35
  %v49 = vmul.f32 %v47, %v35
  %v50 = vadd.f32 %v48, 1e-05
  %v51 = vadd.f32 %v49, 1e-05
  %v52 = vrsqrt.pop %v50
  %v53 = vmul.f32 %v52, %v50
  %v54 = vmul.f32 %v53, %v52
  %v55 = vmul.f32 0.5, %v54
  %v56 = vsub.f32 1.5, %v55
  %v57 = vmul.f32 %v52, %v56
  %vm58 = vweird.f32 %v50
  %vm59 = vweird.f32 %v52
  %vm60 = vmor %vm58, %vm59
  %v61 = vsel %vm60, %v52, %v57
  %v62 = vrsqrt.pop %v51
  %v63 = vmul.f32 %v62, %v51
  %v64 = vmul.f32 %v63, %v62
  %v65 = vmul.f32 0.5, %v64
  %v66 = vsub.f32 1.5, %v65
  %v67 = vmul.f32 %v62, %v66
  %vm68 = vweird.f32 %v51
  %vm69 = vweird.f32 %v62
  %vm70 = vmor %vm68, %vm69
  %v71 = vsel %vm70, %v62, %v67
  %v72 = vmul.f32 %v38, %v61
  %v73 = vmul.f32 %v39, %v71
  %v74 = vld [vmem:[%s1] sm:$0x1]
  %v76 = vperm.slane %v74, 0
  %v78 = vmul.f32 %v72, %v76
  %v79 = vmul.f32 %v73, %v76
  %v80 = vld [vmem:[%s2] sm:$0x1]
  %v82 = vperm.slane %v80, 0
  %v84 = vadd.f32 %v78, %v82
  %v85 = vadd.f32 %v79, %v82
  %v86 = vpack.c.bf16 %v85, %v84
  %v87 = vld [vmem:[%s3] sm:$0xff]
  %v88 = vld [vmem:[%s3 + $0x8] sm:$0xff]
  %v89 = vld [vmem:[%s3 + $0x10] sm:$0xff]
  %v90 = vld [vmem:[%s3 + $0x18] sm:$0xff]
  %v95 = vunpack.c.l.b16 %v87
  %v96 = vunpack.c.h.b16 %v87
  %v97 = vunpack.c.l.b16 %v88
  %v98 = vunpack.c.h.b16 %v88
  %v99 = vunpack.c.l.b16 %v89
  %v100 = vunpack.c.h.b16 %v89
  %v101 = vunpack.c.l.b16 %v90
  %v102 = vunpack.c.h.b16 %v90
  %v103 = vpack.c.b16 %v97, %v95
  %v104 = vpack.c.b16 %v98, %v96
  %v105 = vpack.c.b16 %v101, %v99
  %v106 = vpack.c.b16 %v102, %v100
  %v112 = vsel %vm22, %v86, 0
  %114 = vmatpush.bf16.msra.mxu0 0
  %115 = vmatpush.bf16.msra.mxu0 0
  %116 = vmatpush.bf16.msra.mxu0 0
  %117 = vmatpush.bf16.msra.mxu0 0
  %118 = vmatpush.bf16.msra.mxu0 0
  %119 = vmatpush.bf16.msra.mxu0 0
  %120 = vmatpush.bf16.msra.mxu0 %v105
  %121 = vmatpush.bf16.msra.mxu0 %v103
  %122 = vmatmul.bf16.gmra.mxu0 %v112
  %v123 = vpop.f32.mrf.mxu0
  %v124 = vadd.f32 0.0, %v123
  %v125 = vpop.f32.mrf.mxu0
  %v126 = vadd.f32 0.0, %v125
  %127 = vdwg.mxu0
  %128 = vmatpush.bf16.msra.mxu0 0
  %129 = vmatpush.bf16.msra.mxu0 0
  %130 = vmatpush.bf16.msra.mxu0 0
  %131 = vmatpush.bf16.msra.mxu0 0
  %132 = vmatpush.bf16.msra.mxu0 0
  %133 = vmatpush.bf16.msra.mxu0 0
  %134 = vmatpush.bf16.msra.mxu0 %v106
  %135 = vmatpush.bf16.msra.mxu0 %v104
  %136 = vmatmul.bf16.gmra.mxu0 %v112
  %v137 = vpop.f32.mrf.mxu0
  %v138 = vadd.f32 0.0, %v137
  %v139 = vpop.f32.mrf.mxu0
  %v140 = vadd.f32 0.0, %v139
  %141 = vdwg.mxu0
  %v142 = vpack.c.bf16 %v138, %v124
  %v143 = vpack.c.bf16 %v140, %v126
  %144 = vst [vmem:[%s4] sm:$0xff] %v142
  %145 = vst [vmem:[%s4 + $0x8] sm:$0xff] %v143
  // Predicated region
  $region18: #{vit_forward.18} parent=0 // pred_check
    _
  $region19: #{vit_forward.18} parent=0 // pred_check_branch
    %147 = sbr.rel (0) target = $region21
  $region20: #{vit_forward.18} parent=0 // pred_region
    _
  $region21: #{vit_forward.18} parent=0 // pred_fallthru
    _
  // Predicated region
  $region22: #{vit_forward.18} parent=0 // pred_check
    _
  $region23: #{vit_forward.18} parent=0 // pred_check_branch
    %149 = sbr.rel (0) target = $region25
  $region24: #{vit_forward.18} parent=0 // pred_region
    _
  $region25: #{vit_forward.18} parent=0 // pred_fallthru
    _

// kernel: vit_forward.19
$region0: #{vit_forward.19}
  #allocation0 [shape = 'u32[]', space=smem, size = 0x4, offset = 0x4, fixed_abs, tag = 'smem constant byte address 0x4 - core index']
  #allocation1 [shape = 'u32[72,128]{1,0:T(1,128)}', space=vmem, size = 0x9000, scoped, tag = 'internal scratch']
  %s0 = inlined_call_operand.vmem [shape: bf16[2,3,96], index: 0, kind: input, shape index: {}]
  %s1 = inlined_call_operand.vmem [shape: bf16[2,3,32], index: 1, kind: output, shape index: {}]
  %s2 = sld [smem:[#allocation0]]
  $region37: #{vit_forward.19} parent=0
    _
  %s4 = ssub.s32 1, %s2
  %s5 = scalar_select 0, %s4, %s2
  loop: start=0, step=1, limit=4
  $region2: #{vit_forward.19} parent=0 // loop_pre_header
    _
  $region3: #{vit_forward.19} parent=0 // loop_header
    %s7 = sphi 0, %s11
    %p8 = scmp.ge.s32.totalorder %s7, 4
    %s17 = sphi 0, %s19
    %s20 = sphi 0, %s17
    %s21 = sphi 0, %s20
    %s37 = sphi 0, %s21
    %s43 = sphi 0, %s45
    %s46 = sphi 0, %s43
    %s47 = sphi 0, %s46
    %s63 = sphi 0, %s47
  $region4: #{vit_forward.19} parent=0 // loop_header_branch
    %10 = sbr.rel (%p8) target = $region8
  $region5: #{vit_forward.19} parent=0 // loop_body
    %s12 = ssub.s32 %s7, 1
    %s13 = ssub.s32 %s7, 2
    %s14 = sadd.s32 %s7, 1
    %s15 = ssub.s32 %s7, %s14
    %p16 = scmp.eq.s32.totalorder %s15, 0
    %s18 = sadd.s32 %s17, 1
    %s19 = scalar_select %p16, %s17, %s18
    %p22 = pneg %p16
    %p23 = scmp.eq.s32.totalorder %s7, 1
    %p24 = por %p22, %p23
    %p25 = scmp.ne.s32.totalorder %s17, %s20
    %p26 = scmp.eq.s32.totalorder %s7, 0
    %p27 = por %p25, %p26
    %p28 = scmp.ne.s32.totalorder %s17, %s20
    %p29 = scmp.eq.s32.totalorder %s12, 1
    %p30 = por %p28, %p29
    %p31 = scmp.ne.s32.totalorder %s20, %s21
    %p32 = scmp.eq.s32.totalorder %s12, 0
    %p33 = por %p31, %p32
    %p34 = scmp.ne.s32.totalorder %s20, %s21
    %p35 = scmp.eq.s32.totalorder %s13, 1
    %p36 = por %p34, %p35
    %p38 = scmp.ne.s32.totalorder %s21, %s37
    %p39 = scmp.eq.s32.totalorder %s13, 0
    %p40 = por %p38, %p39
    %s41 = ssub.s32 %s7, %s14
    %p42 = scmp.eq.s32.totalorder %s41, 0
    %s44 = sadd.s32 %s43, 1
    %s45 = scalar_select %p42, %s43, %s44
    %p48 = pneg %p42
    %p49 = scmp.eq.s32.totalorder %s7, 1
    %p50 = por %p48, %p49
    %p51 = scmp.ne.s32.totalorder %s43, %s46
    %p52 = scmp.eq.s32.totalorder %s7, 0
    %p53 = por %p51, %p52
    %p54 = scmp.ne.s32.totalorder %s43, %s46
    %p55 = scmp.eq.s32.totalorder %s12, 1
    %p56 = por %p54, %p55
    %p57 = scmp.ne.s32.totalorder %s46, %s47
    %p58 = scmp.eq.s32.totalorder %s12, 0
    %p59 = por %p57, %p58
    %p60 = scmp.ne.s32.totalorder %s46, %s47
    %p61 = scmp.eq.s32.totalorder %s13, 1
    %p62 = por %p60, %p61
    %p64 = scmp.ne.s32.totalorder %s47, %s63
    %p65 = scmp.eq.s32.totalorder %s13, 0
    %p66 = por %p64, %p65
    %p67 = scmp.le.s32.totalorder 1, %s7
    %p68 = scmp.lt.s32.totalorder %s7, 3
    %p69 = pnand %p67, %p68
    %p70 = pneg %p69
    // Predicated region
    $region9: #{vit_forward.19} parent=5 // pred_check
      _
    $region10: #{vit_forward.19} parent=5 // pred_check_branch
      %72 = sbr.rel (%p69) target = $region12
    $region11: #{vit_forward.19} parent=5 // pred_region
      %s73 = ssub.s32 %s7, 1
    $region12: #{vit_forward.19} parent=5 // pred_fallthru
      _
    %p74 = scmp.lt.s32.totalorder %s7, 2
    // Predicated region
    $region13: #{vit_forward.19} parent=5 // pred_check
      %p75 = pneg %p74
    $region14: #{vit_forward.19} parent=5 // pred_check_branch
      %77 = sbr.rel (%p75) target = $region16
    $region15: #{vit_forward.19} parent=5 // pred_region
      // Predicated region
      $region17: #{vit_forward.19} parent=15 // pred_check
        %p78 = pneg %p27
      $region18: #{vit_forward.19} parent=15 // pred_check_branch
        %80 = sbr.rel (%p78) target = $region20
      $region19: #{vit_forward.19} parent=15 // pred_region
        %p81 = scmp.lt.s32.totalorder %s7, 1
        %s82 = scalar_select %p81, %s7, 1
        %s83 = smul.addr %s82, 2
        %s84 = scalar_lea.vmem %s0, %s83
      $region20: #{vit_forward.19} parent=15 // pred_fallthru
        _
    $region16: #{vit_forward.19} parent=5 // pred_fallthru
      _
    %p85 = scmp.le.s32.totalorder 1, %s7
    %p86 = scmp.lt.s32.totalorder %s7, 3
    %p87 = pnand %p85, %p86
    %p88 = pneg %p87
    // Predicated region
    $region21: #{vit_forward.19} parent=5 // pred_check
      _
    $region22: #{vit_forward.19} parent=5 // pred_check_branch
      %90 = sbr.rel (%p87) target = $region24
    $region23: #{vit_forward.19} parent=5 // pred_region
      %s91 = ssub.s32 %s7, 1
      %p92 = scmp.lt.s32.totalorder %s12, 1
      %s93 = scalar_select %p92, %s12, 1
      %s94 = smul.addr %s93, 2
      %s95 = scalar_lea.vmem %s0, %s94
      %p96 = pneg %p33
      %p97 = pneg %p30
      %p98 = pneg %p59
      %p99 = pneg %p56
      %p100 = scmp.lt.s32.totalorder %s12, 1
      %s101 = scalar_select %p100, %s12, 1
      %s102 = smul.addr %s101, 2
      %s103 = scalar_lea.vmem %s1, %s102
      %p104 = scmp.lt.s32.totalorder %s12, 1
      %s105 = scalar_select %p104, %s12, 1
      %s106 = smul.addr %s105, 2
      %s107 = scalar_lea.vmem %s0, %s106
      %p108 = scmp.lt.s32.totalorder %s12, 1
      %s109 = scalar_select %p108, %s12, 1
      %s110 = smul.addr %s109, 2
      %s111 = scalar_lea.vmem %s1, %s110
      %v112 = vld [vmem:[%s107] sm:$0x3]
      %v113 = vunpack.c.l.bf16 %v112
      %v114 = vmul.f32 %v113, 0.25
      %116 = vst [vmem:[#allocation1] ss:$2 sm:$0xff] %v113
      %v117 = vld.sshfl [vmem:[#allocation1] sm:$0xff pattern:$0x75316420]
      %118 = vrot.lane.b32.xlu0 %v117, 96
      %v119 = vpop.permute.xlu0 %118
      %vm120 = vcmask 130048
      %v122 = vsel %vm120, %v114, 0
      %v124 = vsel %vm120, %v119, 0
      %126 = vmatpush.xpose.msra.mxu0 0.0
      %127 = vmatpush.xpose.msra.mxu0 0.0
      %128 = vmatpush.xpose.msra.mxu0 0.0
      %129 = vmatpush.xpose.msra.mxu0 0.0
      %130 = vmatpush.xpose.msra.mxu0 0.0
      %131 = vmatpush.xpose.msra.mxu0 0.0
      %132 = vmatpush.xpose.msra.mxu0 0.0
      %133 = vmatpush.xpose.msra.mxu0 0.0
      %134 = vmatpush.xpose.msra.mxu0 0.0
      %135 = vmatpush.xpose.msra.mxu0 0.0
      %136 = vmatpush.xpose.msra.mxu0 0.0
      %137 = vmatpush.xpose.msra.mxu0 0.0
      %138 = vmatpush.xpose.msra.mxu0 0.0
      %139 = vmatpush.xpose.msra.mxu0 0.0
      %140 = vmatpush.xpose.msra.mxu0 0.0
      %141 = vmatpush.xpose.msra.mxu0 %v124
      %142 = vmatmul.f32.gmra.mxu0 %v122
      %v143 = vpop.f32.mrf.mxu0
      %v144 = vadd.f32 0.0, %v143
      %145 = vdwg.mxu0
      %vm146 = vcmask 18432
      %v147 = vsel %vm146, %v144, -inf
      %148 = vmax.xlane.f32.xlu0 %v147
      %v149 = vpop.xlane.xlu0 %148
      %v150 = vsub.f32 %v144, %v149
      %v151 = vmul.f32 %v150, 1.442695
      %v152 = vpow.pop %v151
      %v153 = vsel %vm146, %v152, 0.0
      %154 = vadd.xlane.f32.xlu0 %v153
      %v155 = vpop.xlane.xlu0 %154
      %156 = vst [vmem:[#allocation1] ss:$2 sm:$0xff] %v113
      %v157 = vld.sshfl [vmem:[#allocation1] sm:$0xff pattern:$0x75316420]
      %158 = vrot.lane.b32.xlu0 %v157, 64
      %v159 = vpop.permute.xlu0 %158
      %vm160 = vcmask 23552
      %v162 = vsel %vm160, %v152, 0
      %vm164 = vcmask 1042432
      %v165 = vsel %vm164, %v159, 0
      %167 = vmatpush.msra.mxu0 0.0
      %168 = vmatpush.msra.mxu0 0.0
      %169 = vmatpush.msra.mxu0 0.0
      %170 = vmatpush.msra.mxu0 0.0
      %171 = vmatpush.msra.mxu0 0.0
      %172 = vmatpush.msra.mxu0 0.0
      %173 = vmatpush.msra.mxu0 0.0
      %174 = vmatpush.msra.mxu0 0.0
      %175 = vmatpush.msra.mxu0 0.0
      %176 = vmatpush.msra.mxu0 0.0
      %177 = vmatpush.msra.mxu0 0.0
      %178 = vmatpush.msra.mxu0 0.0
      %179 = vmatpush.msra.mxu0 0.0
      %180 = vmatpush.msra.mxu0 0.0
      %181 = vmatpush.msra.mxu0 0.0
      %182 = vmatpush.msra.mxu0 %v165
      %183 = vmatmul.f32.gmra.mxu0 %v162
      %v184 = vpop.f32.mrf.mxu0
      %v185 = vadd.f32 0.0, %v184
      %186 = vdwg.mxu0
      %v187 = vrcp.pop %v155
      %v188 = vmul.f32 %v185, %v187
      %189 = vst [vmem:[#allocation1] ss:$2 sm:$0xff] %v114
      %v190 = vld.sshfl [vmem:[#allocation1] sm:$0xff pattern:$0x75316420]
      %191 = vrot.lane.b32.xlu0 %v190, 112
      %v192 = vpop.permute.xlu0 %191
      %193 = vst [vmem:[#allocation1] ss:$2 sm:$0xff] %v113
      %v194 = vld.sshfl [vmem:[#allocation1] sm:$0xff pattern:$0x75316420]
      %195 = vrot.lane.b32.xlu0 %v194, 80
      %v196 = vpop.permute.xlu0 %195
      %v197 = vsel %vm120, %v192, 0
      %v199 = vsel %vm120, %v196, 0
      %201 = vmatpush.xpose.msra.mxu0 0.0
      %202 = vmatpush.xpose.msra.mxu0 0.0
      %203 = vmatpush.xpose.msra.mxu0 0.0
      %204 = vmatpush.xpose.msra.mxu0 0.0
      %205 = vmatpush.xpose.msra.mxu0 0.0
      %206 = vmatpush.xpose.msra.mxu0 0.0
      %207 = vmatpush.xpose.msra.mxu0 0.0
      %208 = vmatpush.xpose.msra.mxu0 0.0
      %209 = vmatpush.xpose.msra.mxu0 0.0
      %210 = vmatpush.xpose.msra.mxu0 0.0
      %211 = vmatpush.xpose.msra.mxu0 0.0
      %212 = vmatpush.xpose.msra.mxu0 0.0
      %213 = vmatpush.xpose.msra.mxu0 0.0
      %214 = vmatpush.xpose.msra.mxu0 0.0
      %215 = vmatpush.xpose.msra.mxu0 0.0
      %216 = vmatpush.xpose.msra.mxu0 %v199
      %217 = vmatmul.f32.gmra.mxu0 %v197
      %v218 = vpop.f32.mrf.mxu0
      %v219 = vadd.f32 0.0, %v218
      %220 = vdwg.mxu0
      %v221 = vsel %vm146, %v219, -inf
      %222 = vmax.xlane.f32.xlu0 %v221
      %v223 = vpop.xlane.xlu0 %222
      %v224 = vsub.f32 %v219, %v223
      %v225 = vmul.f32 %v224, 1.442695
      %v226 = vpow.pop %v225
      %v227 = vsel %vm146, %v226, 0.0
      %228 = vadd.xlane.f32.xlu0 %v227
      %v229 = vpop.xlane.xlu0 %228
      %230 = vst [vmem:[#allocation1] ss:$2 sm:$0xff] %v113
      %v231 = vld.sshfl [vmem:[#allocation1] sm:$0xff pattern:$0x75316420]
      %232 = vrot.lane.b32.xlu0 %v231, 48
      %v233 = vpop.permute.xlu0 %232
      %v235 = vsel %vm160, %v226, 0
      %v237 = vsel %vm164, %v233, 0
      %239 = vmatpush.msra.mxu0 0.0
      %240 = vmatpush.msra.mxu0 0.0
      %241 = vmatpush.msra.mxu0 0.0
      %242 = vmatpush.msra.mxu0 0.0
      %243 = vmatpush.msra.mxu0 0.0
      %244 = vmatpush.msra.mxu0 0.0
      %245 = vmatpush.msra.mxu0 0.0
      %246 = vmatpush.msra.mxu0 0.0
      %247 = vmatpush.msra.mxu0 0.0
      %248 = vmatpush.msra.mxu0 0.0
      %249 = vmatpush.msra.mxu0 0.0
      %250 = vmatpush.msra.mxu0 0.0
      %251 = vmatpush.msra.mxu0 0.0
      %252 = vmatpush.msra.mxu0 0.0
      %253 = vmatpush.msra.mxu0 0.0
      %254 = vmatpush.msra.mxu0 %v237
      %255 = vmatmul.f32.gmra.mxu0 %v235
      %v256 = vpop.f32.mrf.mxu0
      %v257 = vadd.f32 0.0, %v256
      %258 = vdwg.mxu0
      %v259 = vrcp.pop %v229
      %v260 = vmul.f32 %v257, %v259
      %262 = vrot.lane.b32.xlu0 %v260, 16
      %v263 = vpop.permute.xlu0 %262
      %v265 = vsel %vm120, %v188, %v263
      %v266 = vpack.c.bf16 %v265, %v265
      %vm267 = vcmask 254976
      %vm268 = vsmask.f32 1280
      %vm269 = vmand %vm267, %vm268
      %v270 = vld [vmem:[%s111] sm:$0x3]
      %v271 = vsel %vm269, %v266, %v270
      %272 = vst [vmem:[%s111] sm:$0x3] %v271
      %p273 = scmp.lt.s32.totalorder %s12, 1
      %s274 = scalar_select %p273, %s12, 1
      %s275 = smul.addr %s274, 2
      %s276 = scalar_lea.vmem %s1, %s275
      // Predicated region
      $region25: #{vit_forward.19} parent=23 // pred_check
        %p277 = pneg %p56
      $region26: #{vit_forward.19} parent=23 // pred_check_branch
        %279 = sbr.rel (%p277) target = $region28
      $region27: #{vit_forward.19} parent=23 // pred_region
        _
      $region28: #{vit_forward.19} parent=23 // pred_fallthru
        _
    $region24: #{vit_forward.19} parent=5 // pred_fallthru
      _
    %p280 = scmp.le.s32.totalorder 2, %s7
    // Predicated region
    $region29: #{vit_forward.19} parent=5 // pred_check
      %p281 = pneg %p280
    $region30: #{vit_forward.19} parent=5 // pred_check_branch
      %283 = sbr.rel (%p281) target = $region32
    $region31: #{vit_forward.19} parent=5 // pred_region
      %s284 = ssub.s32 %s7, 2
      // Predicated region
      $region33: #{vit_forward.19} parent=31 // pred_check
        %p285 = pneg %p62
      $region34: #{vit_forward.19} parent=31 // pred_check_branch
        %287 = sbr.rel (%p285) target = $region36
      $region35: #{vit_forward.19} parent=31 // pred_region
        %p288 = scmp.lt.s32.totalorder %s13, 1
        %s289 = scalar_select %p288, %s13, 1
        %s290 = smul.addr %s289, 2
        %s291 = scalar_lea.vmem %s1, %s290
      $region36: #{vit_forward.19} parent=31 // pred_fallthru
        _
    $region32: #{vit_forward.19} parent=5 // pred_fallthru
      _
  $region6: #{vit_forward.19} parent=0 // loop_footer
    %s11 = sadd.s32 1, %s7
  $region7: #{vit_forward.19} parent=0 // loop_footer_branch
    %6 = sbr.rel target = $region3
  $region8: #{vit_forward.19} parent=0 // loop_exit
    _

// kernel: vit_forward.21
$region0: #{vit_forward.21}
  #allocation0 [shape = 'u32[]', space=smem, size = 0x4, offset = 0x4, fixed_abs, tag = 'smem constant byte address 0x4 - core index']
  #allocation1 [shape = 'u32[72,128]{1,0:T(1,128)}', space=vmem, size = 0x9000, scoped, tag = 'internal scratch']
  %s0 = inlined_call_operand.vmem [shape: bf16[16,32], index: 0, kind: input, shape index: {}]
  %s1 = inlined_call_operand.vmem [shape: f32[1,32], index: 1, kind: input, shape index: {}]
  %s2 = inlined_call_operand.vmem [shape: f32[1,32], index: 2, kind: input, shape index: {}]
  %s3 = inlined_call_operand.vmem [shape: bf16[32,256], index: 3, kind: input, shape index: {}]
  %s4 = inlined_call_operand.vmem [shape: f32[1,256], index: 4, kind: input, shape index: {}]
  %s5 = inlined_call_operand.vmem [shape: bf16[16,256], index: 5, kind: output, shape index: {}]
  %s6 = sld [smem:[#allocation0]]
  $region30: #{vit_forward.21} parent=0
    _
  %s8 = ssub.s32 1, %s6
  %s9 = scalar_select 0, %s8, %s6
  // Predicated region
  $region2: #{vit_forward.21} parent=0 // pred_check
    _
  $region3: #{vit_forward.21} parent=0 // pred_check_branch
    %11 = sbr.rel (0) target = $region5
  $region4: #{vit_forward.21} parent=0 // pred_region
    _
  $region5: #{vit_forward.21} parent=0 // pred_fallthru
    _
  // Predicated region
  $region6: #{vit_forward.21} parent=0 // pred_check
    _
  $region7: #{vit_forward.21} parent=0 // pred_check_branch
    %13 = sbr.rel (0) target = $region9
  $region8: #{vit_forward.21} parent=0 // pred_region
    _
  $region9: #{vit_forward.21} parent=0 // pred_fallthru
    _
  // Predicated region
  $region10: #{vit_forward.21} parent=0 // pred_check
    _
  $region11: #{vit_forward.21} parent=0 // pred_check_branch
    %15 = sbr.rel (0) target = $region13
  $region12: #{vit_forward.21} parent=0 // pred_region
    _
  $region13: #{vit_forward.21} parent=0 // pred_fallthru
    _
  // Predicated region
  $region14: #{vit_forward.21} parent=0 // pred_check
    _
  $region15: #{vit_forward.21} parent=0 // pred_check_branch
    %17 = sbr.rel (0) target = $region17
  $region16: #{vit_forward.21} parent=0 // pred_region
    _
  $region17: #{vit_forward.21} parent=0 // pred_fallthru
    _
  // Predicated region
  $region18: #{vit_forward.21} parent=0 // pred_check
    _
  $region19: #{vit_forward.21} parent=0 // pred_check_branch
    %19 = sbr.rel (0) target = $region21
  $region20: #{vit_forward.21} parent=0 // pred_region
    _
  $region21: #{vit_forward.21} parent=0 // pred_fallthru
    _
  %v21 = vld [vmem:[%s0] sm:$0xf]
  %v22 = vld [vmem:[%s0 + $0x4] sm:$0xf]
  %v23 = vunpack.c.l.bf16 %v21
  %v24 = vunpack.c.l.bf16 %v22
  %vm25 = vcmask 261120
  %v26 = vsel %vm25, %v23, 0.0
  %27 = vadd.xlane.f32.xlu0 %v26
  %v28 = vpop.xlane.xlu0 %27
  %v29 = vsel %vm25, %v24, 0.0
  %30 = vadd.xlane.f32.xlu0 %v29
  %v31 = vpop.xlane.xlu0 %30
  %v32 = vrcp.pop 32.0
  %v33 = vmul.f32 32.0, %v32
  %v34 = vsub.f32 1.0, %v33
  %v35 = vmul.f32 %v32, %v34
  %v36 = vadd.f32 %v32, %v35
  %vm37 = vweird.f32 %v32
  %v38 = vsel %vm37, %v32, %v36
  %v39 = vmul.f32 %v28, %v38
  %v40 = vmul.f32 %v31, %v38
  %v41 = vsub.f32 %v23, %v39
  %v42 = vsub.f32 %v24, %v40
  %v43 = vmul.f32 %v41, %v41
  %v44 = vmul.f32 %v42, %v42
  %v45 = vsel %vm25, %v43, 0.0
  %46 = vadd.xlane.f32.xlu0 %v45
  %v47 = vpop.xlane.xlu0 %46
  %v48 = vsel %vm25, %v44, 0.0
  %49 = vadd.xlane.f32.xlu0 %v48
  %v50 = vpop.xlane.xlu0 %49
  %v51 = vmul.f32 %v47, %v38
  %v52 = vmul.f32 %v50, %v38
  %v53 = vadd.f32 %v51, 1e-05
  %v54 = vadd.f32 %v52, 1e-05
  %v55 = vrsqrt.pop %v53
  %v56 = vmul.f32 %v55, %v53
  %v57 = vmul.f32 %v56, %v55
  %v58 = vmul.f32 0.5, %v57
  %v59 = vsub.f32 1.5, %v58
  %v60 = vmul.f32 %v55, %v59
  %vm61 = vweird.f32 %v53
  %vm62 = vweird.f32 %v55
  %vm63 = vmor %vm61, %vm62
  %v64 = vsel %vm63, %v55, %v60
  %v65 = vrsqrt.pop %v54
  %v66 = vmul.f32 %v65, %v54
  %v67 = vmul.f32 %v66, %v65
  %v68 = vmul.f32 0.5, %v67
  %v69 = vsub.f32 1.5, %v68
  %v70 = vmul.f32 %v65, %v69
  %vm71 = vweird.f32 %v54
  %vm72 = vweird.f32 %v65
  %vm73 = vmor %vm71, %vm72
  %v74 = vsel %vm73, %v65, %v70
  %v75 = vmul.f32 %v41, %v64
  %v76 = vmul.f32 %v42, %v74
  %v77 = vld [vmem:[%s1] sm:$0x1]
  %v79 = vperm.slane %v77, 0
  %v81 = vmul.f32 %v75, %v79
  %v82 = vmul.f32 %v76, %v79
  %v83 = vld [vmem:[%s2] sm:$0x1]
  %v85 = vperm.slane %v83, 0
  %v87 = vadd.f32 %v81, %v85
  %v88 = vadd.f32 %v82, %v85
  %v89 = vpack.c.bf16 %v88, %v87
  %v90 = vld [vmem:[%s3] sm:$0xff]
  %v91 = vld [vmem:[%s3 + $0x8] sm:$0xff]
  %v92 = vld [vmem:[%s3 + $0x10] sm:$0xff]
  %v93 = vld [vmem:[%s3 + $0x18] sm:$0xff]
  %v94 = vld [vmem:[%s4] sm:$0x3]
  %v96 = vperm.slane %v94, 0
  %v97 = vperm.slane %v94, 1
  %v104 = vunpack.c.l.b16 %v90
  %v105 = vunpack.c.h.b16 %v90
  %v106 = vunpack.c.l.b16 %v91
  %v107 = vunpack.c.h.b16 %v91
  %v108 = vunpack.c.l.b16 %v92
  %v109 = vunpack.c.h.b16 %v92
  %v110 = vunpack.c.l.b16 %v93
  %v111 = vunpack.c.h.b16 %v93
  %v112 = vpack.c.b16 %v106, %v104
  %v113 = vpack.c.b16 %v107, %v105
  %v114 = vpack.c.b16 %v110, %v108
  %v115 = vpack.c.b16 %v111, %v109
  %v121 = vsel %vm25, %v89, 0
  %123 = vmatpush.bf16.msra.mxu0 0
  %124 = vmatpush.bf16.msra.mxu0 0
  %125 = vmatpush.bf16.msra.mxu0 0
  %126 = vmatpush.bf16.msra.mxu0 0
  %127 = vmatpush.bf16.msra.mxu0 0
  %128 = vmatpush.bf16.msra.mxu0 0
  %129 = vmatpush.bf16.msra.mxu0 %v114
  %130 = vmatpush.bf16.msra.mxu0 %v112
  %131 = vmatmul.bf16.gmra.mxu0 %v121
  %v132 = vpop.f32.mrf.mxu0
  %v133 = vadd.f32 %v96, %v132
  %v134 = vpop.f32.mrf.mxu0
  %v135 = vadd.f32 %v96, %v134
  %136 = vdwg.mxu0
  %137 = vmatpush.bf16.msra.mxu0 0
  %138 = vmatpush.bf16.msra.mxu0 0
  %139 = vmatpush.bf16.msra.mxu0 0
  %140 = vmatpush.bf16.msra.mxu0 0
  %141 = vmatpush.bf16.msra.mxu0 0
  %142 = vmatpush.bf16.msra.mxu0 0
  %143 = vmatpush.bf16.msra.mxu0 %v115
  %144 = vmatpush.bf16.msra.mxu0 %v113
  %145 = vmatmul.bf16.gmra.mxu0 %v121
  %v146 = vpop.f32.mrf.mxu0
  %v147 = vadd.f32 %v97, %v146
  %v148 = vpop.f32.mrf.mxu0
  %v149 = vadd.f32 %v97, %v148
  %150 = vdwg.mxu0
  %v151 = vmul.f32 %v133, 0.5
  %v152 = vmul.f32 %v147, 0.5
  %v153 = vmul.f32 %v135, 0.5
  %v154 = vmul.f32 %v149, 0.5
  %v155 = vmul.f32 %v133, 0.70710677
  %v156 = vmul.f32 %v147, 0.70710677
  %v157 = vmul.f32 %v135, 0.70710677
  %v158 = vmul.f32 %v149, 0.70710677
  %v159 = vmul.f32 %v155, %v155
  %v160 = vmin.f32 16.0, %v159
  %v161 = vmul.f32 %v160, 2.1237322e-06
  %v162 = vadd.f32 %v161, 0.00028619796
  %v163 = vmul.f32 %v160, %v162
  %v164 = vadd.f32 %v163, 0.0036580483
  %v165 = vmul.f32 %v160, %v164
  %v166 = vadd.f32 %v165, 0.05243302
  %v167 = vmul.f32 %v160, %v166
  %v168 = vadd.f32 %v167, 0.18741608
  %v169 = vmul.f32 %v160, %v168
  %v170 = vadd.f32 %v169, 1.1283791
  %v171 = vmul.f32 %v155, %v170
  %v172 = vmul.f32 %v160, 3.8918573e-05
  %v173 = vadd.f32 %v172, 0.001143296
  %v174 = vmul.f32 %v160, %v173
  %v175 = vadd.f32 %v174, 0.014752088
  %v176 = vmul.f32 %v160, %v175
  %v177 = vadd.f32 %v176, 0.112945676
  %v178 = vmul.f32 %v160, %v177
  %v179 = vadd.f32 %v178, 0.4994258
  %v180 = vmul.f32 %v160, %v179
  %v181 = vadd.f32 %v180, 1.0
  %v182 = vrcp.pop %v181
  %v183 = vmul.f32 %v181, %v182
  %v184 = vsub.f32 1.0, %v183
  %v185 = vmul.f32 %v182, %v184
  %v186 = vadd.f32 %v182, %v185
  %vm187 = vweird.f32 %v181
  %vm188 = vweird.f32 %v182
  %vm189 = vmor %vm187, %vm188
  %v190 = vsel %vm189, %v182, %v186
  %v191 = vand.u32 2147483647, %v181
  %vm192 = vcmp.eq.f32.partialorder %v191, 8.507059e+37
  %v193 = vand.u32 %v181, 2147483648
  %v194 = vor.u32 1.1754944e-38, %v193
  %v195 = vsel %vm192, %v194, %v190
  %v196 = vmul.f32 %v171, %v195
  %v197 = vmin.f32 %v196, 1.0
  %v198 = vmax.f32 %v197, -1.0
  %v199 = vmul.f32 %v156, %v156
  %v200 = vmin.f32 16.0, %v199
  %v201 = vmul.f32 %v200, 2.1237322e-06
  %v202 = vadd.f32 %v201, 0.00028619796
  %v203 = vmul.f32 %v200, %v202
  %v204 = vadd.f32 %v203, 0.0036580483
  %v205 = vmul.f32 %v200, %v204
  %v206 = vadd.f32 %v205, 0.05243302
  %v207 = vmul.f32 %v200, %v206
  %v208 = vadd.f32 %v207, 0.18741608
  %v209 = vmul.f32 %v200, %v208
  %v210 = vadd.f32 %v209, 1.1283791
  %v211 = vmul.f32 %v156, %v210
  %v212 = vmul.f32 %v200, 3.8918573e-05
  %v213 = vadd.f32 %v212, 0.001143296
  %v214 = vmul.f32 %v200, %v213
  %v215 = vadd.f32 %v214, 0.014752088
  %v216 = vmul.f32 %v200, %v215
  %v217 = vadd.f32 %v216, 0.112945676
  %v218 = vmul.f32 %v200, %v217
  %v219 = vadd.f32 %v218, 0.4994258
  %v220 = vmul.f32 %v200, %v219
  %v221 = vadd.f32 %v220, 1.0
  %v222 = vrcp.pop %v221
  %v223 = vmul.f32 %v221, %v222
  %v224 = vsub.f32 1.0, %v223
  %v225 = vmul.f32 %v222, %v224
  %v226 = vadd.f32 %v222, %v225
  %vm227 = vweird.f32 %v221
  %vm228 = vweird.f32 %v222
  %vm229 = vmor %vm227, %vm228
  %v230 = vsel %vm229, %v222, %v226
  %v231 = vand.u32 2147483647, %v221
  %vm232 = vcmp.eq.f32.partialorder %v231, 8.507059e+37
  %v233 = vand.u32 %v221, 2147483648
  %v234 = vor.u32 1.1754944e-38, %v233
  %v235 = vsel %vm232, %v234, %v230
  %v236 = vmul.f32 %v211, %v235
  %v237 = vmin.f32 %v236, 1.0
  %v238 = vmax.f32 %v237, -1.0
  %v239 = vmul.f32 %v157, %v157
  %v240 = vmin.f32 16.0, %v239
  %v241 = vmul.f32 %v240, 2.1237322e-06
  %v242 = vadd.f32 %v241, 0.00028619796
  %v243 = vmul.f32 %v240, %v242
  %v244 = vadd.f32 %v243, 0.0036580483
  %v245 = vmul.f32 %v240, %v244
  %v246 = vadd.f32 %v245, 0.05243302
  %v247 = vmul.f32 %v240, %v246
  %v248 = vadd.f32 %v247, 0.18741608
  %v249 = vmul.f32 %v240, %v248
  %v250 = vadd.f32 %v249, 1.1283791
  %v251 = vmul.f32 %v157, %v250
  %v252 = vmul.f32 %v240, 3.8918573e-05
  %v253 = vadd.f32 %v252, 0.001143296
  %v254 = vmul.f32 %v240, %v253
  %v255 = vadd.f32 %v254, 0.014752088
  %v256 = vmul.f32 %v240, %v255
  %v257 = vadd.f32 %v256, 0.112945676
  %v258 = vmul.f32 %v240, %v257
  %v259 = vadd.f32 %v258, 0.4994258
  %v260 = vmul.f32 %v240, %v259
  %v261 = vadd.f32 %v260, 1.0
  %v262 = vrcp.pop %v261
  %v263 = vmul.f32 %v261, %v262
  %v264 = vsub.f32 1.0, %v263
  %v265 = vmul.f32 %v262, %v264
  %v266 = vadd.f32 %v262, %v265
  %vm267 = vweird.f32 %v261
  %vm268 = vweird.f32 %v262
  %vm269 = vmor %vm267, %vm268
  %v270 = vsel %vm269, %v262, %v266
  %v271 = vand.u32 2147483647, %v261
  %vm272 = vcmp.eq.f32.partialorder %v271, 8.507059e+37
  %v273 = vand.u32 %v261, 2147483648
  %v274 = vor.u32 1.1754944e-38, %v273
  %v275 = vsel %vm272, %v274, %v270
  %v276 = vmul.f32 %v251, %v275
  %v277 = vmin.f32 %v276, 1.0
  %v278 = vmax.f32 %v277, -1.0
  %v279 = vmul.f32 %v158, %v158
  %v280 = vmin.f32 16.0, %v279
  %v281 = vmul.f32 %v280, 2.1237322e-06
  %v282 = vadd.f32 %v281, 0.00028619796
  %v283 = vmul.f32 %v280, %v282
  %v284 = vadd.f32 %v283, 0.0036580483
  %v285 = vmul.f32 %v280, %v284
  %v286 = vadd.f32 %v285, 0.05243302
  %v287 = vmul.f32 %v280, %v286
  %v288 = vadd.f32 %v287, 0.18741608
  %v289 = vmul.f32 %v280, %v288
  %v290 = vadd.f32 %v289, 1.1283791
  %v291 = vmul.f32 %v158, %v290
  %v292 = vmul.f32 %v280, 3.8918573e-05
  %v293 = vadd.f32 %v292, 0.001143296
  %v294 = vmul.f32 %v280, %v293
  %v295 = vadd.f32 %v294, 0.014752088
  %v296 = vmul.f32 %v280, %v295
  %v297 = vadd.f32 %v296, 0.112945676
  %v298 = vmul.f32 %v280, %v297
  %v299 = vadd.f32 %v298, 0.4994258
  %v300 = vmul.f32 %v280, %v299
  %v301 = vadd.f32 %v300, 1.0
  %v302 = vrcp.pop %v301
  %v303 = vmul.f32 %v301, %v302
  %v304 = vsub.f32 1.0, %v303
  %v305 = vmul.f32 %v302, %v304
  %v306 = vadd.f32 %v302, %v305
  %vm307 = vweird.f32 %v301
  %vm308 = vweird.f32 %v302
  %vm309 = vmor %vm307, %vm308
  %v310 = vsel %vm309, %v302, %v306
  %v311 = vand.u32 2147483647, %v301
  %vm312 = vcmp.eq.f32.partialorder %v311, 8.507059e+37
  %v313 = vand.u32 %v301, 2147483648
  %v314 = vor.u32 1.1754944e-38, %v313
  %v315 = vsel %vm312, %v314, %v310
  %v316 = vmul.f32 %v291, %v315
  %v317 = vmin.f32 %v316, 1.0
  %v318 = vmax.f32 %v317, -1.0
  %v319 = vadd.f32 %v198, 1.0
  %v320 = vadd.f32 %v238, 1.0
  %v321 = vadd.f32 %v278, 1.0
  %v322 = vadd.f32 %v318, 1.0
  %v323 = vmul.f32 %v151, %v319
  %v324 = vmul.f32 %v152, %v320
  %v325 = vmul.f32 %v153, %v321
  %v326 = vmul.f32 %v154, %v322
  %v327 = vpack.c.bf16 %v324, %v323
  %v328 = vpack.c.bf16 %v326, %v325
  %329 = vst [vmem:[%s5] sm:$0xff] %v327
  %330 = vst [vmem:[%s5 + $0x8] sm:$0xff] %v328
  // Predicated region
  $region22: #{vit_forward.21} parent=0 // pred_check
    _
  $region23: #{vit_forward.21} parent=0 // pred_check_branch
    %332 = sbr.rel (0) target = $region25
  $region24: #{vit_forward.21} parent=0 // pred_region
    _
  $region25: #{vit_forward.21} parent=0 // pred_fallthru
    _
  // Predicated region
  $region26: #{vit_forward.21} parent=0 // pred_check
    _
  $region27: #{vit_forward.21} parent=0 // pred_check_branch
    %334 = sbr.rel (0) target = $region29
  $region28: #{vit_forward.21} parent=0 // pred_region
    _
  $region29: #{vit_forward.21} parent=0 // pred_fallthru
    _

// kernel: vit_forward.22
$region0: #{vit_forward.22}
  #allocation0 [shape = 'u32[]', space=smem, size = 0x4, offset = 0x4, fixed_abs, tag = 'smem constant byte address 0x4 - core index']
  #allocation1 [shape = 'u32[72,128]{1,0:T(1,128)}', space=vmem, size = 0x9000, scoped, tag = 'internal scratch']
  %s0 = inlined_call_operand.vmem [shape: bf16[16,64], index: 0, kind: input, shape index: {}]
  %s1 = inlined_call_operand.vmem [shape: bf16[64,256], index: 1, kind: input, shape index: {}]
  %s2 = inlined_call_operand.vmem [shape: f32[1,256], index: 2, kind: input, shape index: {}]
  %s3 = inlined_call_operand.vmem [shape: bf16[16,32], index: 3, kind: input, shape index: {}]
  %s4 = inlined_call_operand.vmem [shape: bf16[16,256], index: 4, kind: output, shape index: {}]
  %s5 = sld [smem:[#allocation0]]
  $region26: #{vit_forward.22} parent=0
    _
  %s7 = ssub.s32 1, %s5
  %s8 = scalar_select 0, %s7, %s5
  // Predicated region
  $region2: #{vit_forward.22} parent=0 // pred_check
    _
  $region3: #{vit_forward.22} parent=0 // pred_check_branch
    %10 = sbr.rel (0) target = $region5
  $region4: #{vit_forward.22} parent=0 // pred_region
    _
  $region5: #{vit_forward.22} parent=0 // pred_fallthru
    _
  // Predicated region
  $region6: #{vit_forward.22} parent=0 // pred_check
    _
  $region7: #{vit_forward.22} parent=0 // pred_check_branch
    %12 = sbr.rel (0) target = $region9
  $region8: #{vit_forward.22} parent=0 // pred_region
    _
  $region9: #{vit_forward.22} parent=0 // pred_fallthru
    _
  // Predicated region
  $region10: #{vit_forward.22} parent=0 // pred_check
    _
  $region11: #{vit_forward.22} parent=0 // pred_check_branch
    %14 = sbr.rel (0) target = $region13
  $region12: #{vit_forward.22} parent=0 // pred_region
    _
  $region13: #{vit_forward.22} parent=0 // pred_fallthru
    _
  // Predicated region
  $region14: #{vit_forward.22} parent=0 // pred_check
    _
  $region15: #{vit_forward.22} parent=0 // pred_check_branch
    %16 = sbr.rel (0) target = $region17
  $region16: #{vit_forward.22} parent=0 // pred_region
    _
  $region17: #{vit_forward.22} parent=0 // pred_fallthru
    _
  %v18 = vld [vmem:[%s0] sm:$0xf]
  %v19 = vld [vmem:[%s0 + $0x4] sm:$0xf]
  %v20 = vld [vmem:[%s1] sm:$0xff]
  %v21 = vld [vmem:[%s1 + $0x8] sm:$0xff]
  %v22 = vld [vmem:[%s1 + $0x10] sm:$0xff]
  %v23 = vld [vmem:[%s1 + $0x18] sm:$0xff]
  %v24 = vld [vmem:[%s1 + $0x20] sm:$0xff]
  %v25 = vld [vmem:[%s1 + $0x28] sm:$0xff]
  %v26 = vld [vmem:[%s1 + $0x30] sm:$0xff]
  %v27 = vld [vmem:[%s1 + $0x38] sm:$0xff]
  %v28 = vld [vmem:[%s2] sm:$0x3]
  %v30 = vperm.slane %v28, 0
  %v31 = vperm.slane %v28, 1
  %v36 = vunpack.c.l.b16 %v18
  %v37 = vunpack.c.l.b16 %v19
  %v38 = vpack.c.b16 %v37, %v36
  %v47 = vunpack.c.l.b16 %v20
  %v48 = vunpack.c.h.b16 %v20
  %v49 = vunpack.c.l.b16 %v21
  %v50 = vunpack.c.h.b16 %v21
  %v51 = vunpack.c.l.b16 %v22
  %v52 = vunpack.c.h.b16 %v22
  %v53 = vunpack.c.l.b16 %v23
  %v54 = vunpack.c.h.b16 %v23
  %v55 = vunpack.c.l.b16 %v24
  %v56 = vunpack.c.h.b16 %v24
  %v57 = vunpack.c.l.b16 %v25
  %v58 = vunpack.c.h.b16 %v25
  %v59 = vunpack.c.l.b16 %v26
  %v60 = vunpack.c.h.b16 %v26
  %v61 = vunpack.c.l.b16 %v27
  %v62 = vunpack.c.h.b16 %v27
  %v63 = vpack.c.b16 %v49, %v47
  %v64 = vpack.c.b16 %v50, %v48
  %v65 = vpack.c.b16 %v53, %v51
  %v66 = vpack.c.b16 %v54, %v52
  %v67 = vpack.c.b16 %v57, %v55
  %v68 = vpack.c.b16 %v58, %v56
  %v69 = vpack.c.b16 %v61, %v59
  %v70 = vpack.c.b16 %v62, %v60
  %vm79 = vcmask 523264
  %v81 = vsel %vm79, %v38, 0
  %83 = vmatpush.bf16.msra.mxu0 0
  %84 = vmatpush.bf16.msra.mxu0 0
  %85 = vmatpush.bf16.msra.mxu0 0
  %86 = vmatpush.bf16.msra.mxu0 0
  %87 = vmatpush.bf16.msra.mxu0 %v69
  %88 = vmatpush.bf16.msra.mxu0 %v67
  %89 = vmatpush.bf16.msra.mxu0 %v65
  %90 = vmatpush.bf16.msra.mxu0 %v63
  %91 = vmatmul.bf16.gmra.mxu0 %v81
  %v92 = vpop.f32.mrf.mxu0
  %v93 = vadd.f32 %v30, %v92
  %v94 = vpop.f32.mrf.mxu0
  %v95 = vadd.f32 %v30, %v94
  %96 = vdwg.mxu0
  %97 = vmatpush.bf16.msra.mxu0 0
  %98 = vmatpush.bf16.msra.mxu0 0
  %99 = vmatpush.bf16.msra.mxu0 0
  %100 = vmatpush.bf16.msra.mxu0 0
  %101 = vmatpush.bf16.msra.mxu0 %v70
  %102 = vmatpush.bf16.msra.mxu0 %v68
  %103 = vmatpush.bf16.msra.mxu0 %v66
  %104 = vmatpush.bf16.msra.mxu0 %v64
  %105 = vmatmul.bf16.gmra.mxu0 %v81
  %v106 = vpop.f32.mrf.mxu0
  %v107 = vadd.f32 %v31, %v106
  %v108 = vpop.f32.mrf.mxu0
  %v109 = vadd.f32 %v31, %v108
  %110 = vdwg.mxu0
  %v111 = vld [vmem:[%s3] sm:$0xf]
  %v112 = vld [vmem:[%s3 + $0x4] sm:$0xf]
  %v113 = vunpack.c.l.bf16 %v111
  %v114 = vunpack.c.l.bf16 %v112
  %vm115 = vcmask 261120
  %v116 = vsel %vm115, %v113, 0.0
  %v117 = vsel %vm115, %v114, 0.0
  %v118 = vadd.f32 %v93, %v116
  %v119 = vadd.f32 %v107, 0.0
  %v120 = vadd.f32 %v95, %v117
  %v121 = vadd.f32 %v109, 0.0
  %v122 = vpack.c.bf16 %v119, %v118
  %v123 = vpack.c.bf16 %v121, %v120
  %124 = vst [vmem:[%s4] sm:$0xff] %v122
  %125 = vst [vmem:[%s4 + $0x8] sm:$0xff] %v123
  // Predicated region
  $region18: #{vit_forward.22} parent=0 // pred_check
    _
  $region19: #{vit_forward.22} parent=0 // pred_check_branch
    %127 = sbr.rel (0) target = $region21
  $region20: #{vit_forward.22} parent=0 // pred_region
    _
  $region21: #{vit_forward.22} parent=0 // pred_fallthru
    _
  // Predicated region
  $region22: #{vit_forward.22} parent=0 // pred_check
    _
  $region23: #{vit_forward.22} parent=0 // pred_check_branch
    %129 = sbr.rel (0) target = $region25
  $region24: #{vit_forward.22} parent=0 // pred_region
    _
  $region25: #{vit_forward.22} parent=0 // pred_fallthru
    _

// kernel: vit_forward.23
$region0: #{vit_forward.23}
  #allocation0 [shape = 'u32[]', space=smem, size = 0x4, offset = 0x4, fixed_abs, tag = 'smem constant byte address 0x4 - core index']
  #allocation1 [shape = 'u32[72,128]{1,0:T(1,128)}', space=vmem, size = 0x9000, scoped, tag = 'internal scratch']
  %s0 = inlined_call_operand.vmem [shape: bf16[16,32], index: 0, kind: input, shape index: {}]
  %s1 = inlined_call_operand.vmem [shape: f32[1,32], index: 1, kind: input, shape index: {}]
  %s2 = inlined_call_operand.vmem [shape: f32[1,32], index: 2, kind: input, shape index: {}]
  %s3 = inlined_call_operand.vmem [shape: bf16[32,256], index: 3, kind: input, shape index: {}]
  %s4 = inlined_call_operand.vmem [shape: f32[1,256], index: 4, kind: input, shape index: {}]
  %s5 = inlined_call_operand.vmem [shape: f32[16,256], index: 5, kind: output, shape index: {}]
  %s6 = sld [smem:[#allocation0]]
  $region30: #{vit_forward.23} parent=0
    _
  %s8 = ssub.s32 1, %s6
  %s9 = scalar_select 0, %s8, %s6
  // Predicated region
  $region2: #{vit_forward.23} parent=0 // pred_check
    _
  $region3: #{vit_forward.23} parent=0 // pred_check_branch
    %11 = sbr.rel (0) target = $region5
  $region4: #{vit_forward.23} parent=0 // pred_region
    _
  $region5: #{vit_forward.23} parent=0 // pred_fallthru
    _
  // Predicated region
  $region6: #{vit_forward.23} parent=0 // pred_check
    _
  $region7: #{vit_forward.23} parent=0 // pred_check_branch
    %13 = sbr.rel (0) target = $region9
  $region8: #{vit_forward.23} parent=0 // pred_region
    _
  $region9: #{vit_forward.23} parent=0 // pred_fallthru
    _
  // Predicated region
  $region10: #{vit_forward.23} parent=0 // pred_check
    _
  $region11: #{vit_forward.23} parent=0 // pred_check_branch
    %15 = sbr.rel (0) target = $region13
  $region12: #{vit_forward.23} parent=0 // pred_region
    _
  $region13: #{vit_forward.23} parent=0 // pred_fallthru
    _
  // Predicated region
  $region14: #{vit_forward.23} parent=0 // pred_check
    _
  $region15: #{vit_forward.23} parent=0 // pred_check_branch
    %17 = sbr.rel (0) target = $region17
  $region16: #{vit_forward.23} parent=0 // pred_region
    _
  $region17: #{vit_forward.23} parent=0 // pred_fallthru
    _
  // Predicated region
  $region18: #{vit_forward.23} parent=0 // pred_check
    _
  $region19: #{vit_forward.23} parent=0 // pred_check_branch
    %19 = sbr.rel (0) target = $region21
  $region20: #{vit_forward.23} parent=0 // pred_region
    _
  $region21: #{vit_forward.23} parent=0 // pred_fallthru
    _
  %v21 = vld [vmem:[%s0] sm:$0xf]
  %v22 = vld [vmem:[%s0 + $0x4] sm:$0xf]
  %v23 = vunpack.c.l.bf16 %v21
  %v24 = vunpack.c.l.bf16 %v22
  %vm25 = vcmask 261120
  %v26 = vsel %vm25, %v23, 0.0
  %27 = vadd.xlane.f32.xlu0 %v26
  %v28 = vpop.xlane.xlu0 %27
  %v29 = vsel %vm25, %v24, 0.0
  %30 = vadd.xlane.f32.xlu0 %v29
  %v31 = vpop.xlane.xlu0 %30
  %v32 = vrcp.pop 32.0
  %v33 = vmul.f32 32.0, %v32
  %v34 = vsub.f32 1.0, %v33
  %v35 = vmul.f32 %v32, %v34
  %v36 = vadd.f32 %v32, %v35
  %vm37 = vweird.f32 %v32
  %v38 = vsel %vm37, %v32, %v36
  %v39 = vmul.f32 %v28, %v38
  %v40 = vmul.f32 %v31, %v38
  %v41 = vsub.f32 %v23, %v39
  %v42 = vsub.f32 %v24, %v40
  %v43 = vmul.f32 %v41, %v41
  %v44 = vmul.f32 %v42, %v42
  %v45 = vsel %vm25, %v43, 0.0
  %46 = vadd.xlane.f32.xlu0 %v45
  %v47 = vpop.xlane.xlu0 %46
  %v48 = vsel %vm25, %v44, 0.0
  %49 = vadd.xlane.f32.xlu0 %v48
  %v50 = vpop.xlane.xlu0 %49
  %v51 = vmul.f32 %v47, %v38
  %v52 = vmul.f32 %v50, %v38
  %v53 = vadd.f32 %v51, 1e-05
  %v54 = vadd.f32 %v52, 1e-05
  %v55 = vrsqrt.pop %v53
  %v56 = vmul.f32 %v55, %v53
  %v57 = vmul.f32 %v56, %v55
  %v58 = vmul.f32 0.5, %v57
  %v59 = vsub.f32 1.5, %v58
  %v60 = vmul.f32 %v55, %v59
  %vm61 = vweird.f32 %v53
  %vm62 = vweird.f32 %v55
  %vm63 = vmor %vm61, %vm62
  %v64 = vsel %vm63, %v55, %v60
  %v65 = vrsqrt.pop %v54
  %v66 = vmul.f32 %v65, %v54
  %v67 = vmul.f32 %v66, %v65
  %v68 = vmul.f32 0.5, %v67
  %v69 = vsub.f32 1.5, %v68
  %v70 = vmul.f32 %v65, %v69
  %vm71 = vweird.f32 %v54
  %vm72 = vweird.f32 %v65
  %vm73 = vmor %vm71, %vm72
  %v74 = vsel %vm73, %v65, %v70
  %v75 = vmul.f32 %v41, %v64
  %v76 = vmul.f32 %v42, %v74
  %v77 = vld [vmem:[%s1] sm:$0x1]
  %v79 = vperm.slane %v77, 0
  %v81 = vmul.f32 %v75, %v79
  %v82 = vmul.f32 %v76, %v79
  %v83 = vld [vmem:[%s2] sm:$0x1]
  %v85 = vperm.slane %v83, 0
  %v87 = vadd.f32 %v81, %v85
  %v88 = vadd.f32 %v82, %v85
  %v89 = vpack.c.bf16 %v88, %v87
  %v90 = vld [vmem:[%s3] sm:$0xff]
  %v91 = vld [vmem:[%s3 + $0x8] sm:$0xff]
  %v92 = vld [vmem:[%s3 + $0x10] sm:$0xff]
  %v93 = vld [vmem:[%s3 + $0x18] sm:$0xff]
  %v94 = vld [vmem:[%s4] sm:$0x3]
  %v96 = vperm.slane %v94, 0
  %v97 = vperm.slane %v94, 1
  %v104 = vunpack.c.l.b16 %v90
  %v105 = vunpack.c.h.b16 %v90
  %v106 = vunpack.c.l.b16 %v91
  %v107 = vunpack.c.h.b16 %v91
  %v108 = vunpack.c.l.b16 %v92
  %v109 = vunpack.c.h.b16 %v92
  %v110 = vunpack.c.l.b16 %v93
  %v111 = vunpack.c.h.b16 %v93
  %v112 = vpack.c.b16 %v106, %v104
  %v113 = vpack.c.b16 %v107, %v105
  %v114 = vpack.c.b16 %v110, %v108
  %v115 = vpack.c.b16 %v111, %v109
  %v121 = vsel %vm25, %v89, 0
  %123 = vmatpush.bf16.msra.mxu0 0
  %124 = vmatpush.bf16.msra.mxu0 0
  %125 = vmatpush.bf16.msra.mxu0 0
  %126 = vmatpush.bf16.msra.mxu0 0
  %127 = vmatpush.bf16.msra.mxu0 0
  %128 = vmatpush.bf16.msra.mxu0 0
  %129 = vmatpush.bf16.msra.mxu0 %v114
  %130 = vmatpush.bf16.msra.mxu0 %v112
  %131 = vmatmul.bf16.gmra.mxu0 %v121
  %v132 = vpop.f32.mrf.mxu0
  %v133 = vadd.f32 %v96, %v132
  %v134 = vpop.f32.mrf.mxu0
  %v135 = vadd.f32 %v96, %v134
  %136 = vdwg.mxu0
  %137 = vmatpush.bf16.msra.mxu0 0
  %138 = vmatpush.bf16.msra.mxu0 0
  %139 = vmatpush.bf16.msra.mxu0 0
  %140 = vmatpush.bf16.msra.mxu0 0
  %141 = vmatpush.bf16.msra.mxu0 0
  %142 = vmatpush.bf16.msra.mxu0 0
  %143 = vmatpush.bf16.msra.mxu0 %v115
  %144 = vmatpush.bf16.msra.mxu0 %v113
  %145 = vmatmul.bf16.gmra.mxu0 %v121
  %v146 = vpop.f32.mrf.mxu0
  %v147 = vadd.f32 %v97, %v146
  %v148 = vpop.f32.mrf.mxu0
  %v149 = vadd.f32 %v97, %v148
  %150 = vdwg.mxu0
  %151 = vst [vmem:[%s5] sm:$0xff] %v133
  %152 = vst [vmem:[%s5 + $0x8] sm:$0xff] %v147
  %153 = vst [vmem:[%s5 + $0x10] sm:$0xff] %v135
  %154 = vst [vmem:[%s5 + $0x18] sm:$0xff] %v149
  // Predicated region
  $region22: #{vit_forward.23} parent=0 // pred_check
    _
  $region23: #{vit_forward.23} parent=0 // pred_check_branch
    %156 = sbr.rel (0) target = $region25
  $region24: #{vit_forward.23} parent=0 // pred_region
    _
  $region25: #{vit_forward.23} parent=0 // pred_fallthru
    _
  // Predicated region
  $region26: #{vit_forward.23} parent=0 // pred_check
    _
  $region27: #{vit_forward.23} parent=0 // pred_check_branch
    %158 = sbr.rel (0) target = $region29
  $region28: #{vit_forward.23} parent=0 // pred_region
    _
  $region29: #{vit_forward.23} parent=0 // pred_fallthru
    _

</llo_original>
